<compile_context>
chip_gen: v7x
topology: tpu7x:2x2x1
jax: 0.10.0
libtpu: 0.0.40
codegen_flags: <defaults>
</compile_context>

<pallas_src>
import numpy as np
import jax
import jax.numpy as jnp
from jax.experimental import pallas as pl
from jax.experimental.pallas import tpu as pltpu


# ----------------------------------------------------------------------------
# Kernel 1: fused quantum conv (analytic) + 4x4/stride-2 maxpool + relu,
#           incremental pooling, lane-chunked to bound vreg pressure.
#   x_ref  : [9, 16, Lblk]  psi-shifted angles; q = qubit, sublane = pool
#            position p, lane = image*32 + window w
#   out_ref: [9, Lblk]      relu(max over p of channel value), per (c, image, w)
# ----------------------------------------------------------------------------
def qconv_pool_kernel(x_ref, out_ref):
    lblk = x_ref.shape[2]
    chunk = 512                       # 3 live [16,chunk] arrays = 24 vregs max
    while lblk % chunk:
        chunk //= 2
    nchunks = lblk // chunk

    def body(j, carry):
        off = pl.multiple_of(j * chunk, chunk)
        cum = jnp.cos(x_ref[0, :, pl.ds(off, chunk)])          # f_0
        rest = None
        for q in range(1, 9):                                  # static unroll
            fq = jnp.cos(x_ref[q, :, pl.ds(off, chunk)])       # one cos / elem
            cum = cum * fq                                      # prod_{0..q} f
            out_ref[q, pl.ds(off, chunk)] = jnp.maximum(        # pool + relu now
                jnp.max(cum, axis=0), 0.0)
            rest = fq if rest is None else rest * fq            # prod_{1..q} f
        out_ref[0, pl.ds(off, chunk)] = jnp.maximum(jnp.max(rest, axis=0), 0.0)
        return carry

    jax.lax.fori_loop(0, nchunks, body, 0)


# ----------------------------------------------------------------------------
# Kernel 2: MLP head  fc1 -> relu -> fc2 -> relu -> fc3 -> log_softmax
#   h_ref already contains relu(maxpool(.)) features, K packed flat 225 -> 256.
# ----------------------------------------------------------------------------
def head_kernel(h_ref, w1_ref, b1_ref, w2_ref, b2_ref, w3_ref, b3_ref, out_ref):
    h = h_ref[...]                                                       # [Bt, 256]
    h1 = jnp.maximum(
        jnp.dot(h, w1_ref[...], preferred_element_type=jnp.float32)
        + b1_ref[...], 0.0)                                              # [Bt, 32]
    h2 = jnp.maximum(
        jnp.dot(h1, w2_ref[...], preferred_element_type=jnp.float32)
        + b2_ref[...], 0.0)                                              # [Bt, 16]
    logits = (jnp.dot(h2, w3_ref[...], preferred_element_type=jnp.float32)
              + b3_ref[...])                                             # [Bt, 10]
    m = jnp.max(logits, axis=-1, keepdims=True)
    lse = m + jnp.log(jnp.sum(jnp.exp(logits - m), axis=-1, keepdims=True))
    out_ref[...] = logits - lse


# ----------------------------------------------------------------------------
# Wrapper
# ----------------------------------------------------------------------------
def qnn_model_1_forward(x, params, *, bt=None, conv_buffers=2):
    B = x.shape[0]
    assert x.shape == (B, 1, 28, 28), "QNNModel_1 expects 1x28x28 inputs"
    x = x.astype(jnp.float32)

    # ---- batch tile for the conv/pool kernel --------------------------------
    # Default bt=64 -> 2048-lane blocks (~1.1 MiB, 2.25 MiB double-buffered):
    # amortizes the ~0.35us grid-step overhead while staying far below the
    # 32 MiB scoped-VMEM default (v5e/v6e 128 MiB, v7x 64 MiB physical).
    if bt is None:
        bt = 64
        if B <= bt:
            # keep >= 2 grid steps when the batch allows (v7x: 2 TCs share the
            # "parallel" axis); on 1-TC v5e/v6e this costs nothing.
            bt = max(8, (((B + 1) // 2) + 7) // 8 * 8)
    assert bt % 8 == 0 and bt > 0
    bpad = ((B + bt - 1) // bt) * bt
    lblk = bt * 32
    nsteps = bpad // bt

    # ---- fold circuit trig into an angle shift psi_q and a scale R_q >= 0 ---
    phi = params["phi"][:, 0]
    theta = params["theta"][:, 0]
    cos_t = jnp.cos(theta)                        # R cos(psi)
    sin_ts = jnp.sin(theta) * jnp.sin(phi)        # R sin(psi)
    r = jnp.sqrt(cos_t * cos_t + sin_ts * sin_ts)
    psi = jnp.arctan2(sin_ts, cos_t)
    cum_r = jnp.cumprod(r)                        # channel c>=1: prod_{0..c} R
    r_rest = jnp.prod(r[1:])                      # channel 0:    prod_{1..8} R
    r_ch = jnp.concatenate([r_rest[None], cum_r[1:]])                   # [9]

    # fc1 rows scaled by R_ch (R >= 0 commutes with relu/max), packed flat
    # (c*25 + w) and K zero-padded 225 -> 256 (MXU-width on v6e/v7x).
    w1s = params["w1"].reshape(9, 25, 32) * r_ch[:, None, None]
    w1p = jnp.pad(w1s.reshape(225, 32), ((0, 31), (0, 0)))              # [256, 32]

    # ---- pool-window-ordered angles via ONE gather: [9, 16, bpad*32] --------
    # element [q, p, b*32 + w] = x[b, 0, 4*oi + 2*pi + qi, 4*oj + 2*pj + qj] + psi_q
    # with q = qi*3+qj, p = pi*4+pj, w = oi*5+oj  (conv stride 2, pool stride 2)
    qn = np.arange(9)
    pn = np.arange(16)
    wn = np.arange(25)
    rows = 4 * (wn // 5)[None, None, :] + 2 * (pn // 4)[None, :, None] + (qn // 3)[:, None, None]
    cols = 4 * (wn % 5)[None, None, :] + 2 * (pn % 4)[None, :, None] + (qn % 3)[:, None, None]
    pix_idx = jnp.asarray(rows * 28 + cols, dtype=jnp.int32)            # [9,16,25]

    img_flat = x[:, 0, :, :].reshape(B, 28 * 28)
    patches = jnp.take(img_flat, pix_idx, axis=1)                       # [B,9,16,25]
    ang = jnp.transpose(patches, (1, 2, 0, 3)) + psi[:, None, None, None]
    ang = jnp.pad(ang, ((0, 0), (0, 0), (0, bpad - B), (0, 32 - 25)))
    ang = ang.reshape(9, 16, bpad * 32)

    # Pad lanes (w=25..31) and padded batch rows are sliced away before fc1,
    # so their pooled values never reach the head.
    if conv_buffers == 2:
        conv_in_spec = pl.BlockSpec((9, 16, lblk), lambda i: (0, 0, i))
    else:  # v5e knob: deepen the prefetch if the input DMA is still exposed
        conv_in_spec = pl.BlockSpec((9, 16, lblk), lambda i: (0, 0, i),
                                    pipeline_mode=pl.Buffered(conv_buffers))

    pooled = pl.pallas_call(
        qconv_pool_kernel,
        out_shape=jax.ShapeDtypeStruct((9, bpad * 32), jnp.float32),
        grid=(nsteps,),
        in_specs=[conv_in_spec],
        out_specs=pl.BlockSpec((9, lblk), lambda i: (0, i)),
        compiler_params=pltpu.CompilerParams(
            dimension_semantics=("parallel",)),
    )(ang)

    # tiny glue (~1 KiB/image): drop pad windows, (c,b,w) -> (b, c*25+w), pad K to 256
    feats = pooled.reshape(9, bpad, 32)[:, :, :25]
    feats = jnp.pad(feats.transpose(1, 0, 2).reshape(bpad, 225), ((0, 0), (0, 31)))

    # ---- head: one (or a few) big blocks over the whole padded batch --------
    bt_head = max(d for d in range(8, min(bpad, 2048) + 1, 8) if bpad % d == 0)
    nhead = bpad // bt_head

    out = pl.pallas_call(
        head_kernel,
        out_shape=jax.ShapeDtypeStruct((bpad, 10), jnp.float32),
        grid=(nhead,),
        in_specs=[pl.BlockSpec((bt_head, 256), lambda i: (i, 0)),
                  pl.BlockSpec((256, 32), lambda i: (0, 0)),
                  pl.BlockSpec((1, 32), lambda i: (0, 0)),
                  pl.BlockSpec((32, 16), lambda i: (0, 0)),
                  pl.BlockSpec((1, 16), lambda i: (0, 0)),
                  pl.BlockSpec((16, 10), lambda i: (0, 0)),
                  pl.BlockSpec((1, 10), lambda i: (0, 0))],
        out_specs=pl.BlockSpec((bt_head, 10), lambda i: (i, 0)),
        compiler_params=pltpu.CompilerParams(
            dimension_semantics=("parallel",)),
    )(feats, w1p, params["b1"], params["w2"], params["b2"],
      params["w3"], params["b3"])
    return out[:B]


# ----------------------------------------------------------------------------
# Pure-JAX reference (same assumed circuit, original un-folded formulation)
# ----------------------------------------------------------------------------
def reference_forward(x, params):
    B = x.shape[0]
    x = x.astype(jnp.float32)
    phi = params["phi"][:, 0]
    theta = params["theta"][:, 0]
    img = x[:, 0, :, :]
    pat = jnp.stack([img[:, di:di + 25:2, dj:dj + 25:2]
                     for di in range(3) for dj in range(3)], axis=1)     # [B,9,13,13]
    ct = jnp.cos(theta)[None, :, None, None]
    st = (jnp.sin(theta) * jnp.sin(phi))[None, :, None, None]
    f = ct * jnp.cos(pat) - st * jnp.sin(pat)
    cum = jnp.cumprod(f, axis=1)
    ch0 = jnp.prod(f[:, 1:], axis=1, keepdims=True)
    conv = jnp.concatenate([ch0, cum[:, 1:]], axis=1)                    # [B,9,13,13]
    pooled = jnp.max(
        jnp.stack([conv[:, :, pi:pi + 9:2, pj:pj + 9:2]
                   for pi in range(4) for pj in range(4)], axis=0), axis=0)
    h = jnp.maximum(pooled, 0.0).reshape(B, 225)
    h1 = jnp.maximum(h @ params["w1"] + params["b1"], 0.0)
    h2 = jnp.maximum(h1 @ params["w2"] + params["b2"], 0.0)
    logits = h2 @ params["w3"] + params["b3"]
    return logits - jax.nn.logsumexp(logits, axis=-1, keepdims=True)


# ----------------------------------------------------------------------------
# Deterministic parameter init (matches the module's shapes)
# ----------------------------------------------------------------------------
def init_params(key):
    ks = jax.random.split(key, 4)

    def linear(k, fan_in, fan_out):
        bound = 1.0 / (fan_in ** 0.5)
        kw, kb = jax.random.split(k)
        w = jax.random.uniform(kw, (fan_in, fan_out), jnp.float32, -bound, bound)
        b = jax.random.uniform(kb, (1, fan_out), jnp.float32, -bound, bound)
        return w, b

    # StronglyEntanglingLayers weights (1, 9, 3) -> (phi, theta, omega); omega
    # never affects <Z> under the assumed circuit.
    qw = jax.random.uniform(ks[0], (1, 9, 3), jnp.float32, 0.0, 2.0 * jnp.pi)
    phi = qw[0, :, 0:1]
    theta = qw[0, :, 1:2]
    w1, b1 = linear(ks[1], 9 * 5 * 5, 32)
    w2, b2 = linear(ks[2], 32, 16)
    w3, b3 = linear(ks[3], 16, 10)
    return dict(phi=phi, theta=theta,
                w1=w1, b1=b1, w2=w2, b2=b2, w3=w3, b3=b3)


if __name__ == "__main__":
    key = jax.random.PRNGKey(0)
    kp, kx = jax.random.split(key)
    params = init_params(kp)
    fwd = jax.jit(qnn_model_1_forward, static_argnames=("bt", "conv_buffers"))

    # MNIST-like input: batch=2, 1 channel, 28x28 (forced by fc1 = 9*5*5 -> 32).
    x = jax.random.uniform(kx, (2, 1, 28, 28), jnp.float32, 0.0, jnp.pi)
    out = jax.block_until_ready(fwd(x, params))
    assert out.shape == (2, 10)
    assert bool(jnp.all(jnp.isfinite(out)))
    ref = reference_forward(x, params)
    err = float(jnp.max(jnp.abs(out - ref)))
    assert err < 3e-2, f"mismatch vs reference (B=2): {err}"

    # Exercise the multi-step grid, multi-chunk inner loop and batch padding.
    x2 = jax.random.uniform(jax.random.PRNGKey(1), (33, 1, 28, 28),
                            jnp.float32, 0.0, jnp.pi)
    out2 = jax.block_until_ready(fwd(x2, params))
    assert out2.shape == (33, 10)
    ref2 = reference_forward(x2, params)
    err2 = float(jnp.max(jnp.abs(out2 - ref2)))
    assert err2 < 3e-2, f"mismatch vs reference (B=33): {err2}"

    print("KERNEL_OK")
</pallas_src>

<mosaic_0001>
module attributes {stable_mosaic.version = 11 : i64} {
  func.func @qconv_pool_kernel(%arg0: i32, %arg1: memref<9x16x256xf32, #tpu.memory_space<vmem>>, %arg2: memref<9x256xf32, #tpu.memory_space<vmem>>) attributes {dimension_semantics = [#tpu.dimension_semantics<parallel>], iteration_bounds = array<i64: 1>, scalar_prefetch = 0 : i64, scratch_operands = 0 : i64, tpu.core_type = #tpu.core_type<tc>, window_params = [{transform_indices = @transform_0, window_bounds = array<i64: 9, 16, 256>}, {transform_indices = @transform_1, window_bounds = array<i64: 9, 256>}]} {
    %c0_i32 = arith.constant 0 : i32
    %c256_i32 = arith.constant 256 : i32
    %0 = arith.muli %c0_i32, %c256_i32 : i32
    %1 = tpu.assume_multiple %0, 256 : i32
    %c0 = arith.constant 0 : index
    %c0_0 = arith.constant 0 : index
    %2 = arith.index_cast %1 : i32 to index
    %3 = vector.load %arg1[%c0, %c0_0, %2] : memref<9x16x256xf32, #tpu.memory_space<vmem>>, vector<1x16x256xf32>
    %4 = vector.shape_cast %3 : vector<1x16x256xf32> to vector<16x256xf32>
    %5 = math.cos %4 : vector<16x256xf32>
    %c1 = arith.constant 1 : index
    %c0_1 = arith.constant 0 : index
    %6 = arith.index_cast %1 : i32 to index
    %7 = vector.load %arg1[%c1, %c0_1, %6] : memref<9x16x256xf32, #tpu.memory_space<vmem>>, vector<1x16x256xf32>
    %8 = vector.shape_cast %7 : vector<1x16x256xf32> to vector<16x256xf32>
    %9 = math.cos %8 : vector<16x256xf32>
    %10 = arith.mulf %5, %9 : vector<16x256xf32>
    %cst = arith.constant dense<0xFF800000> : vector<256xf32>
    %11 = vector.multi_reduction <maximumf>, %10, %cst [0] : vector<16x256xf32> to vector<256xf32>
    %cst_2 = arith.constant 0.000000e+00 : f32
    %12 = vector.broadcast %cst_2 : f32 to vector<256xf32>
    %13 = arith.maximumf %11, %12 : vector<256xf32>
    %c1_3 = arith.constant 1 : index
    %14 = arith.index_cast %1 : i32 to index
    %15 = vector.load %arg2[%c1_3, %14] : memref<9x256xf32, #tpu.memory_space<vmem>>, vector<1x256xf32>
    %16 = vector.shape_cast %15 : vector<1x256xf32> to vector<256xf32>
    %17 = vector.shape_cast %13 : vector<256xf32> to vector<1x256xf32>
    tpu.vector_store %arg2[%c1_3, %14], %17 {strides = array<i32>} : memref<9x256xf32, #tpu.memory_space<vmem>>, vector<1x256xf32>,
    %c2 = arith.constant 2 : index
    %c0_4 = arith.constant 0 : index
    %18 = arith.index_cast %1 : i32 to index
    %19 = vector.load %arg1[%c2, %c0_4, %18] : memref<9x16x256xf32, #tpu.memory_space<vmem>>, vector<1x16x256xf32>
    %20 = vector.shape_cast %19 : vector<1x16x256xf32> to vector<16x256xf32>
    %21 = math.cos %20 : vector<16x256xf32>
    %22 = arith.mulf %10, %21 : vector<16x256xf32>
    %cst_5 = arith.constant dense<0xFF800000> : vector<256xf32>
    %23 = vector.multi_reduction <maximumf>, %22, %cst_5 [0] : vector<16x256xf32> to vector<256xf32>
    %cst_6 = arith.constant 0.000000e+00 : f32
    %24 = vector.broadcast %cst_6 : f32 to vector<256xf32>
    %25 = arith.maximumf %23, %24 : vector<256xf32>
    %c2_7 = arith.constant 2 : index
    %26 = arith.index_cast %1 : i32 to index
    %27 = vector.load %arg2[%c2_7, %26] : memref<9x256xf32, #tpu.memory_space<vmem>>, vector<1x256xf32>
    %28 = vector.shape_cast %27 : vector<1x256xf32> to vector<256xf32>
    %29 = vector.shape_cast %25 : vector<256xf32> to vector<1x256xf32>
    tpu.vector_store %arg2[%c2_7, %26], %29 {strides = array<i32>} : memref<9x256xf32, #tpu.memory_space<vmem>>, vector<1x256xf32>,
    %30 = arith.mulf %9, %21 : vector<16x256xf32>
    %c3 = arith.constant 3 : index
    %c0_8 = arith.constant 0 : index
    %31 = arith.index_cast %1 : i32 to index
    %32 = vector.load %arg1[%c3, %c0_8, %31] : memref<9x16x256xf32, #tpu.memory_space<vmem>>, vector<1x16x256xf32>
    %33 = vector.shape_cast %32 : vector<1x16x256xf32> to vector<16x256xf32>
    %34 = math.cos %33 : vector<16x256xf32>
    %35 = arith.mulf %22, %34 : vector<16x256xf32>
    %cst_9 = arith.constant dense<0xFF800000> : vector<256xf32>
    %36 = vector.multi_reduction <maximumf>, %35, %cst_9 [0] : vector<16x256xf32> to vector<256xf32>
    %cst_10 = arith.constant 0.000000e+00 : f32
    %37 = vector.broadcast %cst_10 : f32 to vector<256xf32>
    %38 = arith.maximumf %36, %37 : vector<256xf32>
    %c3_11 = arith.constant 3 : index
    %39 = arith.index_cast %1 : i32 to index
    %40 = vector.load %arg2[%c3_11, %39] : memref<9x256xf32, #tpu.memory_space<vmem>>, vector<1x256xf32>
    %41 = vector.shape_cast %40 : vector<1x256xf32> to vector<256xf32>
    %42 = vector.shape_cast %38 : vector<256xf32> to vector<1x256xf32>
    tpu.vector_store %arg2[%c3_11, %39], %42 {strides = array<i32>} : memref<9x256xf32, #tpu.memory_space<vmem>>, vector<1x256xf32>,
    %43 = arith.mulf %30, %34 : vector<16x256xf32>
    %c4 = arith.constant 4 : index
    %c0_12 = arith.constant 0 : index
    %44 = arith.index_cast %1 : i32 to index
    %45 = vector.load %arg1[%c4, %c0_12, %44] : memref<9x16x256xf32, #tpu.memory_space<vmem>>, vector<1x16x256xf32>
    %46 = vector.shape_cast %45 : vector<1x16x256xf32> to vector<16x256xf32>
    %47 = math.cos %46 : vector<16x256xf32>
    %48 = arith.mulf %35, %47 : vector<16x256xf32>
    %cst_13 = arith.constant dense<0xFF800000> : vector<256xf32>
    %49 = vector.multi_reduction <maximumf>, %48, %cst_13 [0] : vector<16x256xf32> to vector<256xf32>
    %cst_14 = arith.constant 0.000000e+00 : f32
    %50 = vector.broadcast %cst_14 : f32 to vector<256xf32>
    %51 = arith.maximumf %49, %50 : vector<256xf32>
    %c4_15 = arith.constant 4 : index
    %52 = arith.index_cast %1 : i32 to index
    %53 = vector.load %arg2[%c4_15, %52] : memref<9x256xf32, #tpu.memory_space<vmem>>, vector<1x256xf32>
    %54 = vector.shape_cast %53 : vector<1x256xf32> to vector<256xf32>
    %55 = vector.shape_cast %51 : vector<256xf32> to vector<1x256xf32>
    tpu.vector_store %arg2[%c4_15, %52], %55 {strides = array<i32>} : memref<9x256xf32, #tpu.memory_space<vmem>>, vector<1x256xf32>,
    %56 = arith.mulf %43, %47 : vector<16x256xf32>
    %c5 = arith.constant 5 : index
    %c0_16 = arith.constant 0 : index
    %57 = arith.index_cast %1 : i32 to index
    %58 = vector.load %arg1[%c5, %c0_16, %57] : memref<9x16x256xf32, #tpu.memory_space<vmem>>, vector<1x16x256xf32>
    %59 = vector.shape_cast %58 : vector<1x16x256xf32> to vector<16x256xf32>
    %60 = math.cos %59 : vector<16x256xf32>
    %61 = arith.mulf %48, %60 : vector<16x256xf32>
    %cst_17 = arith.constant dense<0xFF800000> : vector<256xf32>
    %62 = vector.multi_reduction <maximumf>, %61, %cst_17 [0] : vector<16x256xf32> to vector<256xf32>
    %cst_18 = arith.constant 0.000000e+00 : f32
    %63 = vector.broadcast %cst_18 : f32 to vector<256xf32>
    %64 = arith.maximumf %62, %63 : vector<256xf32>
    %c5_19 = arith.constant 5 : index
    %65 = arith.index_cast %1 : i32 to index
    %66 = vector.load %arg2[%c5_19, %65] : memref<9x256xf32, #tpu.memory_space<vmem>>, vector<1x256xf32>
    %67 = vector.shape_cast %66 : vector<1x256xf32> to vector<256xf32>
    %68 = vector.shape_cast %64 : vector<256xf32> to vector<1x256xf32>
    tpu.vector_store %arg2[%c5_19, %65], %68 {strides = array<i32>} : memref<9x256xf32, #tpu.memory_space<vmem>>, vector<1x256xf32>,
    %69 = arith.mulf %56, %60 : vector<16x256xf32>
    %c6 = arith.constant 6 : index
    %c0_20 = arith.constant 0 : index
    %70 = arith.index_cast %1 : i32 to index
    %71 = vector.load %arg1[%c6, %c0_20, %70] : memref<9x16x256xf32, #tpu.memory_space<vmem>>, vector<1x16x256xf32>
    %72 = vector.shape_cast %71 : vector<1x16x256xf32> to vector<16x256xf32>
    %73 = math.cos %72 : vector<16x256xf32>
    %74 = arith.mulf %61, %73 : vector<16x256xf32>
    %cst_21 = arith.constant dense<0xFF800000> : vector<256xf32>
    %75 = vector.multi_reduction <maximumf>, %74, %cst_21 [0] : vector<16x256xf32> to vector<256xf32>
    %cst_22 = arith.constant 0.000000e+00 : f32
    %76 = vector.broadcast %cst_22 : f32 to vector<256xf32>
    %77 = arith.maximumf %75, %76 : vector<256xf32>
    %c6_23 = arith.constant 6 : index
    %78 = arith.index_cast %1 : i32 to index
    %79 = vector.load %arg2[%c6_23, %78] : memref<9x256xf32, #tpu.memory_space<vmem>>, vector<1x256xf32>
    %80 = vector.shape_cast %79 : vector<1x256xf32> to vector<256xf32>
    %81 = vector.shape_cast %77 : vector<256xf32> to vector<1x256xf32>
    tpu.vector_store %arg2[%c6_23, %78], %81 {strides = array<i32>} : memref<9x256xf32, #tpu.memory_space<vmem>>, vector<1x256xf32>,
    %82 = arith.mulf %69, %73 : vector<16x256xf32>
    %c7 = arith.constant 7 : index
    %c0_24 = arith.constant 0 : index
    %83 = arith.index_cast %1 : i32 to index
    %84 = vector.load %arg1[%c7, %c0_24, %83] : memref<9x16x256xf32, #tpu.memory_space<vmem>>, vector<1x16x256xf32>
    %85 = vector.shape_cast %84 : vector<1x16x256xf32> to vector<16x256xf32>
    %86 = math.cos %85 : vector<16x256xf32>
    %87 = arith.mulf %74, %86 : vector<16x256xf32>
    %cst_25 = arith.constant dense<0xFF800000> : vector<256xf32>
    %88 = vector.multi_reduction <maximumf>, %87, %cst_25 [0] : vector<16x256xf32> to vector<256xf32>
    %cst_26 = arith.constant 0.000000e+00 : f32
    %89 = vector.broadcast %cst_26 : f32 to vector<256xf32>
    %90 = arith.maximumf %88, %89 : vector<256xf32>
    %c7_27 = arith.constant 7 : index
    %91 = arith.index_cast %1 : i32 to index
    %92 = vector.load %arg2[%c7_27, %91] : memref<9x256xf32, #tpu.memory_space<vmem>>, vector<1x256xf32>
    %93 = vector.shape_cast %92 : vector<1x256xf32> to vector<256xf32>
    %94 = vector.shape_cast %90 : vector<256xf32> to vector<1x256xf32>
    tpu.vector_store %arg2[%c7_27, %91], %94 {strides = array<i32>} : memref<9x256xf32, #tpu.memory_space<vmem>>, vector<1x256xf32>,
    %95 = arith.mulf %82, %86 : vector<16x256xf32>
    %c8 = arith.constant 8 : index
    %c0_28 = arith.constant 0 : index
    %96 = arith.index_cast %1 : i32 to index
    %97 = vector.load %arg1[%c8, %c0_28, %96] : memref<9x16x256xf32, #tpu.memory_space<vmem>>, vector<1x16x256xf32>
    %98 = vector.shape_cast %97 : vector<1x16x256xf32> to vector<16x256xf32>
    %99 = math.cos %98 : vector<16x256xf32>
    %100 = arith.mulf %87, %99 : vector<16x256xf32>
    %cst_29 = arith.constant dense<0xFF800000> : vector<256xf32>
    %101 = vector.multi_reduction <maximumf>, %100, %cst_29 [0] : vector<16x256xf32> to vector<256xf32>
    %cst_30 = arith.constant 0.000000e+00 : f32
    %102 = vector.broadcast %cst_30 : f32 to vector<256xf32>
    %103 = arith.maximumf %101, %102 : vector<256xf32>
    %c8_31 = arith.constant 8 : index
    %104 = arith.index_cast %1 : i32 to index
    %105 = vector.load %arg2[%c8_31, %104] : memref<9x256xf32, #tpu.memory_space<vmem>>, vector<1x256xf32>
    %106 = vector.shape_cast %105 : vector<1x256xf32> to vector<256xf32>
    %107 = vector.shape_cast %103 : vector<256xf32> to vector<1x256xf32>
    tpu.vector_store %arg2[%c8_31, %104], %107 {strides = array<i32>} : memref<9x256xf32, #tpu.memory_space<vmem>>, vector<1x256xf32>,
    %108 = arith.mulf %95, %99 : vector<16x256xf32>
    %cst_32 = arith.constant dense<0xFF800000> : vector<256xf32>
    %109 = vector.multi_reduction <maximumf>, %108, %cst_32 [0] : vector<16x256xf32> to vector<256xf32>
    %cst_33 = arith.constant 0.000000e+00 : f32
    %110 = vector.broadcast %cst_33 : f32 to vector<256xf32>
    %111 = arith.maximumf %109, %110 : vector<256xf32>
    %c0_34 = arith.constant 0 : index
    %112 = arith.index_cast %1 : i32 to index
    %113 = vector.load %arg2[%c0_34, %112] : memref<9x256xf32, #tpu.memory_space<vmem>>, vector<1x256xf32>
    %114 = vector.shape_cast %113 : vector<1x256xf32> to vector<256xf32>
    %115 = vector.shape_cast %111 : vector<256xf32> to vector<1x256xf32>
    tpu.vector_store %arg2[%c0_34, %112], %115 {strides = array<i32>} : memref<9x256xf32, #tpu.memory_space<vmem>>, vector<1x256xf32>,
    %c1_i32 = arith.constant 1 : i32
    return
  }
  func.func @transform_0(%arg0: i32) -> (i32, i32, i32) {
    %c0_i32 = arith.constant 0 : i32
    %c0_i32_0 = arith.constant 0 : i32
    %c0_i32_1 = arith.constant 0 : i32
    return %c0_i32, %c0_i32_0, %arg0 : i32, i32, i32
  }
  func.func @transform_1(%arg0: i32) -> (i32, i32) {
    %c0_i32 = arith.constant 0 : i32
    %c0_i32_0 = arith.constant 0 : i32
    return %c0_i32, %arg0 : i32, i32
  }
}

module attributes {stable_mosaic.version = 11 : i64} {
  func.func @head_kernel(%arg0: i32, %arg1: memref<8x256xf32, #tpu.memory_space<vmem>>, %arg2: memref<256x32xf32, #tpu.memory_space<vmem>>, %arg3: memref<1x32xf32, #tpu.memory_space<vmem>>, %arg4: memref<32x16xf32, #tpu.memory_space<vmem>>, %arg5: memref<1x16xf32, #tpu.memory_space<vmem>>, %arg6: memref<16x10xf32, #tpu.memory_space<vmem>>, %arg7: memref<1x10xf32, #tpu.memory_space<vmem>>, %arg8: memref<8x10xf32, #tpu.memory_space<vmem>>) attributes {dimension_semantics = [#tpu.dimension_semantics<parallel>], iteration_bounds = array<i64: 1>, scalar_prefetch = 0 : i64, scratch_operands = 0 : i64, tpu.core_type = #tpu.core_type<tc>, window_params = [{transform_indices = @transform_0, window_bounds = array<i64: 8, 256>}, {pipeline_mode = #tpu.pipeline_mode<synchronous>, transform_indices = @transform_1, window_bounds = array<i64: 256, 32>}, {pipeline_mode = #tpu.pipeline_mode<synchronous>, transform_indices = @transform_2, window_bounds = array<i64: 1, 32>}, {pipeline_mode = #tpu.pipeline_mode<synchronous>, transform_indices = @transform_3, window_bounds = array<i64: 32, 16>}, {pipeline_mode = #tpu.pipeline_mode<synchronous>, transform_indices = @transform_4, window_bounds = array<i64: 1, 16>}, {pipeline_mode = #tpu.pipeline_mode<synchronous>, transform_indices = @transform_5, window_bounds = array<i64: 16, 10>}, {pipeline_mode = #tpu.pipeline_mode<synchronous>, transform_indices = @transform_6, window_bounds = array<i64: 1, 10>}, {transform_indices = @transform_7, window_bounds = array<i64: 8, 10>}]} {
    %c0 = arith.constant 0 : index
    %c0_0 = arith.constant 0 : index
    %0 = vector.load %arg1[%c0, %c0_0] : memref<8x256xf32, #tpu.memory_space<vmem>>, vector<8x256xf32>
    %c0_1 = arith.constant 0 : index
    %c0_2 = arith.constant 0 : index
    %1 = vector.load %arg2[%c0_1, %c0_2] : memref<256x32xf32, #tpu.memory_space<vmem>>, vector<256x32xf32>
    %cst = arith.constant dense<0.000000e+00> : vector<8x32xf32>
    %2 = tpu.matmul %0, %1, %cst {dimension_numbers = #tpu.dot_dimension_numbers<[1], [0], [0], [1], [0, 0, 1, 1], [], []>} : vector<8x256xf32>, vector<256x32xf32>, vector<8x32xf32> -> vector<8x32xf32>
    %c0_3 = arith.constant 0 : index
    %c0_4 = arith.constant 0 : index
    %3 = vector.load %arg3[%c0_3, %c0_4] : memref<1x32xf32, #tpu.memory_space<vmem>>, vector<1x32xf32>
    %4 = vector.broadcast %3 : vector<1x32xf32> to vector<8x32xf32>
    %5 = arith.addf %2, %4 : vector<8x32xf32>
    %cst_5 = arith.constant 0.000000e+00 : f32
    %6 = vector.broadcast %cst_5 : f32 to vector<8x32xf32>
    %7 = arith.maximumf %5, %6 : vector<8x32xf32>
    %c0_6 = arith.constant 0 : index
    %c0_7 = arith.constant 0 : index
    %8 = vector.load %arg4[%c0_6, %c0_7] : memref<32x16xf32, #tpu.memory_space<vmem>>, vector<32x16xf32>
    %cst_8 = arith.constant dense<0.000000e+00> : vector<8x16xf32>
    %9 = tpu.matmul %7, %8, %cst_8 {dimension_numbers = #tpu.dot_dimension_numbers<[1], [0], [0], [1], [0, 0, 1, 1], [], []>} : vector<8x32xf32>, vector<32x16xf32>, vector<8x16xf32> -> vector<8x16xf32>
    %c0_9 = arith.constant 0 : index
    %c0_10 = arith.constant 0 : index
    %10 = vector.load %arg5[%c0_9, %c0_10] : memref<1x16xf32, #tpu.memory_space<vmem>>, vector<1x16xf32>
    %11 = vector.broadcast %10 : vector<1x16xf32> to vector<8x16xf32>
    %12 = arith.addf %9, %11 : vector<8x16xf32>
    %cst_11 = arith.constant 0.000000e+00 : f32
    %13 = vector.broadcast %cst_11 : f32 to vector<8x16xf32>
    %14 = arith.maximumf %12, %13 : vector<8x16xf32>
    %c0_12 = arith.constant 0 : index
    %c0_13 = arith.constant 0 : index
    %15 = vector.load %arg6[%c0_12, %c0_13] : memref<16x10xf32, #tpu.memory_space<vmem>>, vector<16x10xf32>
    %cst_14 = arith.constant dense<0.000000e+00> : vector<8x10xf32>
    %16 = tpu.matmul %14, %15, %cst_14 {dimension_numbers = #tpu.dot_dimension_numbers<[1], [0], [0], [1], [0, 0, 1, 1], [], []>} : vector<8x16xf32>, vector<16x10xf32>, vector<8x10xf32> -> vector<8x10xf32>
    %c0_15 = arith.constant 0 : index
    %c0_16 = arith.constant 0 : index
    %17 = vector.load %arg7[%c0_15, %c0_16] : memref<1x10xf32, #tpu.memory_space<vmem>>, vector<1x10xf32>
    %18 = vector.broadcast %17 : vector<1x10xf32> to vector<8x10xf32>
    %19 = arith.addf %16, %18 : vector<8x10xf32>
    %cst_17 = arith.constant dense<0xFF800000> : vector<8xf32>
    %20 = vector.multi_reduction <maximumf>, %19, %cst_17 [1] : vector<8x10xf32> to vector<8xf32>
    %21 = vector.shape_cast %20 : vector<8xf32> to vector<8x1xf32>
    %22 = vector.broadcast %21 : vector<8x1xf32> to vector<8x10xf32>
    %23 = arith.subf %19, %22 : vector<8x10xf32>
    %24 = math.exp %23 : vector<8x10xf32>
    %cst_18 = arith.constant dense<0.000000e+00> : vector<8xf32>
    %25 = vector.multi_reduction <add>, %24, %cst_18 [1] : vector<8x10xf32> to vector<8xf32>
    %26 = vector.shape_cast %25 : vector<8xf32> to vector<8x1xf32>
    %27 = math.log %26 : vector<8x1xf32>
    %28 = arith.addf %21, %27 : vector<8x1xf32>
    %29 = vector.broadcast %28 : vector<8x1xf32> to vector<8x10xf32>
    %30 = arith.subf %19, %29 : vector<8x10xf32>
    %c0_19 = arith.constant 0 : index
    %c0_20 = arith.constant 0 : index
    %31 = vector.load %arg8[%c0_19, %c0_20] : memref<8x10xf32, #tpu.memory_space<vmem>>, vector<8x10xf32>
    tpu.vector_store %arg8[%c0_19, %c0_20], %30 {strides = array<i32>} : memref<8x10xf32, #tpu.memory_space<vmem>>, vector<8x10xf32>,
    return
  }
  func.func @transform_0(%arg0: i32) -> (i32, i32) {
    %c0_i32 = arith.constant 0 : i32
    %c0_i32_0 = arith.constant 0 : i32
    return %arg0, %c0_i32 : i32, i32
  }
  func.func @transform_1(%arg0: i32) -> (i32, i32) {
    %c0_i32 = arith.constant 0 : i32
    %c0_i32_0 = arith.constant 0 : i32
    %c0_i32_1 = arith.constant 0 : i32
    return %c0_i32, %c0_i32_0 : i32, i32
  }
  func.func @transform_2(%arg0: i32) -> (i32, i32) {
    %c0_i32 = arith.constant 0 : i32
    %c0_i32_0 = arith.constant 0 : i32
    %c0_i32_1 = arith.constant 0 : i32
    return %c0_i32, %c0_i32_0 : i32, i32
  }
  func.func @transform_3(%arg0: i32) -> (i32, i32) {
    %c0_i32 = arith.constant 0 : i32
    %c0_i32_0 = arith.constant 0 : i32
    %c0_i32_1 = arith.constant 0 : i32
    return %c0_i32, %c0_i32_0 : i32, i32
  }
  func.func @transform_4(%arg0: i32) -> (i32, i32) {
    %c0_i32 = arith.constant 0 : i32
    %c0_i32_0 = arith.constant 0 : i32
    %c0_i32_1 = arith.constant 0 : i32
    return %c0_i32, %c0_i32_0 : i32, i32
  }
  func.func @transform_5(%arg0: i32) -> (i32, i32) {
    %c0_i32 = arith.constant 0 : i32
    %c0_i32_0 = arith.constant 0 : i32
    %c0_i32_1 = arith.constant 0 : i32
    return %c0_i32, %c0_i32_0 : i32, i32
  }
  func.func @transform_6(%arg0: i32) -> (i32, i32) {
    %c0_i32 = arith.constant 0 : i32
    %c0_i32_0 = arith.constant 0 : i32
    %c0_i32_1 = arith.constant 0 : i32
    return %c0_i32, %c0_i32_0 : i32, i32
  }
  func.func @transform_7(%arg0: i32) -> (i32, i32) {
    %c0_i32 = arith.constant 0 : i32
    %c0_i32_0 = arith.constant 0 : i32
    return %arg0, %c0_i32 : i32, i32
  }
}

</mosaic_0001>

<llo_original>
// kernel: squeeze.5
$region0: #{squeeze.5}
  %s0 = inlined_call_operand.vmem [shape: f32[2,28,28], index: 0, kind: input, shape index: {}]
  %s1 = inlined_call_operand.vmem [shape: f32[2,784], index: 1, kind: output, shape index: {}]
  $region1: #{squeeze.5} parent=0
    #allocation0 [shape = 'u8[28672]{0}', space=vmem, size = 0x7000, scoped, tag = 'scoped mem for output reshape']
    %v2 = vld [vmem:[%s0] sm:$0x1]
    %s3 = scalar_lea.vmem %s0, 31
    %v4 = vld [vmem:[%s3] sm:$0x2]
    %vm5 = vcmask 1041409
    %v6 = vsel %vm5, %v4, %v2
    %vm7 = vcmask 228352
    %8 = vst.msk [vmem:[#allocation0] sm:$0x3] %vm7, %v6
    %s9 = scalar_lea.vmem %s0, 9
    %v10 = vld [vmem:[%s9] sm:$0x1]
    %s11 = scalar_lea.vmem %s0, 40
    %v12 = vld [vmem:[%s11] sm:$0x2]
    %vm13 = vcmask 1041409
    %v14 = vsel %vm13, %v12, %v10
    %s15 = scalar_lea.vmem %s0, 9
    %v16 = vld [vmem:[%s15] sm:$0x1]
    %s17 = scalar_lea.vmem %s0, 40
    %v18 = vld [vmem:[%s17] sm:$0x2]
    %vm19 = vcmask 1041409
    %v20 = vsel %vm19, %v18, %v16
    %vm21 = vcmask 31744
    %v22 = vsel %vm21, %v20, %v14
    %23 = vrot.lane.b32.xlu0 %v22, 124
    %v24 = vpop.permute.xlu0 %23
    %vm25 = vcmask 195584
    %s26 = scalar_lea.vmem [#allocation0], 16
    %27 = vst.msk [vmem:[%s26] sm:$0x3] %vm25, %v24
    %vm28 = vcmask 1048544
    %s29 = scalar_lea.vmem [#allocation0], 8
    %30 = vst.msk [vmem:[%s29] sm:$0x3] %vm28, %v24
    %s31 = scalar_lea.vmem %s0, 18
    %v32 = vld [vmem:[%s31] sm:$0x1]
    %s33 = scalar_lea.vmem %s0, 49
    %v34 = vld [vmem:[%s33] sm:$0x2]
    %vm35 = vcmask 1041409
    %v36 = vsel %vm35, %v34, %v32
    %s37 = scalar_lea.vmem %s0, 18
    %v38 = vld [vmem:[%s37] sm:$0x1]
    %s39 = scalar_lea.vmem %s0, 49
    %v40 = vld [vmem:[%s39] sm:$0x2]
    %vm41 = vcmask 1041409
    %v42 = vsel %vm41, %v40, %v38
    %vm43 = vcmask 64512
    %v44 = vsel %vm43, %v42, %v36
    %45 = vrot.lane.b32.xlu0 %v44, 120
    %v46 = vpop.permute.xlu0 %45
    %vm47 = vcmask 162816
    %s48 = scalar_lea.vmem [#allocation0], 32
    %49 = vst.msk [vmem:[%s48] sm:$0x3] %vm47, %v46
    %vm50 = vcmask 1048512
    %s51 = scalar_lea.vmem [#allocation0], 24
    %52 = vst.msk [vmem:[%s51] sm:$0x3] %vm50, %v46
    %s53 = scalar_lea.vmem %s0, 27
    %v54 = vld [vmem:[%s53] sm:$0x1]
    %s55 = scalar_lea.vmem %s0, 58
    %v56 = vld [vmem:[%s55] sm:$0x2]
    %vm57 = vcmask 1041409
    %v58 = vsel %vm57, %v56, %v54
    %s59 = scalar_lea.vmem %s0, 27
    %v60 = vld [vmem:[%s59] sm:$0x1]
    %s61 = scalar_lea.vmem %s0, 58
    %v62 = vld [vmem:[%s61] sm:$0x2]
    %vm63 = vcmask 1041409
    %v64 = vsel %vm63, %v62, %v60
    %vm65 = vcmask 97280
    %v66 = vsel %vm65, %v64, %v58
    %67 = vrot.lane.b32.xlu0 %v66, 116
    %v68 = vpop.permute.xlu0 %67
    %vm69 = vcmask 130048
    %s70 = scalar_lea.vmem [#allocation0], 48
    %71 = vst.msk [vmem:[%s70] sm:$0x3] %vm69, %v68
    %vm72 = vcmask 1048480
    %s73 = scalar_lea.vmem [#allocation0], 40
    %74 = vst.msk [vmem:[%s73] sm:$0x3] %vm72, %v68
    %s75 = scalar_lea.vmem %s0, 4
    %v76 = vld [vmem:[%s75] sm:$0x1]
    %s77 = scalar_lea.vmem %s0, 35
    %v78 = vld [vmem:[%s77] sm:$0x2]
    %vm79 = vcmask 1041409
    %v80 = vsel %vm79, %v78, %v76
    %s81 = scalar_lea.vmem %s0, 4
    %v82 = vld [vmem:[%s81] sm:$0x1]
    %s83 = scalar_lea.vmem %s0, 35
    %v84 = vld [vmem:[%s83] sm:$0x2]
    %vm85 = vcmask 1041409
    %v86 = vsel %vm85, %v84, %v82
    %vm87 = vcmask 130048
    %v88 = vsel %vm87, %v86, %v80
    %89 = vrot.lane.b32.xlu0 %v88, 112
    %v90 = vpop.permute.xlu0 %89
    %vm91 = vcmask 97280
    %s92 = scalar_lea.vmem [#allocation0], 8
    %93 = vst.msk [vmem:[%s92] sm:$0x3] %vm91, %v90
    %vm94 = vcmask 1048448
    %95 = vst.msk [vmem:[#allocation0] sm:$0x3] %vm94, %v90
    %s96 = scalar_lea.vmem %s0, 13
    %v97 = vld [vmem:[%s96] sm:$0x1]
    %s98 = scalar_lea.vmem %s0, 44
    %v99 = vld [vmem:[%s98] sm:$0x2]
    %vm100 = vcmask 1041409
    %v101 = vsel %vm100, %v99, %v97
    %s102 = scalar_lea.vmem %s0, 13
    %v103 = vld [vmem:[%s102] sm:$0x1]
    %s104 = scalar_lea.vmem %s0, 44
    %v105 = vld [vmem:[%s104] sm:$0x2]
    %vm106 = vcmask 1041409
    %v107 = vsel %vm106, %v105, %v103
    %vm108 = vcmask 162816
    %v109 = vsel %vm108, %v107, %v101
    %110 = vrot.lane.b32.xlu0 %v109, 108
    %v111 = vpop.permute.xlu0 %110
    %vm112 = vcmask 64512
    %s113 = scalar_lea.vmem [#allocation0], 24
    %114 = vst.msk [vmem:[%s113] sm:$0x3] %vm112, %v111
    %vm115 = vcmask 1048416
    %s116 = scalar_lea.vmem [#allocation0], 16
    %117 = vst.msk [vmem:[%s116] sm:$0x3] %vm115, %v111
    %s118 = scalar_lea.vmem %s0, 22
    %v119 = vld [vmem:[%s118] sm:$0x1]
    %s120 = scalar_lea.vmem %s0, 53
    %v121 = vld [vmem:[%s120] sm:$0x2]
    %vm122 = vcmask 1041409
    %v123 = vsel %vm122, %v121, %v119
    %s124 = scalar_lea.vmem %s0, 22
    %v125 = vld [vmem:[%s124] sm:$0x1]
    %s126 = scalar_lea.vmem %s0, 53
    %v127 = vld [vmem:[%s126] sm:$0x2]
    %vm128 = vcmask 1041409
    %v129 = vsel %vm128, %v127, %v125
    %vm130 = vcmask 195584
    %v131 = vsel %vm130, %v129, %v123
    %132 = vrot.lane.b32.xlu0 %v131, 104
    %v133 = vpop.permute.xlu0 %132
    %vm134 = vcmask 31744
    %s135 = scalar_lea.vmem [#allocation0], 40
    %136 = vst.msk [vmem:[%s135] sm:$0x3] %vm134, %v133
    %vm137 = vcmask 1048384
    %s138 = scalar_lea.vmem [#allocation0], 32
    %139 = vst.msk [vmem:[%s138] sm:$0x3] %vm137, %v133
    %s140 = scalar_lea.vmem %s0, 8
    %v141 = vld [vmem:[%s140] sm:$0x1]
    %s142 = scalar_lea.vmem %s0, 39
    %v143 = vld [vmem:[%s142] sm:$0x2]
    %vm144 = vcmask 1041409
    %v145 = vsel %vm144, %v143, %v141
    %146 = vrot.lane.b32.xlu0 %v145, 96
    %v147 = vpop.permute.xlu0 %146
    %vm148 = vcmask 1015552
    %s149 = scalar_lea.vmem [#allocation0], 8
    %150 = vst.msk [vmem:[%s149] sm:$0x3] %vm148, %v147
    %s151 = scalar_lea.vmem %s0, 17
    %v152 = vld [vmem:[%s151] sm:$0x1]
    %s153 = scalar_lea.vmem %s0, 48
    %v154 = vld [vmem:[%s153] sm:$0x2]
    %vm155 = vcmask 1041409
    %v156 = vsel %vm155, %v154, %v152
    %157 = vrot.lane.b32.xlu0 %v156, 92
    %v158 = vpop.permute.xlu0 %157
    %vm159 = vcmask 982752
    %s160 = scalar_lea.vmem [#allocation0], 24
    %161 = vst.msk [vmem:[%s160] sm:$0x3] %vm159, %v158
    %s162 = scalar_lea.vmem %s0, 26
    %v163 = vld [vmem:[%s162] sm:$0x1]
    %s164 = scalar_lea.vmem %s0, 57
    %v165 = vld [vmem:[%s164] sm:$0x2]
    %vm166 = vcmask 1041409
    %v167 = vsel %vm166, %v165, %v163
    %168 = vrot.lane.b32.xlu0 %v167, 88
    %v169 = vpop.permute.xlu0 %168
    %vm170 = vcmask 949952
    %s171 = scalar_lea.vmem [#allocation0], 40
    %172 = vst.msk [vmem:[%s171] sm:$0x3] %vm170, %v169
    %s173 = scalar_lea.vmem %s0, 3
    %v174 = vld [vmem:[%s173] sm:$0x1]
    %s175 = scalar_lea.vmem %s0, 34
    %v176 = vld [vmem:[%s175] sm:$0x2]
    %vm177 = vcmask 1041409
    %v178 = vsel %vm177, %v176, %v174
    %179 = vrot.lane.b32.xlu0 %v178, 84
    %v180 = vpop.permute.xlu0 %179
    %vm181 = vcmask 917152
    %182 = vst.msk [vmem:[#allocation0] sm:$0x3] %vm181, %v180
    %s183 = scalar_lea.vmem %s0, 12
    %v184 = vld [vmem:[%s183] sm:$0x1]
    %s185 = scalar_lea.vmem %s0, 43
    %v186 = vld [vmem:[%s185] sm:$0x2]
    %vm187 = vcmask 1041409
    %v188 = vsel %vm187, %v186, %v184
    %189 = vrot.lane.b32.xlu0 %v188, 80
    %v190 = vpop.permute.xlu0 %189
    %vm191 = vcmask 884352
    %s192 = scalar_lea.vmem [#allocation0], 16
    %193 = vst.msk [vmem:[%s192] sm:$0x3] %vm191, %v190
    %s194 = scalar_lea.vmem %s0, 21
    %v195 = vld [vmem:[%s194] sm:$0x1]
    %s196 = scalar_lea.vmem %s0, 52
    %v197 = vld [vmem:[%s196] sm:$0x2]
    %vm198 = vcmask 1041409
    %v199 = vsel %vm198, %v197, %v195
    %200 = vrot.lane.b32.xlu0 %v199, 76
    %v201 = vpop.permute.xlu0 %200
    %vm202 = vcmask 851552
    %s203 = scalar_lea.vmem [#allocation0], 32
    %204 = vst.msk [vmem:[%s203] sm:$0x3] %vm202, %v201
    %s205 = scalar_lea.vmem %s0, 7
    %v206 = vld [vmem:[%s205] sm:$0x1]
    %s207 = scalar_lea.vmem %s0, 38
    %v208 = vld [vmem:[%s207] sm:$0x2]
    %vm209 = vcmask 1041409
    %v210 = vsel %vm209, %v208, %v206
    %211 = vrot.lane.b32.xlu0 %v210, 68
    %v212 = vpop.permute.xlu0 %211
    %vm213 = vcmask 785952
    %s214 = scalar_lea.vmem [#allocation0], 8
    %215 = vst.msk [vmem:[%s214] sm:$0x3] %vm213, %v212
    %s216 = scalar_lea.vmem %s0, 16
    %v217 = vld [vmem:[%s216] sm:$0x1]
    %s218 = scalar_lea.vmem %s0, 47
    %v219 = vld [vmem:[%s218] sm:$0x2]
    %vm220 = vcmask 1041409
    %v221 = vsel %vm220, %v219, %v217
    %222 = vrot.lane.b32.xlu0 %v221, 64
    %v223 = vpop.permute.xlu0 %222
    %vm224 = vcmask 753152
    %s225 = scalar_lea.vmem [#allocation0], 24
    %226 = vst.msk [vmem:[%s225] sm:$0x3] %vm224, %v223
    %s227 = scalar_lea.vmem %s0, 25
    %v228 = vld [vmem:[%s227] sm:$0x1]
    %s229 = scalar_lea.vmem %s0, 56
    %v230 = vld [vmem:[%s229] sm:$0x2]
    %vm231 = vcmask 1041409
    %v232 = vsel %vm231, %v230, %v228
    %233 = vrot.lane.b32.xlu0 %v232, 60
    %v234 = vpop.permute.xlu0 %233
    %vm235 = vcmask 720352
    %s236 = scalar_lea.vmem [#allocation0], 40
    %237 = vst.msk [vmem:[%s236] sm:$0x3] %vm235, %v234
    %s238 = scalar_lea.vmem %s0, 2
    %v239 = vld [vmem:[%s238] sm:$0x1]
    %s240 = scalar_lea.vmem %s0, 33
    %v241 = vld [vmem:[%s240] sm:$0x2]
    %vm242 = vcmask 1041409
    %v243 = vsel %vm242, %v241, %v239
    %244 = vrot.lane.b32.xlu0 %v243, 56
    %v245 = vpop.permute.xlu0 %244
    %vm246 = vcmask 687552
    %247 = vst.msk [vmem:[#allocation0] sm:$0x3] %vm246, %v245
    %s248 = scalar_lea.vmem %s0, 11
    %v249 = vld [vmem:[%s248] sm:$0x1]
    %s250 = scalar_lea.vmem %s0, 42
    %v251 = vld [vmem:[%s250] sm:$0x2]
    %vm252 = vcmask 1041409
    %v253 = vsel %vm252, %v251, %v249
    %254 = vrot.lane.b32.xlu0 %v253, 52
    %v255 = vpop.permute.xlu0 %254
    %vm256 = vcmask 654752
    %s257 = scalar_lea.vmem [#allocation0], 16
    %258 = vst.msk [vmem:[%s257] sm:$0x3] %vm256, %v255
    %s259 = scalar_lea.vmem %s0, 20
    %v260 = vld [vmem:[%s259] sm:$0x1]
    %s261 = scalar_lea.vmem %s0, 51
    %v262 = vld [vmem:[%s261] sm:$0x2]
    %vm263 = vcmask 1041409
    %v264 = vsel %vm263, %v262, %v260
    %265 = vrot.lane.b32.xlu0 %v264, 48
    %v266 = vpop.permute.xlu0 %265
    %vm267 = vcmask 621952
    %s268 = scalar_lea.vmem [#allocation0], 32
    %269 = vst.msk [vmem:[%s268] sm:$0x3] %vm267, %v266
    %s270 = scalar_lea.vmem %s0, 6
    %v271 = vld [vmem:[%s270] sm:$0x1]
    %s272 = scalar_lea.vmem %s0, 37
    %v273 = vld [vmem:[%s272] sm:$0x2]
    %vm274 = vcmask 1041409
    %v275 = vsel %vm274, %v273, %v271
    %276 = vrot.lane.b32.xlu0 %v275, 40
    %v277 = vpop.permute.xlu0 %276
    %vm278 = vcmask 556352
    %s279 = scalar_lea.vmem [#allocation0], 8
    %280 = vst.msk [vmem:[%s279] sm:$0x3] %vm278, %v277
    %s281 = scalar_lea.vmem %s0, 15
    %v282 = vld [vmem:[%s281] sm:$0x1]
    %s283 = scalar_lea.vmem %s0, 46
    %v284 = vld [vmem:[%s283] sm:$0x2]
    %vm285 = vcmask 1041409
    %v286 = vsel %vm285, %v284, %v282
    %287 = vrot.lane.b32.xlu0 %v286, 36
    %v288 = vpop.permute.xlu0 %287
    %vm289 = vcmask 523552
    %s290 = scalar_lea.vmem [#allocation0], 24
    %291 = vst.msk [vmem:[%s290] sm:$0x3] %vm289, %v288
    %s292 = scalar_lea.vmem %s0, 24
    %v293 = vld [vmem:[%s292] sm:$0x1]
    %s294 = scalar_lea.vmem %s0, 55
    %v295 = vld [vmem:[%s294] sm:$0x2]
    %vm296 = vcmask 1041409
    %v297 = vsel %vm296, %v295, %v293
    %298 = vrot.lane.b32.xlu0 %v297, 32
    %v299 = vpop.permute.xlu0 %298
    %vm300 = vcmask 490752
    %s301 = scalar_lea.vmem [#allocation0], 40
    %302 = vst.msk [vmem:[%s301] sm:$0x3] %vm300, %v299
    %s303 = scalar_lea.vmem %s0, 1
    %v304 = vld [vmem:[%s303] sm:$0x1]
    %s305 = scalar_lea.vmem %s0, 32
    %v306 = vld [vmem:[%s305] sm:$0x2]
    %vm307 = vcmask 1041409
    %v308 = vsel %vm307, %v306, %v304
    %309 = vrot.lane.b32.xlu0 %v308, 28
    %v310 = vpop.permute.xlu0 %309
    %vm311 = vcmask 457952
    %312 = vst.msk [vmem:[#allocation0] sm:$0x3] %vm311, %v310
    %s313 = scalar_lea.vmem %s0, 10
    %v314 = vld [vmem:[%s313] sm:$0x1]
    %s315 = scalar_lea.vmem %s0, 41
    %v316 = vld [vmem:[%s315] sm:$0x2]
    %vm317 = vcmask 1041409
    %v318 = vsel %vm317, %v316, %v314
    %319 = vrot.lane.b32.xlu0 %v318, 24
    %v320 = vpop.permute.xlu0 %319
    %vm321 = vcmask 425152
    %s322 = scalar_lea.vmem [#allocation0], 16
    %323 = vst.msk [vmem:[%s322] sm:$0x3] %vm321, %v320
    %s324 = scalar_lea.vmem %s0, 19
    %v325 = vld [vmem:[%s324] sm:$0x1]
    %s326 = scalar_lea.vmem %s0, 50
    %v327 = vld [vmem:[%s326] sm:$0x2]
    %vm328 = vcmask 1041409
    %v329 = vsel %vm328, %v327, %v325
    %330 = vrot.lane.b32.xlu0 %v329, 20
    %v331 = vpop.permute.xlu0 %330
    %vm332 = vcmask 392352
    %s333 = scalar_lea.vmem [#allocation0], 32
    %334 = vst.msk [vmem:[%s333] sm:$0x3] %vm332, %v331
    %s335 = scalar_lea.vmem %s0, 5
    %v336 = vld [vmem:[%s335] sm:$0x1]
    %s337 = scalar_lea.vmem %s0, 36
    %v338 = vld [vmem:[%s337] sm:$0x2]
    %vm339 = vcmask 1041409
    %v340 = vsel %vm339, %v338, %v336
    %341 = vrot.lane.b32.xlu0 %v340, 12
    %v342 = vpop.permute.xlu0 %341
    %vm343 = vcmask 326752
    %s344 = scalar_lea.vmem [#allocation0], 8
    %345 = vst.msk [vmem:[%s344] sm:$0x3] %vm343, %v342
    %s346 = scalar_lea.vmem %s0, 14
    %v347 = vld [vmem:[%s346] sm:$0x1]
    %s348 = scalar_lea.vmem %s0, 45
    %v349 = vld [vmem:[%s348] sm:$0x2]
    %vm350 = vcmask 1041409
    %v351 = vsel %vm350, %v349, %v347
    %352 = vrot.lane.b32.xlu0 %v351, 8
    %v353 = vpop.permute.xlu0 %352
    %vm354 = vcmask 293952
    %s355 = scalar_lea.vmem [#allocation0], 24
    %356 = vst.msk [vmem:[%s355] sm:$0x3] %vm354, %v353
    %s357 = scalar_lea.vmem %s0, 23
    %v358 = vld [vmem:[%s357] sm:$0x1]
    %s359 = scalar_lea.vmem %s0, 54
    %v360 = vld [vmem:[%s359] sm:$0x2]
    %vm361 = vcmask 1041409
    %v362 = vsel %vm361, %v360, %v358
    %363 = vrot.lane.b32.xlu0 %v362, 4
    %v364 = vpop.permute.xlu0 %363
    %vm365 = vcmask 261152
    %s366 = scalar_lea.vmem [#allocation0], 40
    %367 = vst.msk [vmem:[%s366] sm:$0x3] %vm365, %v364
    %s369 = sshllo.u32 0, 2
    %v371 = vld [vmem:[#allocation0] sm:%s369]
    %s372 = sshllo.u32 0, 2
    %373 = vst [vmem:[%s1] sm:%s372] %v371
    %s374 = scalar_lea.vmem [#allocation0], 8
    %v375 = vld [vmem:[%s374] sm:%s369]
    %s376 = sshllo.u32 0, 2
    %s377 = scalar_lea.vmem %s1, 2
    %378 = vst [vmem:[%s377] sm:%s376] %v375
    %s379 = scalar_lea.vmem [#allocation0], 16
    %v380 = vld [vmem:[%s379] sm:%s369]
    %s381 = sshllo.u32 0, 2
    %s382 = smul.addr 2, 2
    %s383 = scalar_lea.vmem %s1, %s382
    %384 = vst [vmem:[%s383] sm:%s381] %v380
    %s385 = scalar_lea.vmem [#allocation0], 24
    %v386 = vld [vmem:[%s385] sm:%s369]
    %s387 = sshllo.u32 0, 2
    %s388 = smul.addr 2, 3
    %s389 = scalar_lea.vmem %s1, %s388
    %390 = vst [vmem:[%s389] sm:%s387] %v386
    %s391 = scalar_lea.vmem [#allocation0], 32
    %v392 = vld [vmem:[%s391] sm:%s369]
    %s393 = sshllo.u32 0, 2
    %s394 = smul.addr 2, 4
    %s395 = scalar_lea.vmem %s1, %s394
    %396 = vst [vmem:[%s395] sm:%s393] %v392
    %s397 = scalar_lea.vmem [#allocation0], 40
    %v398 = vld [vmem:[%s397] sm:%s369]
    %s399 = sshllo.u32 0, 2
    %s400 = smul.addr 2, 5
    %s401 = scalar_lea.vmem %s1, %s400
    %402 = vst [vmem:[%s401] sm:%s399] %v398
    %s403 = scalar_lea.vmem [#allocation0], 48
    %v404 = vld [vmem:[%s403] sm:%s369]
    %s405 = sshllo.u32 0, 2
    %s406 = smul.addr 2, 6
    %s407 = scalar_lea.vmem %s1, %s406
    %408 = vst [vmem:[%s407] sm:%s405] %v404

// kernel: qnn_model_1_forward.2
$region0: #{qnn_model_1_forward.2}
  #allocation0 [shape = 'u32[]', space=smem, size = 0x4, offset = 0x4, fixed_abs, tag = 'smem constant byte address 0x4 - core index']
  #allocation1 [shape = 'u32[144,128]{1,0:T(1,128)}', space=vmem, size = 0x12000, scoped, tag = 'internal scratch']
  %s0 = inlined_call_operand.vmem [shape: f32[9,16,256], index: 0, kind: input, shape index: {}]
  %s1 = inlined_call_operand.vmem [shape: f32[9,256], index: 1, kind: output, shape index: {}]
  %s2 = sld [smem:[#allocation0]]
  $region14: #{qnn_model_1_forward.2} parent=0
    _
  %s4 = ssub.s32 1, %s2
  %s5 = scalar_select 0, %s4, %s2
  // Predicated region
  $region2: #{qnn_model_1_forward.2} parent=0 // pred_check
    _
  $region3: #{qnn_model_1_forward.2} parent=0 // pred_check_branch
    %7 = sbr.rel (0) target = $region5
  $region4: #{qnn_model_1_forward.2} parent=0 // pred_region
    _
  $region5: #{qnn_model_1_forward.2} parent=0 // pred_fallthru
    _
  %v8 = vld [vmem:[%s0] sm:$0xff]
  %v9 = vld [vmem:[%s0 + $0x8] sm:$0xff]
  %v10 = vld [vmem:[%s0 + $0x10] sm:$0xff]
  %v11 = vld [vmem:[%s0 + $0x18] sm:$0xff]
  %v12 = vand.u32 2147483647, %v8
  %vm13 = vcmp.le.f32.partialorder %v12, 0.7853982
  %vm14 = vcmp.lt.s32.totalorder %v8, 0
  %v15 = vand.u32 %v8, 2139095040
  %v16 = vshrl.u32 %v15, 23
  %v17 = vsub.s32 %v16, 127
  %v18 = vand.u32 2147483647, %v8
  %v19 = vand.u32 %v18, 8388607
  %v20 = vor.u32 %v19, 8388608
  %v21 = vsub.s32 0, %v20
  %v22 = vadd.s32 %v17, 1
  %vm23 = vcmp.gt.s32.totalorder %v22, 0
  %v24 = vsel %vm23, %v22, 0
  %v25 = vshrl.u32 %v24, 5
  %v26 = vand.u32 %v24, 31
  %v27 = vsub.s32 32, %v26
  %v28 = vshrl.u32 683565275, %v27
  %v29 = vshll.u32 683565275, %v26
  %v30 = vshrl.u32 2475754826, %v27
  %v31 = vor.u32 %v29, %v30
  %v32 = vshll.u32 2475754826, %v26
  %v33 = vshrl.u32 2131351028, %v27
  %v34 = vor.u32 %v32, %v33
  %v35 = vshll.u32 2131351028, %v26
  %v36 = vshrl.u32 2102212464, %v27
  %v37 = vor.u32 %v35, %v36
  %v38 = vshll.u32 2102212464, %v26
  %v39 = vshrl.u32 920167782, %v27
  %v40 = vor.u32 %v38, %v39
  %v41 = vshll.u32 920167782, %v26
  %v42 = vshrl.u32 1326507024, %v27
  %v43 = vor.u32 %v41, %v42
  %vm44 = vcmp.lt.s32.totalorder %v25, 1
  %vm45 = vcmp.lt.s32.totalorder %v25, 2
  %vm46 = vcmp.lt.s32.totalorder %v25, 3
  %vm47 = vcmp.lt.s32.totalorder %v25, 4
  %v48 = vsel %vm44, %v28, %v31
  %v49 = vsel %vm47, %v37, 2102212464
  %v50 = vsel %vm46, %v34, %v49
  %v51 = vsel %vm45, %v48, %v50
  %v52 = vsel %vm44, %v31, %v34
  %v53 = vsel %vm47, %v40, 920167782
  %v54 = vsel %vm46, %v37, %v53
  %v55 = vsel %vm45, %v52, %v54
  %v56 = vsel %vm44, %v34, %v37
  %v57 = vsel %vm47, %v43, 1326507024
  %v58 = vsel %vm46, %v40, %v57
  %v59 = vsel %vm45, %v56, %v58
  %v60 = vshll.u32 %v20, 8
  %v61 = vmul.u32.u64.compose %v60, %v59
  %v62 = vextract.low.u32 %v61
  %v63 = vextract.high.u32 %v61
  %v64 = vmul.u32.u64.compose %v60, %v55
  %v65 = vextract.low.u32 %v64
  %v66 = vextract.high.u32 %v64
  %v67 = vmul.u32 %v60, %v51
  %v68 = vadd.s32 %v63, %v65
  %vm69 = vc.u32 %v63, %v65
  %v70 = vadd.s32 %v66, 1
  %v71 = vsel %vm69, %v70, %v66
  %v72 = vadd.s32 %v67, %v71
  %v73 = vadd.s32 %v72, 536870912
  %v74 = vshrl.u32 %v73, 30
  %v75 = vshll.u32 %v74, 30
  %v76 = vsub.s32 %v72, %v75
  %vm77 = vcmp.lt.s32.totalorder %v76, 0
  %v78 = vsub.s32 0, %v76
  %v79 = vsel %vm77, %v78, %v76
  %v80 = vclz %v79
  %v81 = vsub.s32 %v80, 2
  %vm82 = vcmp.gt.s32.totalorder 0, %v81
  %v83 = vsel %vm82, 0, %v81
  %v84 = vsub.s32 32, %v83
  %v85 = vshll.u32 %v76, %v83
  %v86 = vshrl.u32 %v68, %v84
  %v87 = vor.u32 %v85, %v86
  %v88 = vsub.s32 4294967266, %v83
  %v89 = vadd.s32 %v88, 127
  %v90 = vshll.u32 %v89, 23
  %v91 = vor.u32 4788187, %v90
  %v92 = vand.u32 2147483647, %v91
  %v94 = vcvt.s32.f32 %v87
  %v95 = vmul.f32 %v94, %v92
  %v96 = vxor.u32 %v95, 2147483648
  %v97 = vsel %vm14, %v96, %v95
  %v98 = vsub.s32 4, %v74
  %v99 = vsel %vm14, %v98, %v74
  %v100 = vsel %vm13, %v8, %v97
  %v101 = vsel %vm13, 0, %v99
  %v102 = vcosq.f32.pop %v100
  %v103 = vsinq.f32.pop %v100
  %vm104 = vweird.f32 %v8
  %v105 = vand.u32 %v101, 3
  %vm106 = vcmp.lt.s32.totalorder %v105, 2
  %vm107 = vcmp.eq.s32.totalorder %v105, 0
  %v108 = vxor.u32 %v103, 2147483648
  %v109 = vsel %vm107, %v102, %v108
  %vm110 = vcmp.eq.s32.totalorder %v105, 2
  %v111 = vxor.u32 %v102, 2147483648
  %v112 = vsel %vm110, %v111, %v103
  %v113 = vsel %vm106, %v109, %v112
  %v114 = vsel %vm104, nan, %v113
  %v115 = vand.u32 2147483647, %v9
  %vm116 = vcmp.le.f32.partialorder %v115, 0.7853982
  %vm117 = vcmp.lt.s32.totalorder %v9, 0
  %v118 = vand.u32 %v9, 2139095040
  %v119 = vshrl.u32 %v118, 23
  %v120 = vsub.s32 %v119, 127
  %v121 = vand.u32 2147483647, %v9
  %v122 = vand.u32 %v121, 8388607
  %v123 = vor.u32 %v122, 8388608
  %v124 = vsub.s32 0, %v123
  %v125 = vadd.s32 %v120, 1
  %vm126 = vcmp.gt.s32.totalorder %v125, 0
  %v127 = vsel %vm126, %v125, 0
  %v128 = vshrl.u32 %v127, 5
  %v129 = vand.u32 %v127, 31
  %v130 = vsub.s32 32, %v129
  %v131 = vshrl.u32 683565275, %v130
  %v132 = vshll.u32 683565275, %v129
  %v133 = vshrl.u32 2475754826, %v130
  %v134 = vor.u32 %v132, %v133
  %v135 = vshll.u32 2475754826, %v129
  %v136 = vshrl.u32 2131351028, %v130
  %v137 = vor.u32 %v135, %v136
  %v138 = vshll.u32 2131351028, %v129
  %v139 = vshrl.u32 2102212464, %v130
  %v140 = vor.u32 %v138, %v139
  %v141 = vshll.u32 2102212464, %v129
  %v142 = vshrl.u32 920167782, %v130
  %v143 = vor.u32 %v141, %v142
  %v144 = vshll.u32 920167782, %v129
  %v145 = vshrl.u32 1326507024, %v130
  %v146 = vor.u32 %v144, %v145
  %vm147 = vcmp.lt.s32.totalorder %v128, 1
  %vm148 = vcmp.lt.s32.totalorder %v128, 2
  %vm149 = vcmp.lt.s32.totalorder %v128, 3
  %vm150 = vcmp.lt.s32.totalorder %v128, 4
  %v151 = vsel %vm147, %v131, %v134
  %v152 = vsel %vm150, %v140, 2102212464
  %v153 = vsel %vm149, %v137, %v152
  %v154 = vsel %vm148, %v151, %v153
  %v155 = vsel %vm147, %v134, %v137
  %v156 = vsel %vm150, %v143, 920167782
  %v157 = vsel %vm149, %v140, %v156
  %v158 = vsel %vm148, %v155, %v157
  %v159 = vsel %vm147, %v137, %v140
  %v160 = vsel %vm150, %v146, 1326507024
  %v161 = vsel %vm149, %v143, %v160
  %v162 = vsel %vm148, %v159, %v161
  %v163 = vshll.u32 %v123, 8
  %v164 = vmul.u32.u64.compose %v163, %v162
  %v165 = vextract.low.u32 %v164
  %v166 = vextract.high.u32 %v164
  %v167 = vmul.u32.u64.compose %v163, %v158
  %v168 = vextract.low.u32 %v167
  %v169 = vextract.high.u32 %v167
  %v170 = vmul.u32 %v163, %v154
  %v171 = vadd.s32 %v166, %v168
  %vm172 = vc.u32 %v166, %v168
  %v173 = vadd.s32 %v169, 1
  %v174 = vsel %vm172, %v173, %v169
  %v175 = vadd.s32 %v170, %v174
  %v176 = vadd.s32 %v175, 536870912
  %v177 = vshrl.u32 %v176, 30
  %v178 = vshll.u32 %v177, 30
  %v179 = vsub.s32 %v175, %v178
  %vm180 = vcmp.lt.s32.totalorder %v179, 0
  %v181 = vsub.s32 0, %v179
  %v182 = vsel %vm180, %v181, %v179
  %v183 = vclz %v182
  %v184 = vsub.s32 %v183, 2
  %vm185 = vcmp.gt.s32.totalorder 0, %v184
  %v186 = vsel %vm185, 0, %v184
  %v187 = vsub.s32 32, %v186
  %v188 = vshll.u32 %v179, %v186
  %v189 = vshrl.u32 %v171, %v187
  %v190 = vor.u32 %v188, %v189
  %v191 = vsub.s32 4294967266, %v186
  %v192 = vadd.s32 %v191, 127
  %v193 = vshll.u32 %v192, 23
  %v194 = vor.u32 4788187, %v193
  %v195 = vand.u32 2147483647, %v194
  %v197 = vcvt.s32.f32 %v190
  %v198 = vmul.f32 %v197, %v195
  %v199 = vxor.u32 %v198, 2147483648
  %v200 = vsel %vm117, %v199, %v198
  %v201 = vsub.s32 4, %v177
  %v202 = vsel %vm117, %v201, %v177
  %v203 = vsel %vm116, %v9, %v200
  %v204 = vsel %vm116, 0, %v202
  %v205 = vcosq.f32.pop %v203
  %v206 = vsinq.f32.pop %v203
  %vm207 = vweird.f32 %v9
  %v208 = vand.u32 %v204, 3
  %vm209 = vcmp.lt.s32.totalorder %v208, 2
  %vm210 = vcmp.eq.s32.totalorder %v208, 0
  %v211 = vxor.u32 %v206, 2147483648
  %v212 = vsel %vm210, %v205, %v211
  %vm213 = vcmp.eq.s32.totalorder %v208, 2
  %v214 = vxor.u32 %v205, 2147483648
  %v215 = vsel %vm213, %v214, %v206
  %v216 = vsel %vm209, %v212, %v215
  %v217 = vsel %vm207, nan, %v216
  %v218 = vand.u32 2147483647, %v10
  %vm219 = vcmp.le.f32.partialorder %v218, 0.7853982
  %vm220 = vcmp.lt.s32.totalorder %v10, 0
  %v221 = vand.u32 %v10, 2139095040
  %v222 = vshrl.u32 %v221, 23
  %v223 = vsub.s32 %v222, 127
  %v224 = vand.u32 2147483647, %v10
  %v225 = vand.u32 %v224, 8388607
  %v226 = vor.u32 %v225, 8388608
  %v227 = vsub.s32 0, %v226
  %v228 = vadd.s32 %v223, 1
  %vm229 = vcmp.gt.s32.totalorder %v228, 0
  %v230 = vsel %vm229, %v228, 0
  %v231 = vshrl.u32 %v230, 5
  %v232 = vand.u32 %v230, 31
  %v233 = vsub.s32 32, %v232
  %v234 = vshrl.u32 683565275, %v233
  %v235 = vshll.u32 683565275, %v232
  %v236 = vshrl.u32 2475754826, %v233
  %v237 = vor.u32 %v235, %v236
  %v238 = vshll.u32 2475754826, %v232
  %v239 = vshrl.u32 2131351028, %v233
  %v240 = vor.u32 %v238, %v239
  %v241 = vshll.u32 2131351028, %v232
  %v242 = vshrl.u32 2102212464, %v233
  %v243 = vor.u32 %v241, %v242
  %v244 = vshll.u32 2102212464, %v232
  %v245 = vshrl.u32 920167782, %v233
  %v246 = vor.u32 %v244, %v245
  %v247 = vshll.u32 920167782, %v232
  %v248 = vshrl.u32 1326507024, %v233
  %v249 = vor.u32 %v247, %v248
  %vm250 = vcmp.lt.s32.totalorder %v231, 1
  %vm251 = vcmp.lt.s32.totalorder %v231, 2
  %vm252 = vcmp.lt.s32.totalorder %v231, 3
  %vm253 = vcmp.lt.s32.totalorder %v231, 4
  %v254 = vsel %vm250, %v234, %v237
  %v255 = vsel %vm253, %v243, 2102212464
  %v256 = vsel %vm252, %v240, %v255
  %v257 = vsel %vm251, %v254, %v256
  %v258 = vsel %vm250, %v237, %v240
  %v259 = vsel %vm253, %v246, 920167782
  %v260 = vsel %vm252, %v243, %v259
  %v261 = vsel %vm251, %v258, %v260
  %v262 = vsel %vm250, %v240, %v243
  %v263 = vsel %vm253, %v249, 1326507024
  %v264 = vsel %vm252, %v246, %v263
  %v265 = vsel %vm251, %v262, %v264
  %v266 = vshll.u32 %v226, 8
  %v267 = vmul.u32.u64.compose %v266, %v265
  %v268 = vextract.low.u32 %v267
  %v269 = vextract.high.u32 %v267
  %v270 = vmul.u32.u64.compose %v266, %v261
  %v271 = vextract.low.u32 %v270
  %v272 = vextract.high.u32 %v270
  %v273 = vmul.u32 %v266, %v257
  %v274 = vadd.s32 %v269, %v271
  %vm275 = vc.u32 %v269, %v271
  %v276 = vadd.s32 %v272, 1
  %v277 = vsel %vm275, %v276, %v272
  %v278 = vadd.s32 %v273, %v277
  %v279 = vadd.s32 %v278, 536870912
  %v280 = vshrl.u32 %v279, 30
  %v281 = vshll.u32 %v280, 30
  %v282 = vsub.s32 %v278, %v281
  %vm283 = vcmp.lt.s32.totalorder %v282, 0
  %v284 = vsub.s32 0, %v282
  %v285 = vsel %vm283, %v284, %v282
  %v286 = vclz %v285
  %v287 = vsub.s32 %v286, 2
  %vm288 = vcmp.gt.s32.totalorder 0, %v287
  %v289 = vsel %vm288, 0, %v287
  %v290 = vsub.s32 32, %v289
  %v291 = vshll.u32 %v282, %v289
  %v292 = vshrl.u32 %v274, %v290
  %v293 = vor.u32 %v291, %v292
  %v294 = vsub.s32 4294967266, %v289
  %v295 = vadd.s32 %v294, 127
  %v296 = vshll.u32 %v295, 23
  %v297 = vor.u32 4788187, %v296
  %v298 = vand.u32 2147483647, %v297
  %v300 = vcvt.s32.f32 %v293
  %v301 = vmul.f32 %v300, %v298
  %v302 = vxor.u32 %v301, 2147483648
  %v303 = vsel %vm220, %v302, %v301
  %v304 = vsub.s32 4, %v280
  %v305 = vsel %vm220, %v304, %v280
  %v306 = vsel %vm219, %v10, %v303
  %v307 = vsel %vm219, 0, %v305
  %v308 = vcosq.f32.pop %v306
  %v309 = vsinq.f32.pop %v306
  %vm310 = vweird.f32 %v10
  %v311 = vand.u32 %v307, 3
  %vm312 = vcmp.lt.s32.totalorder %v311, 2
  %vm313 = vcmp.eq.s32.totalorder %v311, 0
  %v314 = vxor.u32 %v309, 2147483648
  %v315 = vsel %vm313, %v308, %v314
  %vm316 = vcmp.eq.s32.totalorder %v311, 2
  %v317 = vxor.u32 %v308, 2147483648
  %v318 = vsel %vm316, %v317, %v309
  %v319 = vsel %vm312, %v315, %v318
  %v320 = vsel %vm310, nan, %v319
  %v321 = vand.u32 2147483647, %v11
  %vm322 = vcmp.le.f32.partialorder %v321, 0.7853982
  %vm323 = vcmp.lt.s32.totalorder %v11, 0
  %v324 = vand.u32 %v11, 2139095040
  %v325 = vshrl.u32 %v324, 23
  %v326 = vsub.s32 %v325, 127
  %v327 = vand.u32 2147483647, %v11
  %v328 = vand.u32 %v327, 8388607
  %v329 = vor.u32 %v328, 8388608
  %v330 = vsub.s32 0, %v329
  %v331 = vadd.s32 %v326, 1
  %vm332 = vcmp.gt.s32.totalorder %v331, 0
  %v333 = vsel %vm332, %v331, 0
  %v334 = vshrl.u32 %v333, 5
  %v335 = vand.u32 %v333, 31
  %v336 = vsub.s32 32, %v335
  %v337 = vshrl.u32 683565275, %v336
  %v338 = vshll.u32 683565275, %v335
  %v339 = vshrl.u32 2475754826, %v336
  %v340 = vor.u32 %v338, %v339
  %v341 = vshll.u32 2475754826, %v335
  %v342 = vshrl.u32 2131351028, %v336
  %v343 = vor.u32 %v341, %v342
  %v344 = vshll.u32 2131351028, %v335
  %v345 = vshrl.u32 2102212464, %v336
  %v346 = vor.u32 %v344, %v345
  %v347 = vshll.u32 2102212464, %v335
  %v348 = vshrl.u32 920167782, %v336
  %v349 = vor.u32 %v347, %v348
  %v350 = vshll.u32 920167782, %v335
  %v351 = vshrl.u32 1326507024, %v336
  %v352 = vor.u32 %v350, %v351
  %vm353 = vcmp.lt.s32.totalorder %v334, 1
  %vm354 = vcmp.lt.s32.totalorder %v334, 2
  %vm355 = vcmp.lt.s32.totalorder %v334, 3
  %vm356 = vcmp.lt.s32.totalorder %v334, 4
  %v357 = vsel %vm353, %v337, %v340
  %v358 = vsel %vm356, %v346, 2102212464
  %v359 = vsel %vm355, %v343, %v358
  %v360 = vsel %vm354, %v357, %v359
  %v361 = vsel %vm353, %v340, %v343
  %v362 = vsel %vm356, %v349, 920167782
  %v363 = vsel %vm355, %v346, %v362
  %v364 = vsel %vm354, %v361, %v363
  %v365 = vsel %vm353, %v343, %v346
  %v366 = vsel %vm356, %v352, 1326507024
  %v367 = vsel %vm355, %v349, %v366
  %v368 = vsel %vm354, %v365, %v367
  %v369 = vshll.u32 %v329, 8
  %v370 = vmul.u32.u64.compose %v369, %v368
  %v371 = vextract.low.u32 %v370
  %v372 = vextract.high.u32 %v370
  %v373 = vmul.u32.u64.compose %v369, %v364
  %v374 = vextract.low.u32 %v373
  %v375 = vextract.high.u32 %v373
  %v376 = vmul.u32 %v369, %v360
  %v377 = vadd.s32 %v372, %v374
  %vm378 = vc.u32 %v372, %v374
  %v379 = vadd.s32 %v375, 1
  %v380 = vsel %vm378, %v379, %v375
  %v381 = vadd.s32 %v376, %v380
  %v382 = vadd.s32 %v381, 536870912
  %v383 = vshrl.u32 %v382, 30
  %v384 = vshll.u32 %v383, 30
  %v385 = vsub.s32 %v381, %v384
  %vm386 = vcmp.lt.s32.totalorder %v385, 0
  %v387 = vsub.s32 0, %v385
  %v388 = vsel %vm386, %v387, %v385
  %v389 = vclz %v388
  %v390 = vsub.s32 %v389, 2
  %vm391 = vcmp.gt.s32.totalorder 0, %v390
  %v392 = vsel %vm391, 0, %v390
  %v393 = vsub.s32 32, %v392
  %v394 = vshll.u32 %v385, %v392
  %v395 = vshrl.u32 %v377, %v393
  %v396 = vor.u32 %v394, %v395
  %v397 = vsub.s32 4294967266, %v392
  %v398 = vadd.s32 %v397, 127
  %v399 = vshll.u32 %v398, 23
  %v400 = vor.u32 4788187, %v399
  %v401 = vand.u32 2147483647, %v400
  %v403 = vcvt.s32.f32 %v396
  %v404 = vmul.f32 %v403, %v401
  %v405 = vxor.u32 %v404, 2147483648
  %v406 = vsel %vm323, %v405, %v404
  %v407 = vsub.s32 4, %v383
  %v408 = vsel %vm323, %v407, %v383
  %v409 = vsel %vm322, %v11, %v406
  %v410 = vsel %vm322, 0, %v408
  %v411 = vcosq.f32.pop %v409
  %v412 = vsinq.f32.pop %v409
  %vm413 = vweird.f32 %v11
  %v414 = vand.u32 %v410, 3
  %vm415 = vcmp.lt.s32.totalorder %v414, 2
  %vm416 = vcmp.eq.s32.totalorder %v414, 0
  %v417 = vxor.u32 %v412, 2147483648
  %v418 = vsel %vm416, %v411, %v417
  %vm419 = vcmp.eq.s32.totalorder %v414, 2
  %v420 = vxor.u32 %v411, 2147483648
  %v421 = vsel %vm419, %v420, %v412
  %v422 = vsel %vm415, %v418, %v421
  %v423 = vsel %vm413, nan, %v422
  %s424 = sadd.s32 0, 4
  %s425 = smul.addr %s424, 8
  %s426 = scalar_lea.vmem %s0, %s425
  %v427 = vld [vmem:[%s426] sm:$0xff]
  %v428 = vld [vmem:[%s426 + $0x8] sm:$0xff]
  %v429 = vld [vmem:[%s426 + $0x10] sm:$0xff]
  %v430 = vld [vmem:[%s426 + $0x18] sm:$0xff]
  %v431 = vand.u32 2147483647, %v427
  %vm432 = vcmp.le.f32.partialorder %v431, 0.7853982
  %vm433 = vcmp.lt.s32.totalorder %v427, 0
  %v434 = vand.u32 %v427, 2139095040
  %v435 = vshrl.u32 %v434, 23
  %v436 = vsub.s32 %v435, 127
  %v437 = vand.u32 2147483647, %v427
  %v438 = vand.u32 %v437, 8388607
  %v439 = vor.u32 %v438, 8388608
  %v440 = vsub.s32 0, %v439
  %v441 = vadd.s32 %v436, 1
  %vm442 = vcmp.gt.s32.totalorder %v441, 0
  %v443 = vsel %vm442, %v441, 0
  %v444 = vshrl.u32 %v443, 5
  %v445 = vand.u32 %v443, 31
  %v446 = vsub.s32 32, %v445
  %v447 = vshrl.u32 683565275, %v446
  %v448 = vshll.u32 683565275, %v445
  %v449 = vshrl.u32 2475754826, %v446
  %v450 = vor.u32 %v448, %v449
  %v451 = vshll.u32 2475754826, %v445
  %v452 = vshrl.u32 2131351028, %v446
  %v453 = vor.u32 %v451, %v452
  %v454 = vshll.u32 2131351028, %v445
  %v455 = vshrl.u32 2102212464, %v446
  %v456 = vor.u32 %v454, %v455
  %v457 = vshll.u32 2102212464, %v445
  %v458 = vshrl.u32 920167782, %v446
  %v459 = vor.u32 %v457, %v458
  %v460 = vshll.u32 920167782, %v445
  %v461 = vshrl.u32 1326507024, %v446
  %v462 = vor.u32 %v460, %v461
  %vm463 = vcmp.lt.s32.totalorder %v444, 1
  %vm464 = vcmp.lt.s32.totalorder %v444, 2
  %vm465 = vcmp.lt.s32.totalorder %v444, 3
  %vm466 = vcmp.lt.s32.totalorder %v444, 4
  %v467 = vsel %vm463, %v447, %v450
  %v468 = vsel %vm466, %v456, 2102212464
  %v469 = vsel %vm465, %v453, %v468
  %v470 = vsel %vm464, %v467, %v469
  %v471 = vsel %vm463, %v450, %v453
  %v472 = vsel %vm466, %v459, 920167782
  %v473 = vsel %vm465, %v456, %v472
  %v474 = vsel %vm464, %v471, %v473
  %v475 = vsel %vm463, %v453, %v456
  %v476 = vsel %vm466, %v462, 1326507024
  %v477 = vsel %vm465, %v459, %v476
  %v478 = vsel %vm464, %v475, %v477
  %v479 = vshll.u32 %v439, 8
  %v480 = vmul.u32.u64.compose %v479, %v478
  %v481 = vextract.low.u32 %v480
  %v482 = vextract.high.u32 %v480
  %v483 = vmul.u32.u64.compose %v479, %v474
  %v484 = vextract.low.u32 %v483
  %v485 = vextract.high.u32 %v483
  %v486 = vmul.u32 %v479, %v470
  %v487 = vadd.s32 %v482, %v484
  %vm488 = vc.u32 %v482, %v484
  %v489 = vadd.s32 %v485, 1
  %v490 = vsel %vm488, %v489, %v485
  %v491 = vadd.s32 %v486, %v490
  %v492 = vadd.s32 %v491, 536870912
  %v493 = vshrl.u32 %v492, 30
  %v494 = vshll.u32 %v493, 30
  %v495 = vsub.s32 %v491, %v494
  %vm496 = vcmp.lt.s32.totalorder %v495, 0
  %v497 = vsub.s32 0, %v495
  %v498 = vsel %vm496, %v497, %v495
  %v499 = vclz %v498
  %v500 = vsub.s32 %v499, 2
  %vm501 = vcmp.gt.s32.totalorder 0, %v500
  %v502 = vsel %vm501, 0, %v500
  %v503 = vsub.s32 32, %v502
  %v504 = vshll.u32 %v495, %v502
  %v505 = vshrl.u32 %v487, %v503
  %v506 = vor.u32 %v504, %v505
  %v507 = vsub.s32 4294967266, %v502
  %v508 = vadd.s32 %v507, 127
  %v509 = vshll.u32 %v508, 23
  %v510 = vor.u32 4788187, %v509
  %v511 = vand.u32 2147483647, %v510
  %v513 = vcvt.s32.f32 %v506
  %v514 = vmul.f32 %v513, %v511
  %v515 = vxor.u32 %v514, 2147483648
  %v516 = vsel %vm433, %v515, %v514
  %v517 = vsub.s32 4, %v493
  %v518 = vsel %vm433, %v517, %v493
  %v519 = vsel %vm432, %v427, %v516
  %v520 = vsel %vm432, 0, %v518
  %v521 = vcosq.f32.pop %v519
  %v522 = vsinq.f32.pop %v519
  %vm523 = vweird.f32 %v427
  %v524 = vand.u32 %v520, 3
  %vm525 = vcmp.lt.s32.totalorder %v524, 2
  %vm526 = vcmp.eq.s32.totalorder %v524, 0
  %v527 = vxor.u32 %v522, 2147483648
  %v528 = vsel %vm526, %v521, %v527
  %vm529 = vcmp.eq.s32.totalorder %v524, 2
  %v530 = vxor.u32 %v521, 2147483648
  %v531 = vsel %vm529, %v530, %v522
  %v532 = vsel %vm525, %v528, %v531
  %v533 = vsel %vm523, nan, %v532
  %v534 = vand.u32 2147483647, %v428
  %vm535 = vcmp.le.f32.partialorder %v534, 0.7853982
  %vm536 = vcmp.lt.s32.totalorder %v428, 0
  %v537 = vand.u32 %v428, 2139095040
  %v538 = vshrl.u32 %v537, 23
  %v539 = vsub.s32 %v538, 127
  %v540 = vand.u32 2147483647, %v428
  %v541 = vand.u32 %v540, 8388607
  %v542 = vor.u32 %v541, 8388608
  %v543 = vsub.s32 0, %v542
  %v544 = vadd.s32 %v539, 1
  %vm545 = vcmp.gt.s32.totalorder %v544, 0
  %v546 = vsel %vm545, %v544, 0
  %v547 = vshrl.u32 %v546, 5
  %v548 = vand.u32 %v546, 31
  %v549 = vsub.s32 32, %v548
  %v550 = vshrl.u32 683565275, %v549
  %v551 = vshll.u32 683565275, %v548
  %v552 = vshrl.u32 2475754826, %v549
  %v553 = vor.u32 %v551, %v552
  %v554 = vshll.u32 2475754826, %v548
  %v555 = vshrl.u32 2131351028, %v549
  %v556 = vor.u32 %v554, %v555
  %v557 = vshll.u32 2131351028, %v548
  %v558 = vshrl.u32 2102212464, %v549
  %v559 = vor.u32 %v557, %v558
  %v560 = vshll.u32 2102212464, %v548
  %v561 = vshrl.u32 920167782, %v549
  %v562 = vor.u32 %v560, %v561
  %v563 = vshll.u32 920167782, %v548
  %v564 = vshrl.u32 1326507024, %v549
  %v565 = vor.u32 %v563, %v564
  %vm566 = vcmp.lt.s32.totalorder %v547, 1
  %vm567 = vcmp.lt.s32.totalorder %v547, 2
  %vm568 = vcmp.lt.s32.totalorder %v547, 3
  %vm569 = vcmp.lt.s32.totalorder %v547, 4
  %v570 = vsel %vm566, %v550, %v553
  %v571 = vsel %vm569, %v559, 2102212464
  %v572 = vsel %vm568, %v556, %v571
  %v573 = vsel %vm567, %v570, %v572
  %v574 = vsel %vm566, %v553, %v556
  %v575 = vsel %vm569, %v562, 920167782
  %v576 = vsel %vm568, %v559, %v575
  %v577 = vsel %vm567, %v574, %v576
  %v578 = vsel %vm566, %v556, %v559
  %v579 = vsel %vm569, %v565, 1326507024
  %v580 = vsel %vm568, %v562, %v579
  %v581 = vsel %vm567, %v578, %v580
  %v582 = vshll.u32 %v542, 8
  %v583 = vmul.u32.u64.compose %v582, %v581
  %v584 = vextract.low.u32 %v583
  %v585 = vextract.high.u32 %v583
  %v586 = vmul.u32.u64.compose %v582, %v577
  %v587 = vextract.low.u32 %v586
  %v588 = vextract.high.u32 %v586
  %v589 = vmul.u32 %v582, %v573
  %v590 = vadd.s32 %v585, %v587
  %vm591 = vc.u32 %v585, %v587
  %v592 = vadd.s32 %v588, 1
  %v593 = vsel %vm591, %v592, %v588
  %v594 = vadd.s32 %v589, %v593
  %v595 = vadd.s32 %v594, 536870912
  %v596 = vshrl.u32 %v595, 30
  %v597 = vshll.u32 %v596, 30
  %v598 = vsub.s32 %v594, %v597
  %vm599 = vcmp.lt.s32.totalorder %v598, 0
  %v600 = vsub.s32 0, %v598
  %v601 = vsel %vm599, %v600, %v598
  %v602 = vclz %v601
  %v603 = vsub.s32 %v602, 2
  %vm604 = vcmp.gt.s32.totalorder 0, %v603
  %v605 = vsel %vm604, 0, %v603
  %v606 = vsub.s32 32, %v605
  %v607 = vshll.u32 %v598, %v605
  %v608 = vshrl.u32 %v590, %v606
  %v609 = vor.u32 %v607, %v608
  %v610 = vsub.s32 4294967266, %v605
  %v611 = vadd.s32 %v610, 127
  %v612 = vshll.u32 %v611, 23
  %v613 = vor.u32 4788187, %v612
  %v614 = vand.u32 2147483647, %v613
  %v616 = vcvt.s32.f32 %v609
  %v617 = vmul.f32 %v616, %v614
  %v618 = vxor.u32 %v617, 2147483648
  %v619 = vsel %vm536, %v618, %v617
  %v620 = vsub.s32 4, %v596
  %v621 = vsel %vm536, %v620, %v596
  %v622 = vsel %vm535, %v428, %v619
  %v623 = vsel %vm535, 0, %v621
  %v624 = vcosq.f32.pop %v622
  %v625 = vsinq.f32.pop %v622
  %vm626 = vweird.f32 %v428
  %v627 = vand.u32 %v623, 3
  %vm628 = vcmp.lt.s32.totalorder %v627, 2
  %vm629 = vcmp.eq.s32.totalorder %v627, 0
  %v630 = vxor.u32 %v625, 2147483648
  %v631 = vsel %vm629, %v624, %v630
  %vm632 = vcmp.eq.s32.totalorder %v627, 2
  %v633 = vxor.u32 %v624, 2147483648
  %v634 = vsel %vm632, %v633, %v625
  %v635 = vsel %vm628, %v631, %v634
  %v636 = vsel %vm626, nan, %v635
  %v637 = vand.u32 2147483647, %v429
  %vm638 = vcmp.le.f32.partialorder %v637, 0.7853982
  %vm639 = vcmp.lt.s32.totalorder %v429, 0
  %v640 = vand.u32 %v429, 2139095040
  %v641 = vshrl.u32 %v640, 23
  %v642 = vsub.s32 %v641, 127
  %v643 = vand.u32 2147483647, %v429
  %v644 = vand.u32 %v643, 8388607
  %v645 = vor.u32 %v644, 8388608
  %v646 = vsub.s32 0, %v645
  %v647 = vadd.s32 %v642, 1
  %vm648 = vcmp.gt.s32.totalorder %v647, 0
  %v649 = vsel %vm648, %v647, 0
  %v650 = vshrl.u32 %v649, 5
  %v651 = vand.u32 %v649, 31
  %v652 = vsub.s32 32, %v651
  %v653 = vshrl.u32 683565275, %v652
  %v654 = vshll.u32 683565275, %v651
  %v655 = vshrl.u32 2475754826, %v652
  %v656 = vor.u32 %v654, %v655
  %v657 = vshll.u32 2475754826, %v651
  %v658 = vshrl.u32 2131351028, %v652
  %v659 = vor.u32 %v657, %v658
  %v660 = vshll.u32 2131351028, %v651
  %v661 = vshrl.u32 2102212464, %v652
  %v662 = vor.u32 %v660, %v661
  %v663 = vshll.u32 2102212464, %v651
  %v664 = vshrl.u32 920167782, %v652
  %v665 = vor.u32 %v663, %v664
  %v666 = vshll.u32 920167782, %v651
  %v667 = vshrl.u32 1326507024, %v652
  %v668 = vor.u32 %v666, %v667
  %vm669 = vcmp.lt.s32.totalorder %v650, 1
  %vm670 = vcmp.lt.s32.totalorder %v650, 2
  %vm671 = vcmp.lt.s32.totalorder %v650, 3
  %vm672 = vcmp.lt.s32.totalorder %v650, 4
  %v673 = vsel %vm669, %v653, %v656
  %v674 = vsel %vm672, %v662, 2102212464
  %v675 = vsel %vm671, %v659, %v674
  %v676 = vsel %vm670, %v673, %v675
  %v677 = vsel %vm669, %v656, %v659
  %v678 = vsel %vm672, %v665, 920167782
  %v679 = vsel %vm671, %v662, %v678
  %v680 = vsel %vm670, %v677, %v679
  %v681 = vsel %vm669, %v659, %v662
  %v682 = vsel %vm672, %v668, 1326507024
  %v683 = vsel %vm671, %v665, %v682
  %v684 = vsel %vm670, %v681, %v683
  %v685 = vshll.u32 %v645, 8
  %v686 = vmul.u32.u64.compose %v685, %v684
  %v687 = vextract.low.u32 %v686
  %v688 = vextract.high.u32 %v686
  %v689 = vmul.u32.u64.compose %v685, %v680
  %v690 = vextract.low.u32 %v689
  %v691 = vextract.high.u32 %v689
  %v692 = vmul.u32 %v685, %v676
  %v693 = vadd.s32 %v688, %v690
  %vm694 = vc.u32 %v688, %v690
  %v695 = vadd.s32 %v691, 1
  %v696 = vsel %vm694, %v695, %v691
  %v697 = vadd.s32 %v692, %v696
  %v698 = vadd.s32 %v697, 536870912
  %v699 = vshrl.u32 %v698, 30
  %v700 = vshll.u32 %v699, 30
  %v701 = vsub.s32 %v697, %v700
  %vm702 = vcmp.lt.s32.totalorder %v701, 0
  %v703 = vsub.s32 0, %v701
  %v704 = vsel %vm702, %v703, %v701
  %v705 = vclz %v704
  %v706 = vsub.s32 %v705, 2
  %vm707 = vcmp.gt.s32.totalorder 0, %v706
  %v708 = vsel %vm707, 0, %v706
  %v709 = vsub.s32 32, %v708
  %v710 = vshll.u32 %v701, %v708
  %v711 = vshrl.u32 %v693, %v709
  %v712 = vor.u32 %v710, %v711
  %v713 = vsub.s32 4294967266, %v708
  %v714 = vadd.s32 %v713, 127
  %v715 = vshll.u32 %v714, 23
  %v716 = vor.u32 4788187, %v715
  %v717 = vand.u32 2147483647, %v716
  %v719 = vcvt.s32.f32 %v712
  %v720 = vmul.f32 %v719, %v717
  %v721 = vxor.u32 %v720, 2147483648
  %v722 = vsel %vm639, %v721, %v720
  %v723 = vsub.s32 4, %v699
  %v724 = vsel %vm639, %v723, %v699
  %v725 = vsel %vm638, %v429, %v722
  %v726 = vsel %vm638, 0, %v724
  %v727 = vcosq.f32.pop %v725
  %v728 = vsinq.f32.pop %v725
  %vm729 = vweird.f32 %v429
  %v730 = vand.u32 %v726, 3
  %vm731 = vcmp.lt.s32.totalorder %v730, 2
  %vm732 = vcmp.eq.s32.totalorder %v730, 0
  %v733 = vxor.u32 %v728, 2147483648
  %v734 = vsel %vm732, %v727, %v733
  %vm735 = vcmp.eq.s32.totalorder %v730, 2
  %v736 = vxor.u32 %v727, 2147483648
  %v737 = vsel %vm735, %v736, %v728
  %v738 = vsel %vm731, %v734, %v737
  %v739 = vsel %vm729, nan, %v738
  %v740 = vand.u32 2147483647, %v430
  %vm741 = vcmp.le.f32.partialorder %v740, 0.7853982
  %vm742 = vcmp.lt.s32.totalorder %v430, 0
  %v743 = vand.u32 %v430, 2139095040
  %v744 = vshrl.u32 %v743, 23
  %v745 = vsub.s32 %v744, 127
  %v746 = vand.u32 2147483647, %v430
  %v747 = vand.u32 %v746, 8388607
  %v748 = vor.u32 %v747, 8388608
  %v749 = vsub.s32 0, %v748
  %v750 = vadd.s32 %v745, 1
  %vm751 = vcmp.gt.s32.totalorder %v750, 0
  %v752 = vsel %vm751, %v750, 0
  %v753 = vshrl.u32 %v752, 5
  %v754 = vand.u32 %v752, 31
  %v755 = vsub.s32 32, %v754
  %v756 = vshrl.u32 683565275, %v755
  %v757 = vshll.u32 683565275, %v754
  %v758 = vshrl.u32 2475754826, %v755
  %v759 = vor.u32 %v757, %v758
  %v760 = vshll.u32 2475754826, %v754
  %v761 = vshrl.u32 2131351028, %v755
  %v762 = vor.u32 %v760, %v761
  %v763 = vshll.u32 2131351028, %v754
  %v764 = vshrl.u32 2102212464, %v755
  %v765 = vor.u32 %v763, %v764
  %v766 = vshll.u32 2102212464, %v754
  %v767 = vshrl.u32 920167782, %v755
  %v768 = vor.u32 %v766, %v767
  %v769 = vshll.u32 920167782, %v754
  %v770 = vshrl.u32 1326507024, %v755
  %v771 = vor.u32 %v769, %v770
  %vm772 = vcmp.lt.s32.totalorder %v753, 1
  %vm773 = vcmp.lt.s32.totalorder %v753, 2
  %vm774 = vcmp.lt.s32.totalorder %v753, 3
  %vm775 = vcmp.lt.s32.totalorder %v753, 4
  %v776 = vsel %vm772, %v756, %v759
  %v777 = vsel %vm775, %v765, 2102212464
  %v778 = vsel %vm774, %v762, %v777
  %v779 = vsel %vm773, %v776, %v778
  %v780 = vsel %vm772, %v759, %v762
  %v781 = vsel %vm775, %v768, 920167782
  %v782 = vsel %vm774, %v765, %v781
  %v783 = vsel %vm773, %v780, %v782
  %v784 = vsel %vm772, %v762, %v765
  %v785 = vsel %vm775, %v771, 1326507024
  %v786 = vsel %vm774, %v768, %v785
  %v787 = vsel %vm773, %v784, %v786
  %v788 = vshll.u32 %v748, 8
  %v789 = vmul.u32.u64.compose %v788, %v787
  %v790 = vextract.low.u32 %v789
  %v791 = vextract.high.u32 %v789
  %v792 = vmul.u32.u64.compose %v788, %v783
  %v793 = vextract.low.u32 %v792
  %v794 = vextract.high.u32 %v792
  %v795 = vmul.u32 %v788, %v779
  %v796 = vadd.s32 %v791, %v793
  %vm797 = vc.u32 %v791, %v793
  %v798 = vadd.s32 %v794, 1
  %v799 = vsel %vm797, %v798, %v794
  %v800 = vadd.s32 %v795, %v799
  %v801 = vadd.s32 %v800, 536870912
  %v802 = vshrl.u32 %v801, 30
  %v803 = vshll.u32 %v802, 30
  %v804 = vsub.s32 %v800, %v803
  %vm805 = vcmp.lt.s32.totalorder %v804, 0
  %v806 = vsub.s32 0, %v804
  %v807 = vsel %vm805, %v806, %v804
  %v808 = vclz %v807
  %v809 = vsub.s32 %v808, 2
  %vm810 = vcmp.gt.s32.totalorder 0, %v809
  %v811 = vsel %vm810, 0, %v809
  %v812 = vsub.s32 32, %v811
  %v813 = vshll.u32 %v804, %v811
  %v814 = vshrl.u32 %v796, %v812
  %v815 = vor.u32 %v813, %v814
  %v816 = vsub.s32 4294967266, %v811
  %v817 = vadd.s32 %v816, 127
  %v818 = vshll.u32 %v817, 23
  %v819 = vor.u32 4788187, %v818
  %v820 = vand.u32 2147483647, %v819
  %v822 = vcvt.s32.f32 %v815
  %v823 = vmul.f32 %v822, %v820
  %v824 = vxor.u32 %v823, 2147483648
  %v825 = vsel %vm742, %v824, %v823
  %v826 = vsub.s32 4, %v802
  %v827 = vsel %vm742, %v826, %v802
  %v828 = vsel %vm741, %v430, %v825
  %v829 = vsel %vm741, 0, %v827
  %v830 = vcosq.f32.pop %v828
  %v831 = vsinq.f32.pop %v828
  %vm832 = vweird.f32 %v430
  %v833 = vand.u32 %v829, 3
  %vm834 = vcmp.lt.s32.totalorder %v833, 2
  %vm835 = vcmp.eq.s32.totalorder %v833, 0
  %v836 = vxor.u32 %v831, 2147483648
  %v837 = vsel %vm835, %v830, %v836
  %vm838 = vcmp.eq.s32.totalorder %v833, 2
  %v839 = vxor.u32 %v830, 2147483648
  %v840 = vsel %vm838, %v839, %v831
  %v841 = vsel %vm834, %v837, %v840
  %v842 = vsel %vm832, nan, %v841
  %v843 = vmul.f32 %v114, %v533
  %v844 = vmul.f32 %v217, %v636
  %v845 = vmul.f32 %v320, %v739
  %v846 = vmul.f32 %v423, %v842
  %v847 = vmax.f32 %v843, %v845
  %v848 = vrot.slane %v847, 4
  %v849 = vmax.f32 %v847, %v848
  %v850 = vrot.slane %v849, 2
  %v851 = vmax.f32 %v849, %v850
  %v852 = vrot.slane %v851, 1
  %v853 = vmax.f32 %v851, %v852
  %v854 = vmax.f32 %v844, %v846
  %v855 = vrot.slane %v854, 4
  %v856 = vmax.f32 %v854, %v855
  %v857 = vrot.slane %v856, 2
  %v858 = vmax.f32 %v856, %v857
  %v859 = vrot.slane %v858, 1
  %v860 = vmax.f32 %v858, %v859
  %v861 = vmax.f32 %v853, 0.0
  %v862 = vmax.f32 %v860, 0.0
  %v865 = vcombine.low %v861, %v862
  %v867 = vunpack.c.l.s4 1966171168
  %v868 = vunpack.c.0.s8 %v867
  %v869 = vlaneseq
  %v870 = vshrl.u32 %v869, 7
  %v871 = vsub.s32 %v868, %v870
  %v872 = vrot.slane %v865, %v871
  %v874 = vunpack.c.l.s4 1966171168
  %v875 = vunpack.c.0.s8 %v874
  %v876 = vlaneseq
  %v877 = vshrl.u32 %v876, 7
  %v878 = vsub.s32 %v875, %v877
  %v879 = vrot.slane %v872, %v878
  %v881 = vlaneseq
  %vm882 = vcmp.ge.s32.totalorder %v881, 0
  %vm883 = vcmp.lt.s32.totalorder %v881, 256
  %vm884 = vmand %vm882, %vm883
  %s885 = scalar_lea.vmem %s1, 1
  %886 = vst.msk [vmem:[%s885] ss:$8 sm:$0x3] %vm884, %v879
  %887 = vst.msk [vmem:[%s885] ss:$8 sm:$0x0] %vm884, %v879
  %s888 = sadd.s32 0, 8
  %s889 = smul.addr %s888, 8
  %s890 = scalar_lea.vmem %s0, %s889
  %v891 = vld [vmem:[%s890] sm:$0xff]
  %v892 = vld [vmem:[%s890 + $0x8] sm:$0xff]
  %v893 = vld [vmem:[%s890 + $0x10] sm:$0xff]
  %v894 = vld [vmem:[%s890 + $0x18] sm:$0xff]
  %v895 = vand.u32 2147483647, %v891
  %vm896 = vcmp.le.f32.partialorder %v895, 0.7853982
  %vm897 = vcmp.lt.s32.totalorder %v891, 0
  %v898 = vand.u32 %v891, 2139095040
  %v899 = vshrl.u32 %v898, 23
  %v900 = vsub.s32 %v899, 127
  %v901 = vand.u32 2147483647, %v891
  %v902 = vand.u32 %v901, 8388607
  %v903 = vor.u32 %v902, 8388608
  %v904 = vsub.s32 0, %v903
  %v905 = vadd.s32 %v900, 1
  %vm906 = vcmp.gt.s32.totalorder %v905, 0
  %v907 = vsel %vm906, %v905, 0
  %v908 = vshrl.u32 %v907, 5
  %v909 = vand.u32 %v907, 31
  %v910 = vsub.s32 32, %v909
  %v911 = vshrl.u32 683565275, %v910
  %v912 = vshll.u32 683565275, %v909
  %v913 = vshrl.u32 2475754826, %v910
  %v914 = vor.u32 %v912, %v913
  %v915 = vshll.u32 2475754826, %v909
  %v916 = vshrl.u32 2131351028, %v910
  %v917 = vor.u32 %v915, %v916
  %v918 = vshll.u32 2131351028, %v909
  %v919 = vshrl.u32 2102212464, %v910
  %v920 = vor.u32 %v918, %v919
  %v921 = vshll.u32 2102212464, %v909
  %v922 = vshrl.u32 920167782, %v910
  %v923 = vor.u32 %v921, %v922
  %v924 = vshll.u32 920167782, %v909
  %v925 = vshrl.u32 1326507024, %v910
  %v926 = vor.u32 %v924, %v925
  %vm927 = vcmp.lt.s32.totalorder %v908, 1
  %vm928 = vcmp.lt.s32.totalorder %v908, 2
  %vm929 = vcmp.lt.s32.totalorder %v908, 3
  %vm930 = vcmp.lt.s32.totalorder %v908, 4
  %v931 = vsel %vm927, %v911, %v914
  %v932 = vsel %vm930, %v920, 2102212464
  %v933 = vsel %vm929, %v917, %v932
  %v934 = vsel %vm928, %v931, %v933
  %v935 = vsel %vm927, %v914, %v917
  %v936 = vsel %vm930, %v923, 920167782
  %v937 = vsel %vm929, %v920, %v936
  %v938 = vsel %vm928, %v935, %v937
  %v939 = vsel %vm927, %v917, %v920
  %v940 = vsel %vm930, %v926, 1326507024
  %v941 = vsel %vm929, %v923, %v940
  %v942 = vsel %vm928, %v939, %v941
  %v943 = vshll.u32 %v903, 8
  %v944 = vmul.u32.u64.compose %v943, %v942
  %v945 = vextract.low.u32 %v944
  %v946 = vextract.high.u32 %v944
  %v947 = vmul.u32.u64.compose %v943, %v938
  %v948 = vextract.low.u32 %v947
  %v949 = vextract.high.u32 %v947
  %v950 = vmul.u32 %v943, %v934
  %v951 = vadd.s32 %v946, %v948
  %vm952 = vc.u32 %v946, %v948
  %v953 = vadd.s32 %v949, 1
  %v954 = vsel %vm952, %v953, %v949
  %v955 = vadd.s32 %v950, %v954
  %v956 = vadd.s32 %v955, 536870912
  %v957 = vshrl.u32 %v956, 30
  %v958 = vshll.u32 %v957, 30
  %v959 = vsub.s32 %v955, %v958
  %vm960 = vcmp.lt.s32.totalorder %v959, 0
  %v961 = vsub.s32 0, %v959
  %v962 = vsel %vm960, %v961, %v959
  %v963 = vclz %v962
  %v964 = vsub.s32 %v963, 2
  %vm965 = vcmp.gt.s32.totalorder 0, %v964
  %v966 = vsel %vm965, 0, %v964
  %v967 = vsub.s32 32, %v966
  %v968 = vshll.u32 %v959, %v966
  %v969 = vshrl.u32 %v951, %v967
  %v970 = vor.u32 %v968, %v969
  %v971 = vsub.s32 4294967266, %v966
  %v972 = vadd.s32 %v971, 127
  %v973 = vshll.u32 %v972, 23
  %v974 = vor.u32 4788187, %v973
  %v975 = vand.u32 2147483647, %v974
  %v977 = vcvt.s32.f32 %v970
  %v978 = vmul.f32 %v977, %v975
  %v979 = vxor.u32 %v978, 2147483648
  %v980 = vsel %vm897, %v979, %v978
  %v981 = vsub.s32 4, %v957
  %v982 = vsel %vm897, %v981, %v957
  %v983 = vsel %vm896, %v891, %v980
  %v984 = vsel %vm896, 0, %v982
  %v985 = vcosq.f32.pop %v983
  %v986 = vsinq.f32.pop %v983
  %vm987 = vweird.f32 %v891
  %v988 = vand.u32 %v984, 3
  %vm989 = vcmp.lt.s32.totalorder %v988, 2
  %vm990 = vcmp.eq.s32.totalorder %v988, 0
  %v991 = vxor.u32 %v986, 2147483648
  %v992 = vsel %vm990, %v985, %v991
  %vm993 = vcmp.eq.s32.totalorder %v988, 2
  %v994 = vxor.u32 %v985, 2147483648
  %v995 = vsel %vm993, %v994, %v986
  %v996 = vsel %vm989, %v992, %v995
  %v997 = vsel %vm987, nan, %v996
  %v998 = vand.u32 2147483647, %v892
  %vm999 = vcmp.le.f32.partialorder %v998, 0.7853982
  %vm1000 = vcmp.lt.s32.totalorder %v892, 0
  %v1001 = vand.u32 %v892, 2139095040
  %v1002 = vshrl.u32 %v1001, 23
  %v1003 = vsub.s32 %v1002, 127
  %v1004 = vand.u32 2147483647, %v892
  %v1005 = vand.u32 %v1004, 8388607
  %v1006 = vor.u32 %v1005, 8388608
  %v1007 = vsub.s32 0, %v1006
  %v1008 = vadd.s32 %v1003, 1
  %vm1009 = vcmp.gt.s32.totalorder %v1008, 0
  %v1010 = vsel %vm1009, %v1008, 0
  %v1011 = vshrl.u32 %v1010, 5
  %v1012 = vand.u32 %v1010, 31
  %v1013 = vsub.s32 32, %v1012
  %v1014 = vshrl.u32 683565275, %v1013
  %v1015 = vshll.u32 683565275, %v1012
  %v1016 = vshrl.u32 2475754826, %v1013
  %v1017 = vor.u32 %v1015, %v1016
  %v1018 = vshll.u32 2475754826, %v1012
  %v1019 = vshrl.u32 2131351028, %v1013
  %v1020 = vor.u32 %v1018, %v1019
  %v1021 = vshll.u32 2131351028, %v1012
  %v1022 = vshrl.u32 2102212464, %v1013
  %v1023 = vor.u32 %v1021, %v1022
  %v1024 = vshll.u32 2102212464, %v1012
  %v1025 = vshrl.u32 920167782, %v1013
  %v1026 = vor.u32 %v1024, %v1025
  %v1027 = vshll.u32 920167782, %v1012
  %v1028 = vshrl.u32 1326507024, %v1013
  %v1029 = vor.u32 %v1027, %v1028
  %vm1030 = vcmp.lt.s32.totalorder %v1011, 1
  %vm1031 = vcmp.lt.s32.totalorder %v1011, 2
  %vm1032 = vcmp.lt.s32.totalorder %v1011, 3
  %vm1033 = vcmp.lt.s32.totalorder %v1011, 4
  %v1034 = vsel %vm1030, %v1014, %v1017
  %v1035 = vsel %vm1033, %v1023, 2102212464
  %v1036 = vsel %vm1032, %v1020, %v1035
  %v1037 = vsel %vm1031, %v1034, %v1036
  %v1038 = vsel %vm1030, %v1017, %v1020
  %v1039 = vsel %vm1033, %v1026, 920167782
  %v1040 = vsel %vm1032, %v1023, %v1039
  %v1041 = vsel %vm1031, %v1038, %v1040
  %v1042 = vsel %vm1030, %v1020, %v1023
  %v1043 = vsel %vm1033, %v1029, 1326507024
  %v1044 = vsel %vm1032, %v1026, %v1043
  %v1045 = vsel %vm1031, %v1042, %v1044
  %v1046 = vshll.u32 %v1006, 8
  %v1047 = vmul.u32.u64.compose %v1046, %v1045
  %v1048 = vextract.low.u32 %v1047
  %v1049 = vextract.high.u32 %v1047
  %v1050 = vmul.u32.u64.compose %v1046, %v1041
  %v1051 = vextract.low.u32 %v1050
  %v1052 = vextract.high.u32 %v1050
  %v1053 = vmul.u32 %v1046, %v1037
  %v1054 = vadd.s32 %v1049, %v1051
  %vm1055 = vc.u32 %v1049, %v1051
  %v1056 = vadd.s32 %v1052, 1
  %v1057 = vsel %vm1055, %v1056, %v1052
  %v1058 = vadd.s32 %v1053, %v1057
  %v1059 = vadd.s32 %v1058, 536870912
  %v1060 = vshrl.u32 %v1059, 30
  %v1061 = vshll.u32 %v1060, 30
  %v1062 = vsub.s32 %v1058, %v1061
  %vm1063 = vcmp.lt.s32.totalorder %v1062, 0
  %v1064 = vsub.s32 0, %v1062
  %v1065 = vsel %vm1063, %v1064, %v1062
  %v1066 = vclz %v1065
  %v1067 = vsub.s32 %v1066, 2
  %vm1068 = vcmp.gt.s32.totalorder 0, %v1067
  %v1069 = vsel %vm1068, 0, %v1067
  %v1070 = vsub.s32 32, %v1069
  %v1071 = vshll.u32 %v1062, %v1069
  %v1072 = vshrl.u32 %v1054, %v1070
  %v1073 = vor.u32 %v1071, %v1072
  %v1074 = vsub.s32 4294967266, %v1069
  %v1075 = vadd.s32 %v1074, 127
  %v1076 = vshll.u32 %v1075, 23
  %v1077 = vor.u32 4788187, %v1076
  %v1078 = vand.u32 2147483647, %v1077
  %v1080 = vcvt.s32.f32 %v1073
  %v1081 = vmul.f32 %v1080, %v1078
  %v1082 = vxor.u32 %v1081, 2147483648
  %v1083 = vsel %vm1000, %v1082, %v1081
  %v1084 = vsub.s32 4, %v1060
  %v1085 = vsel %vm1000, %v1084, %v1060
  %v1086 = vsel %vm999, %v892, %v1083
  %v1087 = vsel %vm999, 0, %v1085
  %v1088 = vcosq.f32.pop %v1086
  %v1089 = vsinq.f32.pop %v1086
  %vm1090 = vweird.f32 %v892
  %v1091 = vand.u32 %v1087, 3
  %vm1092 = vcmp.lt.s32.totalorder %v1091, 2
  %vm1093 = vcmp.eq.s32.totalorder %v1091, 0
  %v1094 = vxor.u32 %v1089, 2147483648
  %v1095 = vsel %vm1093, %v1088, %v1094
  %vm1096 = vcmp.eq.s32.totalorder %v1091, 2
  %v1097 = vxor.u32 %v1088, 2147483648
  %v1098 = vsel %vm1096, %v1097, %v1089
  %v1099 = vsel %vm1092, %v1095, %v1098
  %v1100 = vsel %vm1090, nan, %v1099
  %v1101 = vand.u32 2147483647, %v893
  %vm1102 = vcmp.le.f32.partialorder %v1101, 0.7853982
  %vm1103 = vcmp.lt.s32.totalorder %v893, 0
  %v1104 = vand.u32 %v893, 2139095040
  %v1105 = vshrl.u32 %v1104, 23
  %v1106 = vsub.s32 %v1105, 127
  %v1107 = vand.u32 2147483647, %v893
  %v1108 = vand.u32 %v1107, 8388607
  %v1109 = vor.u32 %v1108, 8388608
  %v1110 = vsub.s32 0, %v1109
  %v1111 = vadd.s32 %v1106, 1
  %vm1112 = vcmp.gt.s32.totalorder %v1111, 0
  %v1113 = vsel %vm1112, %v1111, 0
  %v1114 = vshrl.u32 %v1113, 5
  %v1115 = vand.u32 %v1113, 31
  %v1116 = vsub.s32 32, %v1115
  %v1117 = vshrl.u32 683565275, %v1116
  %v1118 = vshll.u32 683565275, %v1115
  %v1119 = vshrl.u32 2475754826, %v1116
  %v1120 = vor.u32 %v1118, %v1119
  %v1121 = vshll.u32 2475754826, %v1115
  %v1122 = vshrl.u32 2131351028, %v1116
  %v1123 = vor.u32 %v1121, %v1122
  %v1124 = vshll.u32 2131351028, %v1115
  %v1125 = vshrl.u32 2102212464, %v1116
  %v1126 = vor.u32 %v1124, %v1125
  %v1127 = vshll.u32 2102212464, %v1115
  %v1128 = vshrl.u32 920167782, %v1116
  %v1129 = vor.u32 %v1127, %v1128
  %v1130 = vshll.u32 920167782, %v1115
  %v1131 = vshrl.u32 1326507024, %v1116
  %v1132 = vor.u32 %v1130, %v1131
  %vm1133 = vcmp.lt.s32.totalorder %v1114, 1
  %vm1134 = vcmp.lt.s32.totalorder %v1114, 2
  %vm1135 = vcmp.lt.s32.totalorder %v1114, 3
  %vm1136 = vcmp.lt.s32.totalorder %v1114, 4
  %v1137 = vsel %vm1133, %v1117, %v1120
  %v1138 = vsel %vm1136, %v1126, 2102212464
  %v1139 = vsel %vm1135, %v1123, %v1138
  %v1140 = vsel %vm1134, %v1137, %v1139
  %v1141 = vsel %vm1133, %v1120, %v1123
  %v1142 = vsel %vm1136, %v1129, 920167782
  %v1143 = vsel %vm1135, %v1126, %v1142
  %v1144 = vsel %vm1134, %v1141, %v1143
  %v1145 = vsel %vm1133, %v1123, %v1126
  %v1146 = vsel %vm1136, %v1132, 1326507024
  %v1147 = vsel %vm1135, %v1129, %v1146
  %v1148 = vsel %vm1134, %v1145, %v1147
  %v1149 = vshll.u32 %v1109, 8
  %v1150 = vmul.u32.u64.compose %v1149, %v1148
  %v1151 = vextract.low.u32 %v1150
  %v1152 = vextract.high.u32 %v1150
  %v1153 = vmul.u32.u64.compose %v1149, %v1144
  %v1154 = vextract.low.u32 %v1153
  %v1155 = vextract.high.u32 %v1153
  %v1156 = vmul.u32 %v1149, %v1140
  %v1157 = vadd.s32 %v1152, %v1154
  %vm1158 = vc.u32 %v1152, %v1154
  %v1159 = vadd.s32 %v1155, 1
  %v1160 = vsel %vm1158, %v1159, %v1155
  %v1161 = vadd.s32 %v1156, %v1160
  %v1162 = vadd.s32 %v1161, 536870912
  %v1163 = vshrl.u32 %v1162, 30
  %v1164 = vshll.u32 %v1163, 30
  %v1165 = vsub.s32 %v1161, %v1164
  %vm1166 = vcmp.lt.s32.totalorder %v1165, 0
  %v1167 = vsub.s32 0, %v1165
  %v1168 = vsel %vm1166, %v1167, %v1165
  %v1169 = vclz %v1168
  %v1170 = vsub.s32 %v1169, 2
  %vm1171 = vcmp.gt.s32.totalorder 0, %v1170
  %v1172 = vsel %vm1171, 0, %v1170
  %v1173 = vsub.s32 32, %v1172
  %v1174 = vshll.u32 %v1165, %v1172
  %v1175 = vshrl.u32 %v1157, %v1173
  %v1176 = vor.u32 %v1174, %v1175
  %v1177 = vsub.s32 4294967266, %v1172
  %v1178 = vadd.s32 %v1177, 127
  %v1179 = vshll.u32 %v1178, 23
  %v1180 = vor.u32 4788187, %v1179
  %v1181 = vand.u32 2147483647, %v1180
  %v1183 = vcvt.s32.f32 %v1176
  %v1184 = vmul.f32 %v1183, %v1181
  %v1185 = vxor.u32 %v1184, 2147483648
  %v1186 = vsel %vm1103, %v1185, %v1184
  %v1187 = vsub.s32 4, %v1163
  %v1188 = vsel %vm1103, %v1187, %v1163
  %v1189 = vsel %vm1102, %v893, %v1186
  %v1190 = vsel %vm1102, 0, %v1188
  %v1191 = vcosq.f32.pop %v1189
  %v1192 = vsinq.f32.pop %v1189
  %vm1193 = vweird.f32 %v893
  %v1194 = vand.u32 %v1190, 3
  %vm1195 = vcmp.lt.s32.totalorder %v1194, 2
  %vm1196 = vcmp.eq.s32.totalorder %v1194, 0
  %v1197 = vxor.u32 %v1192, 2147483648
  %v1198 = vsel %vm1196, %v1191, %v1197
  %vm1199 = vcmp.eq.s32.totalorder %v1194, 2
  %v1200 = vxor.u32 %v1191, 2147483648
  %v1201 = vsel %vm1199, %v1200, %v1192
  %v1202 = vsel %vm1195, %v1198, %v1201
  %v1203 = vsel %vm1193, nan, %v1202
  %v1204 = vand.u32 2147483647, %v894
  %vm1205 = vcmp.le.f32.partialorder %v1204, 0.7853982
  %vm1206 = vcmp.lt.s32.totalorder %v894, 0
  %v1207 = vand.u32 %v894, 2139095040
  %v1208 = vshrl.u32 %v1207, 23
  %v1209 = vsub.s32 %v1208, 127
  %v1210 = vand.u32 2147483647, %v894
  %v1211 = vand.u32 %v1210, 8388607
  %v1212 = vor.u32 %v1211, 8388608
  %v1213 = vsub.s32 0, %v1212
  %v1214 = vadd.s32 %v1209, 1
  %vm1215 = vcmp.gt.s32.totalorder %v1214, 0
  %v1216 = vsel %vm1215, %v1214, 0
  %v1217 = vshrl.u32 %v1216, 5
  %v1218 = vand.u32 %v1216, 31
  %v1219 = vsub.s32 32, %v1218
  %v1220 = vshrl.u32 683565275, %v1219
  %v1221 = vshll.u32 683565275, %v1218
  %v1222 = vshrl.u32 2475754826, %v1219
  %v1223 = vor.u32 %v1221, %v1222
  %v1224 = vshll.u32 2475754826, %v1218
  %v1225 = vshrl.u32 2131351028, %v1219
  %v1226 = vor.u32 %v1224, %v1225
  %v1227 = vshll.u32 2131351028, %v1218
  %v1228 = vshrl.u32 2102212464, %v1219
  %v1229 = vor.u32 %v1227, %v1228
  %v1230 = vshll.u32 2102212464, %v1218
  %v1231 = vshrl.u32 920167782, %v1219
  %v1232 = vor.u32 %v1230, %v1231
  %v1233 = vshll.u32 920167782, %v1218
  %v1234 = vshrl.u32 1326507024, %v1219
  %v1235 = vor.u32 %v1233, %v1234
  %vm1236 = vcmp.lt.s32.totalorder %v1217, 1
  %vm1237 = vcmp.lt.s32.totalorder %v1217, 2
  %vm1238 = vcmp.lt.s32.totalorder %v1217, 3
  %vm1239 = vcmp.lt.s32.totalorder %v1217, 4
  %v1240 = vsel %vm1236, %v1220, %v1223
  %v1241 = vsel %vm1239, %v1229, 2102212464
  %v1242 = vsel %vm1238, %v1226, %v1241
  %v1243 = vsel %vm1237, %v1240, %v1242
  %v1244 = vsel %vm1236, %v1223, %v1226
  %v1245 = vsel %vm1239, %v1232, 920167782
  %v1246 = vsel %vm1238, %v1229, %v1245
  %v1247 = vsel %vm1237, %v1244, %v1246
  %v1248 = vsel %vm1236, %v1226, %v1229
  %v1249 = vsel %vm1239, %v1235, 1326507024
  %v1250 = vsel %vm1238, %v1232, %v1249
  %v1251 = vsel %vm1237, %v1248, %v1250
  %v1252 = vshll.u32 %v1212, 8
  %v1253 = vmul.u32.u64.compose %v1252, %v1251
  %v1254 = vextract.low.u32 %v1253
  %v1255 = vextract.high.u32 %v1253
  %v1256 = vmul.u32.u64.compose %v1252, %v1247
  %v1257 = vextract.low.u32 %v1256
  %v1258 = vextract.high.u32 %v1256
  %v1259 = vmul.u32 %v1252, %v1243
  %v1260 = vadd.s32 %v1255, %v1257
  %vm1261 = vc.u32 %v1255, %v1257
  %v1262 = vadd.s32 %v1258, 1
  %v1263 = vsel %vm1261, %v1262, %v1258
  %v1264 = vadd.s32 %v1259, %v1263
  %v1265 = vadd.s32 %v1264, 536870912
  %v1266 = vshrl.u32 %v1265, 30
  %v1267 = vshll.u32 %v1266, 30
  %v1268 = vsub.s32 %v1264, %v1267
  %vm1269 = vcmp.lt.s32.totalorder %v1268, 0
  %v1270 = vsub.s32 0, %v1268
  %v1271 = vsel %vm1269, %v1270, %v1268
  %v1272 = vclz %v1271
  %v1273 = vsub.s32 %v1272, 2
  %vm1274 = vcmp.gt.s32.totalorder 0, %v1273
  %v1275 = vsel %vm1274, 0, %v1273
  %v1276 = vsub.s32 32, %v1275
  %v1277 = vshll.u32 %v1268, %v1275
  %v1278 = vshrl.u32 %v1260, %v1276
  %v1279 = vor.u32 %v1277, %v1278
  %v1280 = vsub.s32 4294967266, %v1275
  %v1281 = vadd.s32 %v1280, 127
  %v1282 = vshll.u32 %v1281, 23
  %v1283 = vor.u32 4788187, %v1282
  %v1284 = vand.u32 2147483647, %v1283
  %v1286 = vcvt.s32.f32 %v1279
  %v1287 = vmul.f32 %v1286, %v1284
  %v1288 = vxor.u32 %v1287, 2147483648
  %v1289 = vsel %vm1206, %v1288, %v1287
  %v1290 = vsub.s32 4, %v1266
  %v1291 = vsel %vm1206, %v1290, %v1266
  %v1292 = vsel %vm1205, %v894, %v1289
  %v1293 = vsel %vm1205, 0, %v1291
  %v1294 = vcosq.f32.pop %v1292
  %v1295 = vsinq.f32.pop %v1292
  %vm1296 = vweird.f32 %v894
  %v1297 = vand.u32 %v1293, 3
  %vm1298 = vcmp.lt.s32.totalorder %v1297, 2
  %vm1299 = vcmp.eq.s32.totalorder %v1297, 0
  %v1300 = vxor.u32 %v1295, 2147483648
  %v1301 = vsel %vm1299, %v1294, %v1300
  %vm1302 = vcmp.eq.s32.totalorder %v1297, 2
  %v1303 = vxor.u32 %v1294, 2147483648
  %v1304 = vsel %vm1302, %v1303, %v1295
  %v1305 = vsel %vm1298, %v1301, %v1304
  %v1306 = vsel %vm1296, nan, %v1305
  %v1307 = vmul.f32 %v843, %v997
  %v1308 = vmul.f32 %v844, %v1100
  %v1309 = vmul.f32 %v845, %v1203
  %v1310 = vmul.f32 %v846, %v1306
  %v1311 = vmax.f32 %v1307, %v1309
  %v1312 = vrot.slane %v1311, 4
  %v1313 = vmax.f32 %v1311, %v1312
  %v1314 = vrot.slane %v1313, 2
  %v1315 = vmax.f32 %v1313, %v1314
  %v1316 = vrot.slane %v1315, 1
  %v1317 = vmax.f32 %v1315, %v1316
  %v1318 = vmax.f32 %v1308, %v1310
  %v1319 = vrot.slane %v1318, 4
  %v1320 = vmax.f32 %v1318, %v1319
  %v1321 = vrot.slane %v1320, 2
  %v1322 = vmax.f32 %v1320, %v1321
  %v1323 = vrot.slane %v1322, 1
  %v1324 = vmax.f32 %v1322, %v1323
  %v1325 = vmax.f32 %v1317, 0.0
  %v1326 = vmax.f32 %v1324, 0.0
  %v1329 = vcombine.low %v1325, %v1326
  %v1331 = vunpack.c.l.s4 1966171168
  %v1332 = vunpack.c.0.s8 %v1331
  %v1333 = vlaneseq
  %v1334 = vshrl.u32 %v1333, 7
  %v1335 = vsub.s32 %v1332, %v1334
  %v1336 = vrot.slane %v1329, %v1335
  %v1338 = vunpack.c.l.s4 1966171168
  %v1339 = vunpack.c.0.s8 %v1338
  %v1340 = vlaneseq
  %v1341 = vshrl.u32 %v1340, 7
  %v1342 = vsub.s32 %v1339, %v1341
  %v1343 = vrot.slane %v1336, %v1342
  %s1345 = scalar_lea.vmem %s1, 2
  %1346 = vst.msk [vmem:[%s1345] ss:$8 sm:$0x3] %vm884, %v1343
  %1347 = vst.msk [vmem:[%s1345] ss:$8 sm:$0x0] %vm884, %v1343
  %v1348 = vmul.f32 %v533, %v997
  %v1349 = vmul.f32 %v636, %v1100
  %v1350 = vmul.f32 %v739, %v1203
  %v1351 = vmul.f32 %v842, %v1306
  %s1352 = sadd.s32 0, 12
  %s1353 = smul.addr %s1352, 8
  %s1354 = scalar_lea.vmem %s0, %s1353
  %v1355 = vld [vmem:[%s1354] sm:$0xff]
  %v1356 = vld [vmem:[%s1354 + $0x8] sm:$0xff]
  %v1357 = vld [vmem:[%s1354 + $0x10] sm:$0xff]
  %v1358 = vld [vmem:[%s1354 + $0x18] sm:$0xff]
  %v1359 = vand.u32 2147483647, %v1355
  %vm1360 = vcmp.le.f32.partialorder %v1359, 0.7853982
  %vm1361 = vcmp.lt.s32.totalorder %v1355, 0
  %v1362 = vand.u32 %v1355, 2139095040
  %v1363 = vshrl.u32 %v1362, 23
  %v1364 = vsub.s32 %v1363, 127
  %v1365 = vand.u32 2147483647, %v1355
  %v1366 = vand.u32 %v1365, 8388607
  %v1367 = vor.u32 %v1366, 8388608
  %v1368 = vsub.s32 0, %v1367
  %v1369 = vadd.s32 %v1364, 1
  %vm1370 = vcmp.gt.s32.totalorder %v1369, 0
  %v1371 = vsel %vm1370, %v1369, 0
  %v1372 = vshrl.u32 %v1371, 5
  %v1373 = vand.u32 %v1371, 31
  %v1374 = vsub.s32 32, %v1373
  %v1375 = vshrl.u32 683565275, %v1374
  %v1376 = vshll.u32 683565275, %v1373
  %v1377 = vshrl.u32 2475754826, %v1374
  %v1378 = vor.u32 %v1376, %v1377
  %v1379 = vshll.u32 2475754826, %v1373
  %v1380 = vshrl.u32 2131351028, %v1374
  %v1381 = vor.u32 %v1379, %v1380
  %v1382 = vshll.u32 2131351028, %v1373
  %v1383 = vshrl.u32 2102212464, %v1374
  %v1384 = vor.u32 %v1382, %v1383
  %v1385 = vshll.u32 2102212464, %v1373
  %v1386 = vshrl.u32 920167782, %v1374
  %v1387 = vor.u32 %v1385, %v1386
  %v1388 = vshll.u32 920167782, %v1373
  %v1389 = vshrl.u32 1326507024, %v1374
  %v1390 = vor.u32 %v1388, %v1389
  %vm1391 = vcmp.lt.s32.totalorder %v1372, 1
  %vm1392 = vcmp.lt.s32.totalorder %v1372, 2
  %vm1393 = vcmp.lt.s32.totalorder %v1372, 3
  %vm1394 = vcmp.lt.s32.totalorder %v1372, 4
  %v1395 = vsel %vm1391, %v1375, %v1378
  %v1396 = vsel %vm1394, %v1384, 2102212464
  %v1397 = vsel %vm1393, %v1381, %v1396
  %v1398 = vsel %vm1392, %v1395, %v1397
  %v1399 = vsel %vm1391, %v1378, %v1381
  %v1400 = vsel %vm1394, %v1387, 920167782
  %v1401 = vsel %vm1393, %v1384, %v1400
  %v1402 = vsel %vm1392, %v1399, %v1401
  %v1403 = vsel %vm1391, %v1381, %v1384
  %v1404 = vsel %vm1394, %v1390, 1326507024
  %v1405 = vsel %vm1393, %v1387, %v1404
  %v1406 = vsel %vm1392, %v1403, %v1405
  %v1407 = vshll.u32 %v1367, 8
  %v1408 = vmul.u32.u64.compose %v1407, %v1406
  %v1409 = vextract.low.u32 %v1408
  %v1410 = vextract.high.u32 %v1408
  %v1411 = vmul.u32.u64.compose %v1407, %v1402
  %v1412 = vextract.low.u32 %v1411
  %v1413 = vextract.high.u32 %v1411
  %v1414 = vmul.u32 %v1407, %v1398
  %v1415 = vadd.s32 %v1410, %v1412
  %vm1416 = vc.u32 %v1410, %v1412
  %v1417 = vadd.s32 %v1413, 1
  %v1418 = vsel %vm1416, %v1417, %v1413
  %v1419 = vadd.s32 %v1414, %v1418
  %v1420 = vadd.s32 %v1419, 536870912
  %v1421 = vshrl.u32 %v1420, 30
  %v1422 = vshll.u32 %v1421, 30
  %v1423 = vsub.s32 %v1419, %v1422
  %vm1424 = vcmp.lt.s32.totalorder %v1423, 0
  %v1425 = vsub.s32 0, %v1423
  %v1426 = vsel %vm1424, %v1425, %v1423
  %v1427 = vclz %v1426
  %v1428 = vsub.s32 %v1427, 2
  %vm1429 = vcmp.gt.s32.totalorder 0, %v1428
  %v1430 = vsel %vm1429, 0, %v1428
  %v1431 = vsub.s32 32, %v1430
  %v1432 = vshll.u32 %v1423, %v1430
  %v1433 = vshrl.u32 %v1415, %v1431
  %v1434 = vor.u32 %v1432, %v1433
  %v1435 = vsub.s32 4294967266, %v1430
  %v1436 = vadd.s32 %v1435, 127
  %v1437 = vshll.u32 %v1436, 23
  %v1438 = vor.u32 4788187, %v1437
  %v1439 = vand.u32 2147483647, %v1438
  %v1441 = vcvt.s32.f32 %v1434
  %v1442 = vmul.f32 %v1441, %v1439
  %v1443 = vxor.u32 %v1442, 2147483648
  %v1444 = vsel %vm1361, %v1443, %v1442
  %v1445 = vsub.s32 4, %v1421
  %v1446 = vsel %vm1361, %v1445, %v1421
  %v1447 = vsel %vm1360, %v1355, %v1444
  %v1448 = vsel %vm1360, 0, %v1446
  %v1449 = vcosq.f32.pop %v1447
  %v1450 = vsinq.f32.pop %v1447
  %vm1451 = vweird.f32 %v1355
  %v1452 = vand.u32 %v1448, 3
  %vm1453 = vcmp.lt.s32.totalorder %v1452, 2
  %vm1454 = vcmp.eq.s32.totalorder %v1452, 0
  %v1455 = vxor.u32 %v1450, 2147483648
  %v1456 = vsel %vm1454, %v1449, %v1455
  %vm1457 = vcmp.eq.s32.totalorder %v1452, 2
  %v1458 = vxor.u32 %v1449, 2147483648
  %v1459 = vsel %vm1457, %v1458, %v1450
  %v1460 = vsel %vm1453, %v1456, %v1459
  %v1461 = vsel %vm1451, nan, %v1460
  %v1462 = vand.u32 2147483647, %v1356
  %vm1463 = vcmp.le.f32.partialorder %v1462, 0.7853982
  %vm1464 = vcmp.lt.s32.totalorder %v1356, 0
  %v1465 = vand.u32 %v1356, 2139095040
  %v1466 = vshrl.u32 %v1465, 23
  %v1467 = vsub.s32 %v1466, 127
  %v1468 = vand.u32 2147483647, %v1356
  %v1469 = vand.u32 %v1468, 8388607
  %v1470 = vor.u32 %v1469, 8388608
  %v1471 = vsub.s32 0, %v1470
  %v1472 = vadd.s32 %v1467, 1
  %vm1473 = vcmp.gt.s32.totalorder %v1472, 0
  %v1474 = vsel %vm1473, %v1472, 0
  %v1475 = vshrl.u32 %v1474, 5
  %v1476 = vand.u32 %v1474, 31
  %v1477 = vsub.s32 32, %v1476
  %v1478 = vshrl.u32 683565275, %v1477
  %v1479 = vshll.u32 683565275, %v1476
  %v1480 = vshrl.u32 2475754826, %v1477
  %v1481 = vor.u32 %v1479, %v1480
  %v1482 = vshll.u32 2475754826, %v1476
  %v1483 = vshrl.u32 2131351028, %v1477
  %v1484 = vor.u32 %v1482, %v1483
  %v1485 = vshll.u32 2131351028, %v1476
  %v1486 = vshrl.u32 2102212464, %v1477
  %v1487 = vor.u32 %v1485, %v1486
  %v1488 = vshll.u32 2102212464, %v1476
  %v1489 = vshrl.u32 920167782, %v1477
  %v1490 = vor.u32 %v1488, %v1489
  %v1491 = vshll.u32 920167782, %v1476
  %v1492 = vshrl.u32 1326507024, %v1477
  %v1493 = vor.u32 %v1491, %v1492
  %vm1494 = vcmp.lt.s32.totalorder %v1475, 1
  %vm1495 = vcmp.lt.s32.totalorder %v1475, 2
  %vm1496 = vcmp.lt.s32.totalorder %v1475, 3
  %vm1497 = vcmp.lt.s32.totalorder %v1475, 4
  %v1498 = vsel %vm1494, %v1478, %v1481
  %v1499 = vsel %vm1497, %v1487, 2102212464
  %v1500 = vsel %vm1496, %v1484, %v1499
  %v1501 = vsel %vm1495, %v1498, %v1500
  %v1502 = vsel %vm1494, %v1481, %v1484
  %v1503 = vsel %vm1497, %v1490, 920167782
  %v1504 = vsel %vm1496, %v1487, %v1503
  %v1505 = vsel %vm1495, %v1502, %v1504
  %v1506 = vsel %vm1494, %v1484, %v1487
  %v1507 = vsel %vm1497, %v1493, 1326507024
  %v1508 = vsel %vm1496, %v1490, %v1507
  %v1509 = vsel %vm1495, %v1506, %v1508
  %v1510 = vshll.u32 %v1470, 8
  %v1511 = vmul.u32.u64.compose %v1510, %v1509
  %v1512 = vextract.low.u32 %v1511
  %v1513 = vextract.high.u32 %v1511
  %v1514 = vmul.u32.u64.compose %v1510, %v1505
  %v1515 = vextract.low.u32 %v1514
  %v1516 = vextract.high.u32 %v1514
  %v1517 = vmul.u32 %v1510, %v1501
  %v1518 = vadd.s32 %v1513, %v1515
  %vm1519 = vc.u32 %v1513, %v1515
  %v1520 = vadd.s32 %v1516, 1
  %v1521 = vsel %vm1519, %v1520, %v1516
  %v1522 = vadd.s32 %v1517, %v1521
  %v1523 = vadd.s32 %v1522, 536870912
  %v1524 = vshrl.u32 %v1523, 30
  %v1525 = vshll.u32 %v1524, 30
  %v1526 = vsub.s32 %v1522, %v1525
  %vm1527 = vcmp.lt.s32.totalorder %v1526, 0
  %v1528 = vsub.s32 0, %v1526
  %v1529 = vsel %vm1527, %v1528, %v1526
  %v1530 = vclz %v1529
  %v1531 = vsub.s32 %v1530, 2
  %vm1532 = vcmp.gt.s32.totalorder 0, %v1531
  %v1533 = vsel %vm1532, 0, %v1531
  %v1534 = vsub.s32 32, %v1533
  %v1535 = vshll.u32 %v1526, %v1533
  %v1536 = vshrl.u32 %v1518, %v1534
  %v1537 = vor.u32 %v1535, %v1536
  %v1538 = vsub.s32 4294967266, %v1533
  %v1539 = vadd.s32 %v1538, 127
  %v1540 = vshll.u32 %v1539, 23
  %v1541 = vor.u32 4788187, %v1540
  %v1542 = vand.u32 2147483647, %v1541
  %v1544 = vcvt.s32.f32 %v1537
  %v1545 = vmul.f32 %v1544, %v1542
  %v1546 = vxor.u32 %v1545, 2147483648
  %v1547 = vsel %vm1464, %v1546, %v1545
  %v1548 = vsub.s32 4, %v1524
  %v1549 = vsel %vm1464, %v1548, %v1524
  %v1550 = vsel %vm1463, %v1356, %v1547
  %v1551 = vsel %vm1463, 0, %v1549
  %v1552 = vcosq.f32.pop %v1550
  %v1553 = vsinq.f32.pop %v1550
  %vm1554 = vweird.f32 %v1356
  %v1555 = vand.u32 %v1551, 3
  %vm1556 = vcmp.lt.s32.totalorder %v1555, 2
  %vm1557 = vcmp.eq.s32.totalorder %v1555, 0
  %v1558 = vxor.u32 %v1553, 2147483648
  %v1559 = vsel %vm1557, %v1552, %v1558
  %vm1560 = vcmp.eq.s32.totalorder %v1555, 2
  %v1561 = vxor.u32 %v1552, 2147483648
  %v1562 = vsel %vm1560, %v1561, %v1553
  %v1563 = vsel %vm1556, %v1559, %v1562
  %v1564 = vsel %vm1554, nan, %v1563
  %v1565 = vand.u32 2147483647, %v1357
  %vm1566 = vcmp.le.f32.partialorder %v1565, 0.7853982
  %vm1567 = vcmp.lt.s32.totalorder %v1357, 0
  %v1568 = vand.u32 %v1357, 2139095040
  %v1569 = vshrl.u32 %v1568, 23
  %v1570 = vsub.s32 %v1569, 127
  %v1571 = vand.u32 2147483647, %v1357
  %v1572 = vand.u32 %v1571, 8388607
  %v1573 = vor.u32 %v1572, 8388608
  %v1574 = vsub.s32 0, %v1573
  %v1575 = vadd.s32 %v1570, 1
  %vm1576 = vcmp.gt.s32.totalorder %v1575, 0
  %v1577 = vsel %vm1576, %v1575, 0
  %v1578 = vshrl.u32 %v1577, 5
  %v1579 = vand.u32 %v1577, 31
  %v1580 = vsub.s32 32, %v1579
  %v1581 = vshrl.u32 683565275, %v1580
  %v1582 = vshll.u32 683565275, %v1579
  %v1583 = vshrl.u32 2475754826, %v1580
  %v1584 = vor.u32 %v1582, %v1583
  %v1585 = vshll.u32 2475754826, %v1579
  %v1586 = vshrl.u32 2131351028, %v1580
  %v1587 = vor.u32 %v1585, %v1586
  %v1588 = vshll.u32 2131351028, %v1579
  %v1589 = vshrl.u32 2102212464, %v1580
  %v1590 = vor.u32 %v1588, %v1589
  %v1591 = vshll.u32 2102212464, %v1579
  %v1592 = vshrl.u32 920167782, %v1580
  %v1593 = vor.u32 %v1591, %v1592
  %v1594 = vshll.u32 920167782, %v1579
  %v1595 = vshrl.u32 1326507024, %v1580
  %v1596 = vor.u32 %v1594, %v1595
  %vm1597 = vcmp.lt.s32.totalorder %v1578, 1
  %vm1598 = vcmp.lt.s32.totalorder %v1578, 2
  %vm1599 = vcmp.lt.s32.totalorder %v1578, 3
  %vm1600 = vcmp.lt.s32.totalorder %v1578, 4
  %v1601 = vsel %vm1597, %v1581, %v1584
  %v1602 = vsel %vm1600, %v1590, 2102212464
  %v1603 = vsel %vm1599, %v1587, %v1602
  %v1604 = vsel %vm1598, %v1601, %v1603
  %v1605 = vsel %vm1597, %v1584, %v1587
  %v1606 = vsel %vm1600, %v1593, 920167782
  %v1607 = vsel %vm1599, %v1590, %v1606
  %v1608 = vsel %vm1598, %v1605, %v1607
  %v1609 = vsel %vm1597, %v1587, %v1590
  %v1610 = vsel %vm1600, %v1596, 1326507024
  %v1611 = vsel %vm1599, %v1593, %v1610
  %v1612 = vsel %vm1598, %v1609, %v1611
  %v1613 = vshll.u32 %v1573, 8
  %v1614 = vmul.u32.u64.compose %v1613, %v1612
  %v1615 = vextract.low.u32 %v1614
  %v1616 = vextract.high.u32 %v1614
  %v1617 = vmul.u32.u64.compose %v1613, %v1608
  %v1618 = vextract.low.u32 %v1617
  %v1619 = vextract.high.u32 %v1617
  %v1620 = vmul.u32 %v1613, %v1604
  %v1621 = vadd.s32 %v1616, %v1618
  %vm1622 = vc.u32 %v1616, %v1618
  %v1623 = vadd.s32 %v1619, 1
  %v1624 = vsel %vm1622, %v1623, %v1619
  %v1625 = vadd.s32 %v1620, %v1624
  %v1626 = vadd.s32 %v1625, 536870912
  %v1627 = vshrl.u32 %v1626, 30
  %v1628 = vshll.u32 %v1627, 30
  %v1629 = vsub.s32 %v1625, %v1628
  %vm1630 = vcmp.lt.s32.totalorder %v1629, 0
  %v1631 = vsub.s32 0, %v1629
  %v1632 = vsel %vm1630, %v1631, %v1629
  %v1633 = vclz %v1632
  %v1634 = vsub.s32 %v1633, 2
  %vm1635 = vcmp.gt.s32.totalorder 0, %v1634
  %v1636 = vsel %vm1635, 0, %v1634
  %v1637 = vsub.s32 32, %v1636
  %v1638 = vshll.u32 %v1629, %v1636
  %v1639 = vshrl.u32 %v1621, %v1637
  %v1640 = vor.u32 %v1638, %v1639
  %v1641 = vsub.s32 4294967266, %v1636
  %v1642 = vadd.s32 %v1641, 127
  %v1643 = vshll.u32 %v1642, 23
  %v1644 = vor.u32 4788187, %v1643
  %v1645 = vand.u32 2147483647, %v1644
  %v1647 = vcvt.s32.f32 %v1640
  %v1648 = vmul.f32 %v1647, %v1645
  %v1649 = vxor.u32 %v1648, 2147483648
  %v1650 = vsel %vm1567, %v1649, %v1648
  %v1651 = vsub.s32 4, %v1627
  %v1652 = vsel %vm1567, %v1651, %v1627
  %v1653 = vsel %vm1566, %v1357, %v1650
  %v1654 = vsel %vm1566, 0, %v1652
  %v1655 = vcosq.f32.pop %v1653
  %v1656 = vsinq.f32.pop %v1653
  %vm1657 = vweird.f32 %v1357
  %v1658 = vand.u32 %v1654, 3
  %vm1659 = vcmp.lt.s32.totalorder %v1658, 2
  %vm1660 = vcmp.eq.s32.totalorder %v1658, 0
  %v1661 = vxor.u32 %v1656, 2147483648
  %v1662 = vsel %vm1660, %v1655, %v1661
  %vm1663 = vcmp.eq.s32.totalorder %v1658, 2
  %v1664 = vxor.u32 %v1655, 2147483648
  %v1665 = vsel %vm1663, %v1664, %v1656
  %v1666 = vsel %vm1659, %v1662, %v1665
  %v1667 = vsel %vm1657, nan, %v1666
  %v1668 = vand.u32 2147483647, %v1358
  %vm1669 = vcmp.le.f32.partialorder %v1668, 0.7853982
  %vm1670 = vcmp.lt.s32.totalorder %v1358, 0
  %v1671 = vand.u32 %v1358, 2139095040
  %v1672 = vshrl.u32 %v1671, 23
  %v1673 = vsub.s32 %v1672, 127
  %v1674 = vand.u32 2147483647, %v1358
  %v1675 = vand.u32 %v1674, 8388607
  %v1676 = vor.u32 %v1675, 8388608
  %v1677 = vsub.s32 0, %v1676
  %v1678 = vadd.s32 %v1673, 1
  %vm1679 = vcmp.gt.s32.totalorder %v1678, 0
  %v1680 = vsel %vm1679, %v1678, 0
  %v1681 = vshrl.u32 %v1680, 5
  %v1682 = vand.u32 %v1680, 31
  %v1683 = vsub.s32 32, %v1682
  %v1684 = vshrl.u32 683565275, %v1683
  %v1685 = vshll.u32 683565275, %v1682
  %v1686 = vshrl.u32 2475754826, %v1683
  %v1687 = vor.u32 %v1685, %v1686
  %v1688 = vshll.u32 2475754826, %v1682
  %v1689 = vshrl.u32 2131351028, %v1683
  %v1690 = vor.u32 %v1688, %v1689
  %v1691 = vshll.u32 2131351028, %v1682
  %v1692 = vshrl.u32 2102212464, %v1683
  %v1693 = vor.u32 %v1691, %v1692
  %v1694 = vshll.u32 2102212464, %v1682
  %v1695 = vshrl.u32 920167782, %v1683
  %v1696 = vor.u32 %v1694, %v1695
  %v1697 = vshll.u32 920167782, %v1682
  %v1698 = vshrl.u32 1326507024, %v1683
  %v1699 = vor.u32 %v1697, %v1698
  %vm1700 = vcmp.lt.s32.totalorder %v1681, 1
  %vm1701 = vcmp.lt.s32.totalorder %v1681, 2
  %vm1702 = vcmp.lt.s32.totalorder %v1681, 3
  %vm1703 = vcmp.lt.s32.totalorder %v1681, 4
  %v1704 = vsel %vm1700, %v1684, %v1687
  %v1705 = vsel %vm1703, %v1693, 2102212464
  %v1706 = vsel %vm1702, %v1690, %v1705
  %v1707 = vsel %vm1701, %v1704, %v1706
  %v1708 = vsel %vm1700, %v1687, %v1690
  %v1709 = vsel %vm1703, %v1696, 920167782
  %v1710 = vsel %vm1702, %v1693, %v1709
  %v1711 = vsel %vm1701, %v1708, %v1710
  %v1712 = vsel %vm1700, %v1690, %v1693
  %v1713 = vsel %vm1703, %v1699, 1326507024
  %v1714 = vsel %vm1702, %v1696, %v1713
  %v1715 = vsel %vm1701, %v1712, %v1714
  %v1716 = vshll.u32 %v1676, 8
  %v1717 = vmul.u32.u64.compose %v1716, %v1715
  %v1718 = vextract.low.u32 %v1717
  %v1719 = vextract.high.u32 %v1717
  %v1720 = vmul.u32.u64.compose %v1716, %v1711
  %v1721 = vextract.low.u32 %v1720
  %v1722 = vextract.high.u32 %v1720
  %v1723 = vmul.u32 %v1716, %v1707
  %v1724 = vadd.s32 %v1719, %v1721
  %vm1725 = vc.u32 %v1719, %v1721
  %v1726 = vadd.s32 %v1722, 1
  %v1727 = vsel %vm1725, %v1726, %v1722
  %v1728 = vadd.s32 %v1723, %v1727
  %v1729 = vadd.s32 %v1728, 536870912
  %v1730 = vshrl.u32 %v1729, 30
  %v1731 = vshll.u32 %v1730, 30
  %v1732 = vsub.s32 %v1728, %v1731
  %vm1733 = vcmp.lt.s32.totalorder %v1732, 0
  %v1734 = vsub.s32 0, %v1732
  %v1735 = vsel %vm1733, %v1734, %v1732
  %v1736 = vclz %v1735
  %v1737 = vsub.s32 %v1736, 2
  %vm1738 = vcmp.gt.s32.totalorder 0, %v1737
  %v1739 = vsel %vm1738, 0, %v1737
  %v1740 = vsub.s32 32, %v1739
  %v1741 = vshll.u32 %v1732, %v1739
  %v1742 = vshrl.u32 %v1724, %v1740
  %v1743 = vor.u32 %v1741, %v1742
  %v1744 = vsub.s32 4294967266, %v1739
  %v1745 = vadd.s32 %v1744, 127
  %v1746 = vshll.u32 %v1745, 23
  %v1747 = vor.u32 4788187, %v1746
  %v1748 = vand.u32 2147483647, %v1747
  %v1750 = vcvt.s32.f32 %v1743
  %v1751 = vmul.f32 %v1750, %v1748
  %v1752 = vxor.u32 %v1751, 2147483648
  %v1753 = vsel %vm1670, %v1752, %v1751
  %v1754 = vsub.s32 4, %v1730
  %v1755 = vsel %vm1670, %v1754, %v1730
  %v1756 = vsel %vm1669, %v1358, %v1753
  %v1757 = vsel %vm1669, 0, %v1755
  %v1758 = vcosq.f32.pop %v1756
  %v1759 = vsinq.f32.pop %v1756
  %vm1760 = vweird.f32 %v1358
  %v1761 = vand.u32 %v1757, 3
  %vm1762 = vcmp.lt.s32.totalorder %v1761, 2
  %vm1763 = vcmp.eq.s32.totalorder %v1761, 0
  %v1764 = vxor.u32 %v1759, 2147483648
  %v1765 = vsel %vm1763, %v1758, %v1764
  %vm1766 = vcmp.eq.s32.totalorder %v1761, 2
  %v1767 = vxor.u32 %v1758, 2147483648
  %v1768 = vsel %vm1766, %v1767, %v1759
  %v1769 = vsel %vm1762, %v1765, %v1768
  %v1770 = vsel %vm1760, nan, %v1769
  %v1771 = vmul.f32 %v1307, %v1461
  %v1772 = vmul.f32 %v1308, %v1564
  %v1773 = vmul.f32 %v1309, %v1667
  %v1774 = vmul.f32 %v1310, %v1770
  %v1775 = vmax.f32 %v1771, %v1773
  %v1776 = vrot.slane %v1775, 4
  %v1777 = vmax.f32 %v1775, %v1776
  %v1778 = vrot.slane %v1777, 2
  %v1779 = vmax.f32 %v1777, %v1778
  %v1780 = vrot.slane %v1779, 1
  %v1781 = vmax.f32 %v1779, %v1780
  %v1782 = vmax.f32 %v1772, %v1774
  %v1783 = vrot.slane %v1782, 4
  %v1784 = vmax.f32 %v1782, %v1783
  %v1785 = vrot.slane %v1784, 2
  %v1786 = vmax.f32 %v1784, %v1785
  %v1787 = vrot.slane %v1786, 1
  %v1788 = vmax.f32 %v1786, %v1787
  %v1789 = vmax.f32 %v1781, 0.0
  %v1790 = vmax.f32 %v1788, 0.0
  %v1793 = vcombine.low %v1789, %v1790
  %v1795 = vunpack.c.l.s4 1966171168
  %v1796 = vunpack.c.0.s8 %v1795
  %v1797 = vlaneseq
  %v1798 = vshrl.u32 %v1797, 7
  %v1799 = vsub.s32 %v1796, %v1798
  %v1800 = vrot.slane %v1793, %v1799
  %v1802 = vunpack.c.l.s4 1966171168
  %v1803 = vunpack.c.0.s8 %v1802
  %v1804 = vlaneseq
  %v1805 = vshrl.u32 %v1804, 7
  %v1806 = vsub.s32 %v1803, %v1805
  %v1807 = vrot.slane %v1800, %v1806
  %s1809 = scalar_lea.vmem %s1, 3
  %1810 = vst.msk [vmem:[%s1809] ss:$8 sm:$0x3] %vm884, %v1807
  %1811 = vst.msk [vmem:[%s1809] ss:$8 sm:$0x0] %vm884, %v1807
  %v1812 = vmul.f32 %v1348, %v1461
  %v1813 = vmul.f32 %v1349, %v1564
  %v1814 = vmul.f32 %v1350, %v1667
  %v1815 = vmul.f32 %v1351, %v1770
  %s1816 = sadd.s32 0, 16
  %s1817 = smul.addr %s1816, 8
  %s1818 = scalar_lea.vmem %s0, %s1817
  %v1819 = vld [vmem:[%s1818] sm:$0xff]
  %v1820 = vld [vmem:[%s1818 + $0x8] sm:$0xff]
  %v1821 = vld [vmem:[%s1818 + $0x10] sm:$0xff]
  %v1822 = vld [vmem:[%s1818 + $0x18] sm:$0xff]
  %v1823 = vand.u32 2147483647, %v1819
  %vm1824 = vcmp.le.f32.partialorder %v1823, 0.7853982
  %vm1825 = vcmp.lt.s32.totalorder %v1819, 0
  %v1826 = vand.u32 %v1819, 2139095040
  %v1827 = vshrl.u32 %v1826, 23
  %v1828 = vsub.s32 %v1827, 127
  %v1829 = vand.u32 2147483647, %v1819
  %v1830 = vand.u32 %v1829, 8388607
  %v1831 = vor.u32 %v1830, 8388608
  %v1832 = vsub.s32 0, %v1831
  %v1833 = vadd.s32 %v1828, 1
  %vm1834 = vcmp.gt.s32.totalorder %v1833, 0
  %v1835 = vsel %vm1834, %v1833, 0
  %v1836 = vshrl.u32 %v1835, 5
  %v1837 = vand.u32 %v1835, 31
  %v1838 = vsub.s32 32, %v1837
  %v1839 = vshrl.u32 683565275, %v1838
  %v1840 = vshll.u32 683565275, %v1837
  %v1841 = vshrl.u32 2475754826, %v1838
  %v1842 = vor.u32 %v1840, %v1841
  %v1843 = vshll.u32 2475754826, %v1837
  %v1844 = vshrl.u32 2131351028, %v1838
  %v1845 = vor.u32 %v1843, %v1844
  %v1846 = vshll.u32 2131351028, %v1837
  %v1847 = vshrl.u32 2102212464, %v1838
  %v1848 = vor.u32 %v1846, %v1847
  %v1849 = vshll.u32 2102212464, %v1837
  %v1850 = vshrl.u32 920167782, %v1838
  %v1851 = vor.u32 %v1849, %v1850
  %v1852 = vshll.u32 920167782, %v1837
  %v1853 = vshrl.u32 1326507024, %v1838
  %v1854 = vor.u32 %v1852, %v1853
  %vm1855 = vcmp.lt.s32.totalorder %v1836, 1
  %vm1856 = vcmp.lt.s32.totalorder %v1836, 2
  %vm1857 = vcmp.lt.s32.totalorder %v1836, 3
  %vm1858 = vcmp.lt.s32.totalorder %v1836, 4
  %v1859 = vsel %vm1855, %v1839, %v1842
  %v1860 = vsel %vm1858, %v1848, 2102212464
  %v1861 = vsel %vm1857, %v1845, %v1860
  %v1862 = vsel %vm1856, %v1859, %v1861
  %v1863 = vsel %vm1855, %v1842, %v1845
  %v1864 = vsel %vm1858, %v1851, 920167782
  %v1865 = vsel %vm1857, %v1848, %v1864
  %v1866 = vsel %vm1856, %v1863, %v1865
  %v1867 = vsel %vm1855, %v1845, %v1848
  %v1868 = vsel %vm1858, %v1854, 1326507024
  %v1869 = vsel %vm1857, %v1851, %v1868
  %v1870 = vsel %vm1856, %v1867, %v1869
  %v1871 = vshll.u32 %v1831, 8
  %v1872 = vmul.u32.u64.compose %v1871, %v1870
  %v1873 = vextract.low.u32 %v1872
  %v1874 = vextract.high.u32 %v1872
  %v1875 = vmul.u32.u64.compose %v1871, %v1866
  %v1876 = vextract.low.u32 %v1875
  %v1877 = vextract.high.u32 %v1875
  %v1878 = vmul.u32 %v1871, %v1862
  %v1879 = vadd.s32 %v1874, %v1876
  %vm1880 = vc.u32 %v1874, %v1876
  %v1881 = vadd.s32 %v1877, 1
  %v1882 = vsel %vm1880, %v1881, %v1877
  %v1883 = vadd.s32 %v1878, %v1882
  %v1884 = vadd.s32 %v1883, 536870912
  %v1885 = vshrl.u32 %v1884, 30
  %v1886 = vshll.u32 %v1885, 30
  %v1887 = vsub.s32 %v1883, %v1886
  %vm1888 = vcmp.lt.s32.totalorder %v1887, 0
  %v1889 = vsub.s32 0, %v1887
  %v1890 = vsel %vm1888, %v1889, %v1887
  %v1891 = vclz %v1890
  %v1892 = vsub.s32 %v1891, 2
  %vm1893 = vcmp.gt.s32.totalorder 0, %v1892
  %v1894 = vsel %vm1893, 0, %v1892
  %v1895 = vsub.s32 32, %v1894
  %v1896 = vshll.u32 %v1887, %v1894
  %v1897 = vshrl.u32 %v1879, %v1895
  %v1898 = vor.u32 %v1896, %v1897
  %v1899 = vsub.s32 4294967266, %v1894
  %v1900 = vadd.s32 %v1899, 127
  %v1901 = vshll.u32 %v1900, 23
  %v1902 = vor.u32 4788187, %v1901
  %v1903 = vand.u32 2147483647, %v1902
  %v1905 = vcvt.s32.f32 %v1898
  %v1906 = vmul.f32 %v1905, %v1903
  %v1907 = vxor.u32 %v1906, 2147483648
  %v1908 = vsel %vm1825, %v1907, %v1906
  %v1909 = vsub.s32 4, %v1885
  %v1910 = vsel %vm1825, %v1909, %v1885
  %v1911 = vsel %vm1824, %v1819, %v1908
  %v1912 = vsel %vm1824, 0, %v1910
  %v1913 = vcosq.f32.pop %v1911
  %v1914 = vsinq.f32.pop %v1911
  %vm1915 = vweird.f32 %v1819
  %v1916 = vand.u32 %v1912, 3
  %vm1917 = vcmp.lt.s32.totalorder %v1916, 2
  %vm1918 = vcmp.eq.s32.totalorder %v1916, 0
  %v1919 = vxor.u32 %v1914, 2147483648
  %v1920 = vsel %vm1918, %v1913, %v1919
  %vm1921 = vcmp.eq.s32.totalorder %v1916, 2
  %v1922 = vxor.u32 %v1913, 2147483648
  %v1923 = vsel %vm1921, %v1922, %v1914
  %v1924 = vsel %vm1917, %v1920, %v1923
  %v1925 = vsel %vm1915, nan, %v1924
  %v1926 = vand.u32 2147483647, %v1820
  %vm1927 = vcmp.le.f32.partialorder %v1926, 0.7853982
  %vm1928 = vcmp.lt.s32.totalorder %v1820, 0
  %v1929 = vand.u32 %v1820, 2139095040
  %v1930 = vshrl.u32 %v1929, 23
  %v1931 = vsub.s32 %v1930, 127
  %v1932 = vand.u32 2147483647, %v1820
  %v1933 = vand.u32 %v1932, 8388607
  %v1934 = vor.u32 %v1933, 8388608
  %v1935 = vsub.s32 0, %v1934
  %v1936 = vadd.s32 %v1931, 1
  %vm1937 = vcmp.gt.s32.totalorder %v1936, 0
  %v1938 = vsel %vm1937, %v1936, 0
  %v1939 = vshrl.u32 %v1938, 5
  %v1940 = vand.u32 %v1938, 31
  %v1941 = vsub.s32 32, %v1940
  %v1942 = vshrl.u32 683565275, %v1941
  %v1943 = vshll.u32 683565275, %v1940
  %v1944 = vshrl.u32 2475754826, %v1941
  %v1945 = vor.u32 %v1943, %v1944
  %v1946 = vshll.u32 2475754826, %v1940
  %v1947 = vshrl.u32 2131351028, %v1941
  %v1948 = vor.u32 %v1946, %v1947
  %v1949 = vshll.u32 2131351028, %v1940
  %v1950 = vshrl.u32 2102212464, %v1941
  %v1951 = vor.u32 %v1949, %v1950
  %v1952 = vshll.u32 2102212464, %v1940
  %v1953 = vshrl.u32 920167782, %v1941
  %v1954 = vor.u32 %v1952, %v1953
  %v1955 = vshll.u32 920167782, %v1940
  %v1956 = vshrl.u32 1326507024, %v1941
  %v1957 = vor.u32 %v1955, %v1956
  %vm1958 = vcmp.lt.s32.totalorder %v1939, 1
  %vm1959 = vcmp.lt.s32.totalorder %v1939, 2
  %vm1960 = vcmp.lt.s32.totalorder %v1939, 3
  %vm1961 = vcmp.lt.s32.totalorder %v1939, 4
  %v1962 = vsel %vm1958, %v1942, %v1945
  %v1963 = vsel %vm1961, %v1951, 2102212464
  %v1964 = vsel %vm1960, %v1948, %v1963
  %v1965 = vsel %vm1959, %v1962, %v1964
  %v1966 = vsel %vm1958, %v1945, %v1948
  %v1967 = vsel %vm1961, %v1954, 920167782
  %v1968 = vsel %vm1960, %v1951, %v1967
  %v1969 = vsel %vm1959, %v1966, %v1968
  %v1970 = vsel %vm1958, %v1948, %v1951
  %v1971 = vsel %vm1961, %v1957, 1326507024
  %v1972 = vsel %vm1960, %v1954, %v1971
  %v1973 = vsel %vm1959, %v1970, %v1972
  %v1974 = vshll.u32 %v1934, 8
  %v1975 = vmul.u32.u64.compose %v1974, %v1973
  %v1976 = vextract.low.u32 %v1975
  %v1977 = vextract.high.u32 %v1975
  %v1978 = vmul.u32.u64.compose %v1974, %v1969
  %v1979 = vextract.low.u32 %v1978
  %v1980 = vextract.high.u32 %v1978
  %v1981 = vmul.u32 %v1974, %v1965
  %v1982 = vadd.s32 %v1977, %v1979
  %vm1983 = vc.u32 %v1977, %v1979
  %v1984 = vadd.s32 %v1980, 1
  %v1985 = vsel %vm1983, %v1984, %v1980
  %v1986 = vadd.s32 %v1981, %v1985
  %v1987 = vadd.s32 %v1986, 536870912
  %v1988 = vshrl.u32 %v1987, 30
  %v1989 = vshll.u32 %v1988, 30
  %v1990 = vsub.s32 %v1986, %v1989
  %vm1991 = vcmp.lt.s32.totalorder %v1990, 0
  %v1992 = vsub.s32 0, %v1990
  %v1993 = vsel %vm1991, %v1992, %v1990
  %v1994 = vclz %v1993
  %v1995 = vsub.s32 %v1994, 2
  %vm1996 = vcmp.gt.s32.totalorder 0, %v1995
  %v1997 = vsel %vm1996, 0, %v1995
  %v1998 = vsub.s32 32, %v1997
  %v1999 = vshll.u32 %v1990, %v1997
  %v2000 = vshrl.u32 %v1982, %v1998
  %v2001 = vor.u32 %v1999, %v2000
  %v2002 = vsub.s32 4294967266, %v1997
  %v2003 = vadd.s32 %v2002, 127
  %v2004 = vshll.u32 %v2003, 23
  %v2005 = vor.u32 4788187, %v2004
  %v2006 = vand.u32 2147483647, %v2005
  %v2008 = vcvt.s32.f32 %v2001
  %v2009 = vmul.f32 %v2008, %v2006
  %v2010 = vxor.u32 %v2009, 2147483648
  %v2011 = vsel %vm1928, %v2010, %v2009
  %v2012 = vsub.s32 4, %v1988
  %v2013 = vsel %vm1928, %v2012, %v1988
  %v2014 = vsel %vm1927, %v1820, %v2011
  %v2015 = vsel %vm1927, 0, %v2013
  %v2016 = vcosq.f32.pop %v2014
  %v2017 = vsinq.f32.pop %v2014
  %vm2018 = vweird.f32 %v1820
  %v2019 = vand.u32 %v2015, 3
  %vm2020 = vcmp.lt.s32.totalorder %v2019, 2
  %vm2021 = vcmp.eq.s32.totalorder %v2019, 0
  %v2022 = vxor.u32 %v2017, 2147483648
  %v2023 = vsel %vm2021, %v2016, %v2022
  %vm2024 = vcmp.eq.s32.totalorder %v2019, 2
  %v2025 = vxor.u32 %v2016, 2147483648
  %v2026 = vsel %vm2024, %v2025, %v2017
  %v2027 = vsel %vm2020, %v2023, %v2026
  %v2028 = vsel %vm2018, nan, %v2027
  %v2029 = vand.u32 2147483647, %v1821
  %vm2030 = vcmp.le.f32.partialorder %v2029, 0.7853982
  %vm2031 = vcmp.lt.s32.totalorder %v1821, 0
  %v2032 = vand.u32 %v1821, 2139095040
  %v2033 = vshrl.u32 %v2032, 23
  %v2034 = vsub.s32 %v2033, 127
  %v2035 = vand.u32 2147483647, %v1821
  %v2036 = vand.u32 %v2035, 8388607
  %v2037 = vor.u32 %v2036, 8388608
  %v2038 = vsub.s32 0, %v2037
  %v2039 = vadd.s32 %v2034, 1
  %vm2040 = vcmp.gt.s32.totalorder %v2039, 0
  %v2041 = vsel %vm2040, %v2039, 0
  %v2042 = vshrl.u32 %v2041, 5
  %v2043 = vand.u32 %v2041, 31
  %v2044 = vsub.s32 32, %v2043
  %v2045 = vshrl.u32 683565275, %v2044
  %v2046 = vshll.u32 683565275, %v2043
  %v2047 = vshrl.u32 2475754826, %v2044
  %v2048 = vor.u32 %v2046, %v2047
  %v2049 = vshll.u32 2475754826, %v2043
  %v2050 = vshrl.u32 2131351028, %v2044
  %v2051 = vor.u32 %v2049, %v2050
  %v2052 = vshll.u32 2131351028, %v2043
  %v2053 = vshrl.u32 2102212464, %v2044
  %v2054 = vor.u32 %v2052, %v2053
  %v2055 = vshll.u32 2102212464, %v2043
  %v2056 = vshrl.u32 920167782, %v2044
  %v2057 = vor.u32 %v2055, %v2056
  %v2058 = vshll.u32 920167782, %v2043
  %v2059 = vshrl.u32 1326507024, %v2044
  %v2060 = vor.u32 %v2058, %v2059
  %vm2061 = vcmp.lt.s32.totalorder %v2042, 1
  %vm2062 = vcmp.lt.s32.totalorder %v2042, 2
  %vm2063 = vcmp.lt.s32.totalorder %v2042, 3
  %vm2064 = vcmp.lt.s32.totalorder %v2042, 4
  %v2065 = vsel %vm2061, %v2045, %v2048
  %v2066 = vsel %vm2064, %v2054, 2102212464
  %v2067 = vsel %vm2063, %v2051, %v2066
  %v2068 = vsel %vm2062, %v2065, %v2067
  %v2069 = vsel %vm2061, %v2048, %v2051
  %v2070 = vsel %vm2064, %v2057, 920167782
  %v2071 = vsel %vm2063, %v2054, %v2070
  %v2072 = vsel %vm2062, %v2069, %v2071
  %v2073 = vsel %vm2061, %v2051, %v2054
  %v2074 = vsel %vm2064, %v2060, 1326507024
  %v2075 = vsel %vm2063, %v2057, %v2074
  %v2076 = vsel %vm2062, %v2073, %v2075
  %v2077 = vshll.u32 %v2037, 8
  %v2078 = vmul.u32.u64.compose %v2077, %v2076
  %v2079 = vextract.low.u32 %v2078
  %v2080 = vextract.high.u32 %v2078
  %v2081 = vmul.u32.u64.compose %v2077, %v2072
  %v2082 = vextract.low.u32 %v2081
  %v2083 = vextract.high.u32 %v2081
  %v2084 = vmul.u32 %v2077, %v2068
  %v2085 = vadd.s32 %v2080, %v2082
  %vm2086 = vc.u32 %v2080, %v2082
  %v2087 = vadd.s32 %v2083, 1
  %v2088 = vsel %vm2086, %v2087, %v2083
  %v2089 = vadd.s32 %v2084, %v2088
  %v2090 = vadd.s32 %v2089, 536870912
  %v2091 = vshrl.u32 %v2090, 30
  %v2092 = vshll.u32 %v2091, 30
  %v2093 = vsub.s32 %v2089, %v2092
  %vm2094 = vcmp.lt.s32.totalorder %v2093, 0
  %v2095 = vsub.s32 0, %v2093
  %v2096 = vsel %vm2094, %v2095, %v2093
  %v2097 = vclz %v2096
  %v2098 = vsub.s32 %v2097, 2
  %vm2099 = vcmp.gt.s32.totalorder 0, %v2098
  %v2100 = vsel %vm2099, 0, %v2098
  %v2101 = vsub.s32 32, %v2100
  %v2102 = vshll.u32 %v2093, %v2100
  %v2103 = vshrl.u32 %v2085, %v2101
  %v2104 = vor.u32 %v2102, %v2103
  %v2105 = vsub.s32 4294967266, %v2100
  %v2106 = vadd.s32 %v2105, 127
  %v2107 = vshll.u32 %v2106, 23
  %v2108 = vor.u32 4788187, %v2107
  %v2109 = vand.u32 2147483647, %v2108
  %v2111 = vcvt.s32.f32 %v2104
  %v2112 = vmul.f32 %v2111, %v2109
  %v2113 = vxor.u32 %v2112, 2147483648
  %v2114 = vsel %vm2031, %v2113, %v2112
  %v2115 = vsub.s32 4, %v2091
  %v2116 = vsel %vm2031, %v2115, %v2091
  %v2117 = vsel %vm2030, %v1821, %v2114
  %v2118 = vsel %vm2030, 0, %v2116
  %v2119 = vcosq.f32.pop %v2117
  %v2120 = vsinq.f32.pop %v2117
  %vm2121 = vweird.f32 %v1821
  %v2122 = vand.u32 %v2118, 3
  %vm2123 = vcmp.lt.s32.totalorder %v2122, 2
  %vm2124 = vcmp.eq.s32.totalorder %v2122, 0
  %v2125 = vxor.u32 %v2120, 2147483648
  %v2126 = vsel %vm2124, %v2119, %v2125
  %vm2127 = vcmp.eq.s32.totalorder %v2122, 2
  %v2128 = vxor.u32 %v2119, 2147483648
  %v2129 = vsel %vm2127, %v2128, %v2120
  %v2130 = vsel %vm2123, %v2126, %v2129
  %v2131 = vsel %vm2121, nan, %v2130
  %v2132 = vand.u32 2147483647, %v1822
  %vm2133 = vcmp.le.f32.partialorder %v2132, 0.7853982
  %vm2134 = vcmp.lt.s32.totalorder %v1822, 0
  %v2135 = vand.u32 %v1822, 2139095040
  %v2136 = vshrl.u32 %v2135, 23
  %v2137 = vsub.s32 %v2136, 127
  %v2138 = vand.u32 2147483647, %v1822
  %v2139 = vand.u32 %v2138, 8388607
  %v2140 = vor.u32 %v2139, 8388608
  %v2141 = vsub.s32 0, %v2140
  %v2142 = vadd.s32 %v2137, 1
  %vm2143 = vcmp.gt.s32.totalorder %v2142, 0
  %v2144 = vsel %vm2143, %v2142, 0
  %v2145 = vshrl.u32 %v2144, 5
  %v2146 = vand.u32 %v2144, 31
  %v2147 = vsub.s32 32, %v2146
  %v2148 = vshrl.u32 683565275, %v2147
  %v2149 = vshll.u32 683565275, %v2146
  %v2150 = vshrl.u32 2475754826, %v2147
  %v2151 = vor.u32 %v2149, %v2150
  %v2152 = vshll.u32 2475754826, %v2146
  %v2153 = vshrl.u32 2131351028, %v2147
  %v2154 = vor.u32 %v2152, %v2153
  %v2155 = vshll.u32 2131351028, %v2146
  %v2156 = vshrl.u32 2102212464, %v2147
  %v2157 = vor.u32 %v2155, %v2156
  %v2158 = vshll.u32 2102212464, %v2146
  %v2159 = vshrl.u32 920167782, %v2147
  %v2160 = vor.u32 %v2158, %v2159
  %v2161 = vshll.u32 920167782, %v2146
  %v2162 = vshrl.u32 1326507024, %v2147
  %v2163 = vor.u32 %v2161, %v2162
  %vm2164 = vcmp.lt.s32.totalorder %v2145, 1
  %vm2165 = vcmp.lt.s32.totalorder %v2145, 2
  %vm2166 = vcmp.lt.s32.totalorder %v2145, 3
  %vm2167 = vcmp.lt.s32.totalorder %v2145, 4
  %v2168 = vsel %vm2164, %v2148, %v2151
  %v2169 = vsel %vm2167, %v2157, 2102212464
  %v2170 = vsel %vm2166, %v2154, %v2169
  %v2171 = vsel %vm2165, %v2168, %v2170
  %v2172 = vsel %vm2164, %v2151, %v2154
  %v2173 = vsel %vm2167, %v2160, 920167782
  %v2174 = vsel %vm2166, %v2157, %v2173
  %v2175 = vsel %vm2165, %v2172, %v2174
  %v2176 = vsel %vm2164, %v2154, %v2157
  %v2177 = vsel %vm2167, %v2163, 1326507024
  %v2178 = vsel %vm2166, %v2160, %v2177
  %v2179 = vsel %vm2165, %v2176, %v2178
  %v2180 = vshll.u32 %v2140, 8
  %v2181 = vmul.u32.u64.compose %v2180, %v2179
  %v2182 = vextract.low.u32 %v2181
  %v2183 = vextract.high.u32 %v2181
  %v2184 = vmul.u32.u64.compose %v2180, %v2175
  %v2185 = vextract.low.u32 %v2184
  %v2186 = vextract.high.u32 %v2184
  %v2187 = vmul.u32 %v2180, %v2171
  %v2188 = vadd.s32 %v2183, %v2185
  %vm2189 = vc.u32 %v2183, %v2185
  %v2190 = vadd.s32 %v2186, 1
  %v2191 = vsel %vm2189, %v2190, %v2186
  %v2192 = vadd.s32 %v2187, %v2191
  %v2193 = vadd.s32 %v2192, 536870912
  %v2194 = vshrl.u32 %v2193, 30
  %v2195 = vshll.u32 %v2194, 30
  %v2196 = vsub.s32 %v2192, %v2195
  %vm2197 = vcmp.lt.s32.totalorder %v2196, 0
  %v2198 = vsub.s32 0, %v2196
  %v2199 = vsel %vm2197, %v2198, %v2196
  %v2200 = vclz %v2199
  %v2201 = vsub.s32 %v2200, 2
  %vm2202 = vcmp.gt.s32.totalorder 0, %v2201
  %v2203 = vsel %vm2202, 0, %v2201
  %v2204 = vsub.s32 32, %v2203
  %v2205 = vshll.u32 %v2196, %v2203
  %v2206 = vshrl.u32 %v2188, %v2204
  %v2207 = vor.u32 %v2205, %v2206
  %v2208 = vsub.s32 4294967266, %v2203
  %v2209 = vadd.s32 %v2208, 127
  %v2210 = vshll.u32 %v2209, 23
  %v2211 = vor.u32 4788187, %v2210
  %v2212 = vand.u32 2147483647, %v2211
  %v2214 = vcvt.s32.f32 %v2207
  %v2215 = vmul.f32 %v2214, %v2212
  %v2216 = vxor.u32 %v2215, 2147483648
  %v2217 = vsel %vm2134, %v2216, %v2215
  %v2218 = vsub.s32 4, %v2194
  %v2219 = vsel %vm2134, %v2218, %v2194
  %v2220 = vsel %vm2133, %v1822, %v2217
  %v2221 = vsel %vm2133, 0, %v2219
  %v2222 = vcosq.f32.pop %v2220
  %v2223 = vsinq.f32.pop %v2220
  %vm2224 = vweird.f32 %v1822
  %v2225 = vand.u32 %v2221, 3
  %vm2226 = vcmp.lt.s32.totalorder %v2225, 2
  %vm2227 = vcmp.eq.s32.totalorder %v2225, 0
  %v2228 = vxor.u32 %v2223, 2147483648
  %v2229 = vsel %vm2227, %v2222, %v2228
  %vm2230 = vcmp.eq.s32.totalorder %v2225, 2
  %v2231 = vxor.u32 %v2222, 2147483648
  %v2232 = vsel %vm2230, %v2231, %v2223
  %v2233 = vsel %vm2226, %v2229, %v2232
  %v2234 = vsel %vm2224, nan, %v2233
  %v2235 = vmul.f32 %v1771, %v1925
  %v2236 = vmul.f32 %v1772, %v2028
  %v2237 = vmul.f32 %v1773, %v2131
  %v2238 = vmul.f32 %v1774, %v2234
  %v2239 = vmax.f32 %v2235, %v2237
  %v2240 = vrot.slane %v2239, 4
  %v2241 = vmax.f32 %v2239, %v2240
  %v2242 = vrot.slane %v2241, 2
  %v2243 = vmax.f32 %v2241, %v2242
  %v2244 = vrot.slane %v2243, 1
  %v2245 = vmax.f32 %v2243, %v2244
  %v2246 = vmax.f32 %v2236, %v2238
  %v2247 = vrot.slane %v2246, 4
  %v2248 = vmax.f32 %v2246, %v2247
  %v2249 = vrot.slane %v2248, 2
  %v2250 = vmax.f32 %v2248, %v2249
  %v2251 = vrot.slane %v2250, 1
  %v2252 = vmax.f32 %v2250, %v2251
  %v2253 = vmax.f32 %v2245, 0.0
  %v2254 = vmax.f32 %v2252, 0.0
  %v2257 = vcombine.low %v2253, %v2254
  %v2259 = vunpack.c.l.s4 1966171168
  %v2260 = vunpack.c.0.s8 %v2259
  %v2261 = vlaneseq
  %v2262 = vshrl.u32 %v2261, 7
  %v2263 = vsub.s32 %v2260, %v2262
  %v2264 = vrot.slane %v2257, %v2263
  %v2266 = vunpack.c.l.s4 1966171168
  %v2267 = vunpack.c.0.s8 %v2266
  %v2268 = vlaneseq
  %v2269 = vshrl.u32 %v2268, 7
  %v2270 = vsub.s32 %v2267, %v2269
  %v2271 = vrot.slane %v2264, %v2270
  %s2273 = scalar_lea.vmem %s1, 4
  %2274 = vst.msk [vmem:[%s2273] ss:$8 sm:$0x3] %vm884, %v2271
  %2275 = vst.msk [vmem:[%s2273] ss:$8 sm:$0x0] %vm884, %v2271
  %v2276 = vmul.f32 %v1812, %v1925
  %v2277 = vmul.f32 %v1813, %v2028
  %v2278 = vmul.f32 %v1814, %v2131
  %v2279 = vmul.f32 %v1815, %v2234
  %s2280 = sadd.s32 0, 20
  %s2281 = smul.addr %s2280, 8
  %s2282 = scalar_lea.vmem %s0, %s2281
  %v2283 = vld [vmem:[%s2282] sm:$0xff]
  %v2284 = vld [vmem:[%s2282 + $0x8] sm:$0xff]
  %v2285 = vld [vmem:[%s2282 + $0x10] sm:$0xff]
  %v2286 = vld [vmem:[%s2282 + $0x18] sm:$0xff]
  %v2287 = vand.u32 2147483647, %v2283
  %vm2288 = vcmp.le.f32.partialorder %v2287, 0.7853982
  %vm2289 = vcmp.lt.s32.totalorder %v2283, 0
  %v2290 = vand.u32 %v2283, 2139095040
  %v2291 = vshrl.u32 %v2290, 23
  %v2292 = vsub.s32 %v2291, 127
  %v2293 = vand.u32 2147483647, %v2283
  %v2294 = vand.u32 %v2293, 8388607
  %v2295 = vor.u32 %v2294, 8388608
  %v2296 = vsub.s32 0, %v2295
  %v2297 = vadd.s32 %v2292, 1
  %vm2298 = vcmp.gt.s32.totalorder %v2297, 0
  %v2299 = vsel %vm2298, %v2297, 0
  %v2300 = vshrl.u32 %v2299, 5
  %v2301 = vand.u32 %v2299, 31
  %v2302 = vsub.s32 32, %v2301
  %v2303 = vshrl.u32 683565275, %v2302
  %v2304 = vshll.u32 683565275, %v2301
  %v2305 = vshrl.u32 2475754826, %v2302
  %v2306 = vor.u32 %v2304, %v2305
  %v2307 = vshll.u32 2475754826, %v2301
  %v2308 = vshrl.u32 2131351028, %v2302
  %v2309 = vor.u32 %v2307, %v2308
  %v2310 = vshll.u32 2131351028, %v2301
  %v2311 = vshrl.u32 2102212464, %v2302
  %v2312 = vor.u32 %v2310, %v2311
  %v2313 = vshll.u32 2102212464, %v2301
  %v2314 = vshrl.u32 920167782, %v2302
  %v2315 = vor.u32 %v2313, %v2314
  %v2316 = vshll.u32 920167782, %v2301
  %v2317 = vshrl.u32 1326507024, %v2302
  %v2318 = vor.u32 %v2316, %v2317
  %vm2319 = vcmp.lt.s32.totalorder %v2300, 1
  %vm2320 = vcmp.lt.s32.totalorder %v2300, 2
  %vm2321 = vcmp.lt.s32.totalorder %v2300, 3
  %vm2322 = vcmp.lt.s32.totalorder %v2300, 4
  %v2323 = vsel %vm2319, %v2303, %v2306
  %v2324 = vsel %vm2322, %v2312, 2102212464
  %v2325 = vsel %vm2321, %v2309, %v2324
  %v2326 = vsel %vm2320, %v2323, %v2325
  %v2327 = vsel %vm2319, %v2306, %v2309
  %v2328 = vsel %vm2322, %v2315, 920167782
  %v2329 = vsel %vm2321, %v2312, %v2328
  %v2330 = vsel %vm2320, %v2327, %v2329
  %v2331 = vsel %vm2319, %v2309, %v2312
  %v2332 = vsel %vm2322, %v2318, 1326507024
  %v2333 = vsel %vm2321, %v2315, %v2332
  %v2334 = vsel %vm2320, %v2331, %v2333
  %v2335 = vshll.u32 %v2295, 8
  %v2336 = vmul.u32.u64.compose %v2335, %v2334
  %v2337 = vextract.low.u32 %v2336
  %v2338 = vextract.high.u32 %v2336
  %v2339 = vmul.u32.u64.compose %v2335, %v2330
  %v2340 = vextract.low.u32 %v2339
  %v2341 = vextract.high.u32 %v2339
  %v2342 = vmul.u32 %v2335, %v2326
  %v2343 = vadd.s32 %v2338, %v2340
  %vm2344 = vc.u32 %v2338, %v2340
  %v2345 = vadd.s32 %v2341, 1
  %v2346 = vsel %vm2344, %v2345, %v2341
  %v2347 = vadd.s32 %v2342, %v2346
  %v2348 = vadd.s32 %v2347, 536870912
  %v2349 = vshrl.u32 %v2348, 30
  %v2350 = vshll.u32 %v2349, 30
  %v2351 = vsub.s32 %v2347, %v2350
  %vm2352 = vcmp.lt.s32.totalorder %v2351, 0
  %v2353 = vsub.s32 0, %v2351
  %v2354 = vsel %vm2352, %v2353, %v2351
  %v2355 = vclz %v2354
  %v2356 = vsub.s32 %v2355, 2
  %vm2357 = vcmp.gt.s32.totalorder 0, %v2356
  %v2358 = vsel %vm2357, 0, %v2356
  %v2359 = vsub.s32 32, %v2358
  %v2360 = vshll.u32 %v2351, %v2358
  %v2361 = vshrl.u32 %v2343, %v2359
  %v2362 = vor.u32 %v2360, %v2361
  %v2363 = vsub.s32 4294967266, %v2358
  %v2364 = vadd.s32 %v2363, 127
  %v2365 = vshll.u32 %v2364, 23
  %v2366 = vor.u32 4788187, %v2365
  %v2367 = vand.u32 2147483647, %v2366
  %v2369 = vcvt.s32.f32 %v2362
  %v2370 = vmul.f32 %v2369, %v2367
  %v2371 = vxor.u32 %v2370, 2147483648
  %v2372 = vsel %vm2289, %v2371, %v2370
  %v2373 = vsub.s32 4, %v2349
  %v2374 = vsel %vm2289, %v2373, %v2349
  %v2375 = vsel %vm2288, %v2283, %v2372
  %v2376 = vsel %vm2288, 0, %v2374
  %v2377 = vcosq.f32.pop %v2375
  %v2378 = vsinq.f32.pop %v2375
  %vm2379 = vweird.f32 %v2283
  %v2380 = vand.u32 %v2376, 3
  %vm2381 = vcmp.lt.s32.totalorder %v2380, 2
  %vm2382 = vcmp.eq.s32.totalorder %v2380, 0
  %v2383 = vxor.u32 %v2378, 2147483648
  %v2384 = vsel %vm2382, %v2377, %v2383
  %vm2385 = vcmp.eq.s32.totalorder %v2380, 2
  %v2386 = vxor.u32 %v2377, 2147483648
  %v2387 = vsel %vm2385, %v2386, %v2378
  %v2388 = vsel %vm2381, %v2384, %v2387
  %v2389 = vsel %vm2379, nan, %v2388
  %v2390 = vand.u32 2147483647, %v2284
  %vm2391 = vcmp.le.f32.partialorder %v2390, 0.7853982
  %vm2392 = vcmp.lt.s32.totalorder %v2284, 0
  %v2393 = vand.u32 %v2284, 2139095040
  %v2394 = vshrl.u32 %v2393, 23
  %v2395 = vsub.s32 %v2394, 127
  %v2396 = vand.u32 2147483647, %v2284
  %v2397 = vand.u32 %v2396, 8388607
  %v2398 = vor.u32 %v2397, 8388608
  %v2399 = vsub.s32 0, %v2398
  %v2400 = vadd.s32 %v2395, 1
  %vm2401 = vcmp.gt.s32.totalorder %v2400, 0
  %v2402 = vsel %vm2401, %v2400, 0
  %v2403 = vshrl.u32 %v2402, 5
  %v2404 = vand.u32 %v2402, 31
  %v2405 = vsub.s32 32, %v2404
  %v2406 = vshrl.u32 683565275, %v2405
  %v2407 = vshll.u32 683565275, %v2404
  %v2408 = vshrl.u32 2475754826, %v2405
  %v2409 = vor.u32 %v2407, %v2408
  %v2410 = vshll.u32 2475754826, %v2404
  %v2411 = vshrl.u32 2131351028, %v2405
  %v2412 = vor.u32 %v2410, %v2411
  %v2413 = vshll.u32 2131351028, %v2404
  %v2414 = vshrl.u32 2102212464, %v2405
  %v2415 = vor.u32 %v2413, %v2414
  %v2416 = vshll.u32 2102212464, %v2404
  %v2417 = vshrl.u32 920167782, %v2405
  %v2418 = vor.u32 %v2416, %v2417
  %v2419 = vshll.u32 920167782, %v2404
  %v2420 = vshrl.u32 1326507024, %v2405
  %v2421 = vor.u32 %v2419, %v2420
  %vm2422 = vcmp.lt.s32.totalorder %v2403, 1
  %vm2423 = vcmp.lt.s32.totalorder %v2403, 2
  %vm2424 = vcmp.lt.s32.totalorder %v2403, 3
  %vm2425 = vcmp.lt.s32.totalorder %v2403, 4
  %v2426 = vsel %vm2422, %v2406, %v2409
  %v2427 = vsel %vm2425, %v2415, 2102212464
  %v2428 = vsel %vm2424, %v2412, %v2427
  %v2429 = vsel %vm2423, %v2426, %v2428
  %v2430 = vsel %vm2422, %v2409, %v2412
  %v2431 = vsel %vm2425, %v2418, 920167782
  %v2432 = vsel %vm2424, %v2415, %v2431
  %v2433 = vsel %vm2423, %v2430, %v2432
  %v2434 = vsel %vm2422, %v2412, %v2415
  %v2435 = vsel %vm2425, %v2421, 1326507024
  %v2436 = vsel %vm2424, %v2418, %v2435
  %v2437 = vsel %vm2423, %v2434, %v2436
  %v2438 = vshll.u32 %v2398, 8
  %v2439 = vmul.u32.u64.compose %v2438, %v2437
  %v2440 = vextract.low.u32 %v2439
  %v2441 = vextract.high.u32 %v2439
  %v2442 = vmul.u32.u64.compose %v2438, %v2433
  %v2443 = vextract.low.u32 %v2442
  %v2444 = vextract.high.u32 %v2442
  %v2445 = vmul.u32 %v2438, %v2429
  %v2446 = vadd.s32 %v2441, %v2443
  %vm2447 = vc.u32 %v2441, %v2443
  %v2448 = vadd.s32 %v2444, 1
  %v2449 = vsel %vm2447, %v2448, %v2444
  %v2450 = vadd.s32 %v2445, %v2449
  %v2451 = vadd.s32 %v2450, 536870912
  %v2452 = vshrl.u32 %v2451, 30
  %v2453 = vshll.u32 %v2452, 30
  %v2454 = vsub.s32 %v2450, %v2453
  %vm2455 = vcmp.lt.s32.totalorder %v2454, 0
  %v2456 = vsub.s32 0, %v2454
  %v2457 = vsel %vm2455, %v2456, %v2454
  %v2458 = vclz %v2457
  %v2459 = vsub.s32 %v2458, 2
  %vm2460 = vcmp.gt.s32.totalorder 0, %v2459
  %v2461 = vsel %vm2460, 0, %v2459
  %v2462 = vsub.s32 32, %v2461
  %v2463 = vshll.u32 %v2454, %v2461
  %v2464 = vshrl.u32 %v2446, %v2462
  %v2465 = vor.u32 %v2463, %v2464
  %v2466 = vsub.s32 4294967266, %v2461
  %v2467 = vadd.s32 %v2466, 127
  %v2468 = vshll.u32 %v2467, 23
  %v2469 = vor.u32 4788187, %v2468
  %v2470 = vand.u32 2147483647, %v2469
  %v2472 = vcvt.s32.f32 %v2465
  %v2473 = vmul.f32 %v2472, %v2470
  %v2474 = vxor.u32 %v2473, 2147483648
  %v2475 = vsel %vm2392, %v2474, %v2473
  %v2476 = vsub.s32 4, %v2452
  %v2477 = vsel %vm2392, %v2476, %v2452
  %v2478 = vsel %vm2391, %v2284, %v2475
  %v2479 = vsel %vm2391, 0, %v2477
  %v2480 = vcosq.f32.pop %v2478
  %v2481 = vsinq.f32.pop %v2478
  %vm2482 = vweird.f32 %v2284
  %v2483 = vand.u32 %v2479, 3
  %vm2484 = vcmp.lt.s32.totalorder %v2483, 2
  %vm2485 = vcmp.eq.s32.totalorder %v2483, 0
  %v2486 = vxor.u32 %v2481, 2147483648
  %v2487 = vsel %vm2485, %v2480, %v2486
  %vm2488 = vcmp.eq.s32.totalorder %v2483, 2
  %v2489 = vxor.u32 %v2480, 2147483648
  %v2490 = vsel %vm2488, %v2489, %v2481
  %v2491 = vsel %vm2484, %v2487, %v2490
  %v2492 = vsel %vm2482, nan, %v2491
  %v2493 = vand.u32 2147483647, %v2285
  %vm2494 = vcmp.le.f32.partialorder %v2493, 0.7853982
  %vm2495 = vcmp.lt.s32.totalorder %v2285, 0
  %v2496 = vand.u32 %v2285, 2139095040
  %v2497 = vshrl.u32 %v2496, 23
  %v2498 = vsub.s32 %v2497, 127
  %v2499 = vand.u32 2147483647, %v2285
  %v2500 = vand.u32 %v2499, 8388607
  %v2501 = vor.u32 %v2500, 8388608
  %v2502 = vsub.s32 0, %v2501
  %v2503 = vadd.s32 %v2498, 1
  %vm2504 = vcmp.gt.s32.totalorder %v2503, 0
  %v2505 = vsel %vm2504, %v2503, 0
  %v2506 = vshrl.u32 %v2505, 5
  %v2507 = vand.u32 %v2505, 31
  %v2508 = vsub.s32 32, %v2507
  %v2509 = vshrl.u32 683565275, %v2508
  %v2510 = vshll.u32 683565275, %v2507
  %v2511 = vshrl.u32 2475754826, %v2508
  %v2512 = vor.u32 %v2510, %v2511
  %v2513 = vshll.u32 2475754826, %v2507
  %v2514 = vshrl.u32 2131351028, %v2508
  %v2515 = vor.u32 %v2513, %v2514
  %v2516 = vshll.u32 2131351028, %v2507
  %v2517 = vshrl.u32 2102212464, %v2508
  %v2518 = vor.u32 %v2516, %v2517
  %v2519 = vshll.u32 2102212464, %v2507
  %v2520 = vshrl.u32 920167782, %v2508
  %v2521 = vor.u32 %v2519, %v2520
  %v2522 = vshll.u32 920167782, %v2507
  %v2523 = vshrl.u32 1326507024, %v2508
  %v2524 = vor.u32 %v2522, %v2523
  %vm2525 = vcmp.lt.s32.totalorder %v2506, 1
  %vm2526 = vcmp.lt.s32.totalorder %v2506, 2
  %vm2527 = vcmp.lt.s32.totalorder %v2506, 3
  %vm2528 = vcmp.lt.s32.totalorder %v2506, 4
  %v2529 = vsel %vm2525, %v2509, %v2512
  %v2530 = vsel %vm2528, %v2518, 2102212464
  %v2531 = vsel %vm2527, %v2515, %v2530
  %v2532 = vsel %vm2526, %v2529, %v2531
  %v2533 = vsel %vm2525, %v2512, %v2515
  %v2534 = vsel %vm2528, %v2521, 920167782
  %v2535 = vsel %vm2527, %v2518, %v2534
  %v2536 = vsel %vm2526, %v2533, %v2535
  %v2537 = vsel %vm2525, %v2515, %v2518
  %v2538 = vsel %vm2528, %v2524, 1326507024
  %v2539 = vsel %vm2527, %v2521, %v2538
  %v2540 = vsel %vm2526, %v2537, %v2539
  %v2541 = vshll.u32 %v2501, 8
  %v2542 = vmul.u32.u64.compose %v2541, %v2540
  %v2543 = vextract.low.u32 %v2542
  %v2544 = vextract.high.u32 %v2542
  %v2545 = vmul.u32.u64.compose %v2541, %v2536
  %v2546 = vextract.low.u32 %v2545
  %v2547 = vextract.high.u32 %v2545
  %v2548 = vmul.u32 %v2541, %v2532
  %v2549 = vadd.s32 %v2544, %v2546
  %vm2550 = vc.u32 %v2544, %v2546
  %v2551 = vadd.s32 %v2547, 1
  %v2552 = vsel %vm2550, %v2551, %v2547
  %v2553 = vadd.s32 %v2548, %v2552
  %v2554 = vadd.s32 %v2553, 536870912
  %v2555 = vshrl.u32 %v2554, 30
  %v2556 = vshll.u32 %v2555, 30
  %v2557 = vsub.s32 %v2553, %v2556
  %vm2558 = vcmp.lt.s32.totalorder %v2557, 0
  %v2559 = vsub.s32 0, %v2557
  %v2560 = vsel %vm2558, %v2559, %v2557
  %v2561 = vclz %v2560
  %v2562 = vsub.s32 %v2561, 2
  %vm2563 = vcmp.gt.s32.totalorder 0, %v2562
  %v2564 = vsel %vm2563, 0, %v2562
  %v2565 = vsub.s32 32, %v2564
  %v2566 = vshll.u32 %v2557, %v2564
  %v2567 = vshrl.u32 %v2549, %v2565
  %v2568 = vor.u32 %v2566, %v2567
  %v2569 = vsub.s32 4294967266, %v2564
  %v2570 = vadd.s32 %v2569, 127
  %v2571 = vshll.u32 %v2570, 23
  %v2572 = vor.u32 4788187, %v2571
  %v2573 = vand.u32 2147483647, %v2572
  %v2575 = vcvt.s32.f32 %v2568
  %v2576 = vmul.f32 %v2575, %v2573
  %v2577 = vxor.u32 %v2576, 2147483648
  %v2578 = vsel %vm2495, %v2577, %v2576
  %v2579 = vsub.s32 4, %v2555
  %v2580 = vsel %vm2495, %v2579, %v2555
  %v2581 = vsel %vm2494, %v2285, %v2578
  %v2582 = vsel %vm2494, 0, %v2580
  %v2583 = vcosq.f32.pop %v2581
  %v2584 = vsinq.f32.pop %v2581
  %vm2585 = vweird.f32 %v2285
  %v2586 = vand.u32 %v2582, 3
  %vm2587 = vcmp.lt.s32.totalorder %v2586, 2
  %vm2588 = vcmp.eq.s32.totalorder %v2586, 0
  %v2589 = vxor.u32 %v2584, 2147483648
  %v2590 = vsel %vm2588, %v2583, %v2589
  %vm2591 = vcmp.eq.s32.totalorder %v2586, 2
  %v2592 = vxor.u32 %v2583, 2147483648
  %v2593 = vsel %vm2591, %v2592, %v2584
  %v2594 = vsel %vm2587, %v2590, %v2593
  %v2595 = vsel %vm2585, nan, %v2594
  %v2596 = vand.u32 2147483647, %v2286
  %vm2597 = vcmp.le.f32.partialorder %v2596, 0.7853982
  %vm2598 = vcmp.lt.s32.totalorder %v2286, 0
  %v2599 = vand.u32 %v2286, 2139095040
  %v2600 = vshrl.u32 %v2599, 23
  %v2601 = vsub.s32 %v2600, 127
  %v2602 = vand.u32 2147483647, %v2286
  %v2603 = vand.u32 %v2602, 8388607
  %v2604 = vor.u32 %v2603, 8388608
  %v2605 = vsub.s32 0, %v2604
  %v2606 = vadd.s32 %v2601, 1
  %vm2607 = vcmp.gt.s32.totalorder %v2606, 0
  %v2608 = vsel %vm2607, %v2606, 0
  %v2609 = vshrl.u32 %v2608, 5
  %v2610 = vand.u32 %v2608, 31
  %v2611 = vsub.s32 32, %v2610
  %v2612 = vshrl.u32 683565275, %v2611
  %v2613 = vshll.u32 683565275, %v2610
  %v2614 = vshrl.u32 2475754826, %v2611
  %v2615 = vor.u32 %v2613, %v2614
  %v2616 = vshll.u32 2475754826, %v2610
  %v2617 = vshrl.u32 2131351028, %v2611
  %v2618 = vor.u32 %v2616, %v2617
  %v2619 = vshll.u32 2131351028, %v2610
  %v2620 = vshrl.u32 2102212464, %v2611
  %v2621 = vor.u32 %v2619, %v2620
  %v2622 = vshll.u32 2102212464, %v2610
  %v2623 = vshrl.u32 920167782, %v2611
  %v2624 = vor.u32 %v2622, %v2623
  %v2625 = vshll.u32 920167782, %v2610
  %v2626 = vshrl.u32 1326507024, %v2611
  %v2627 = vor.u32 %v2625, %v2626
  %vm2628 = vcmp.lt.s32.totalorder %v2609, 1
  %vm2629 = vcmp.lt.s32.totalorder %v2609, 2
  %vm2630 = vcmp.lt.s32.totalorder %v2609, 3
  %vm2631 = vcmp.lt.s32.totalorder %v2609, 4
  %v2632 = vsel %vm2628, %v2612, %v2615
  %v2633 = vsel %vm2631, %v2621, 2102212464
  %v2634 = vsel %vm2630, %v2618, %v2633
  %v2635 = vsel %vm2629, %v2632, %v2634
  %v2636 = vsel %vm2628, %v2615, %v2618
  %v2637 = vsel %vm2631, %v2624, 920167782
  %v2638 = vsel %vm2630, %v2621, %v2637
  %v2639 = vsel %vm2629, %v2636, %v2638
  %v2640 = vsel %vm2628, %v2618, %v2621
  %v2641 = vsel %vm2631, %v2627, 1326507024
  %v2642 = vsel %vm2630, %v2624, %v2641
  %v2643 = vsel %vm2629, %v2640, %v2642
  %v2644 = vshll.u32 %v2604, 8
  %v2645 = vmul.u32.u64.compose %v2644, %v2643
  %v2646 = vextract.low.u32 %v2645
  %v2647 = vextract.high.u32 %v2645
  %v2648 = vmul.u32.u64.compose %v2644, %v2639
  %v2649 = vextract.low.u32 %v2648
  %v2650 = vextract.high.u32 %v2648
  %v2651 = vmul.u32 %v2644, %v2635
  %v2652 = vadd.s32 %v2647, %v2649
  %vm2653 = vc.u32 %v2647, %v2649
  %v2654 = vadd.s32 %v2650, 1
  %v2655 = vsel %vm2653, %v2654, %v2650
  %v2656 = vadd.s32 %v2651, %v2655
  %v2657 = vadd.s32 %v2656, 536870912
  %v2658 = vshrl.u32 %v2657, 30
  %v2659 = vshll.u32 %v2658, 30
  %v2660 = vsub.s32 %v2656, %v2659
  %vm2661 = vcmp.lt.s32.totalorder %v2660, 0
  %v2662 = vsub.s32 0, %v2660
  %v2663 = vsel %vm2661, %v2662, %v2660
  %v2664 = vclz %v2663
  %v2665 = vsub.s32 %v2664, 2
  %vm2666 = vcmp.gt.s32.totalorder 0, %v2665
  %v2667 = vsel %vm2666, 0, %v2665
  %v2668 = vsub.s32 32, %v2667
  %v2669 = vshll.u32 %v2660, %v2667
  %v2670 = vshrl.u32 %v2652, %v2668
  %v2671 = vor.u32 %v2669, %v2670
  %v2672 = vsub.s32 4294967266, %v2667
  %v2673 = vadd.s32 %v2672, 127
  %v2674 = vshll.u32 %v2673, 23
  %v2675 = vor.u32 4788187, %v2674
  %v2676 = vand.u32 2147483647, %v2675
  %v2678 = vcvt.s32.f32 %v2671
  %v2679 = vmul.f32 %v2678, %v2676
  %v2680 = vxor.u32 %v2679, 2147483648
  %v2681 = vsel %vm2598, %v2680, %v2679
  %v2682 = vsub.s32 4, %v2658
  %v2683 = vsel %vm2598, %v2682, %v2658
  %v2684 = vsel %vm2597, %v2286, %v2681
  %v2685 = vsel %vm2597, 0, %v2683
  %v2686 = vcosq.f32.pop %v2684
  %v2687 = vsinq.f32.pop %v2684
  %vm2688 = vweird.f32 %v2286
  %v2689 = vand.u32 %v2685, 3
  %vm2690 = vcmp.lt.s32.totalorder %v2689, 2
  %vm2691 = vcmp.eq.s32.totalorder %v2689, 0
  %v2692 = vxor.u32 %v2687, 2147483648
  %v2693 = vsel %vm2691, %v2686, %v2692
  %vm2694 = vcmp.eq.s32.totalorder %v2689, 2
  %v2695 = vxor.u32 %v2686, 2147483648
  %v2696 = vsel %vm2694, %v2695, %v2687
  %v2697 = vsel %vm2690, %v2693, %v2696
  %v2698 = vsel %vm2688, nan, %v2697
  %v2699 = vmul.f32 %v2235, %v2389
  %v2700 = vmul.f32 %v2236, %v2492
  %v2701 = vmul.f32 %v2237, %v2595
  %v2702 = vmul.f32 %v2238, %v2698
  %v2703 = vmax.f32 %v2699, %v2701
  %v2704 = vrot.slane %v2703, 4
  %v2705 = vmax.f32 %v2703, %v2704
  %v2706 = vrot.slane %v2705, 2
  %v2707 = vmax.f32 %v2705, %v2706
  %v2708 = vrot.slane %v2707, 1
  %v2709 = vmax.f32 %v2707, %v2708
  %v2710 = vmax.f32 %v2700, %v2702
  %v2711 = vrot.slane %v2710, 4
  %v2712 = vmax.f32 %v2710, %v2711
  %v2713 = vrot.slane %v2712, 2
  %v2714 = vmax.f32 %v2712, %v2713
  %v2715 = vrot.slane %v2714, 1
  %v2716 = vmax.f32 %v2714, %v2715
  %v2717 = vmax.f32 %v2709, 0.0
  %v2718 = vmax.f32 %v2716, 0.0
  %v2721 = vcombine.low %v2717, %v2718
  %v2723 = vunpack.c.l.s4 1966171168
  %v2724 = vunpack.c.0.s8 %v2723
  %v2725 = vlaneseq
  %v2726 = vshrl.u32 %v2725, 7
  %v2727 = vsub.s32 %v2724, %v2726
  %v2728 = vrot.slane %v2721, %v2727
  %v2730 = vunpack.c.l.s4 1966171168
  %v2731 = vunpack.c.0.s8 %v2730
  %v2732 = vlaneseq
  %v2733 = vshrl.u32 %v2732, 7
  %v2734 = vsub.s32 %v2731, %v2733
  %v2735 = vrot.slane %v2728, %v2734
  %s2737 = scalar_lea.vmem %s1, 5
  %2738 = vst.msk [vmem:[%s2737] ss:$8 sm:$0x3] %vm884, %v2735
  %2739 = vst.msk [vmem:[%s2737] ss:$8 sm:$0x0] %vm884, %v2735
  %v2740 = vmul.f32 %v2276, %v2389
  %v2741 = vmul.f32 %v2277, %v2492
  %v2742 = vmul.f32 %v2278, %v2595
  %v2743 = vmul.f32 %v2279, %v2698
  %s2744 = sadd.s32 0, 24
  %s2745 = smul.addr %s2744, 8
  %s2746 = scalar_lea.vmem %s0, %s2745
  %v2747 = vld [vmem:[%s2746] sm:$0xff]
  %v2748 = vld [vmem:[%s2746 + $0x8] sm:$0xff]
  %v2749 = vld [vmem:[%s2746 + $0x10] sm:$0xff]
  %v2750 = vld [vmem:[%s2746 + $0x18] sm:$0xff]
  %v2751 = vand.u32 2147483647, %v2747
  %vm2752 = vcmp.le.f32.partialorder %v2751, 0.7853982
  %vm2753 = vcmp.lt.s32.totalorder %v2747, 0
  %v2754 = vand.u32 %v2747, 2139095040
  %v2755 = vshrl.u32 %v2754, 23
  %v2756 = vsub.s32 %v2755, 127
  %v2757 = vand.u32 2147483647, %v2747
  %v2758 = vand.u32 %v2757, 8388607
  %v2759 = vor.u32 %v2758, 8388608
  %v2760 = vsub.s32 0, %v2759
  %v2761 = vadd.s32 %v2756, 1
  %vm2762 = vcmp.gt.s32.totalorder %v2761, 0
  %v2763 = vsel %vm2762, %v2761, 0
  %v2764 = vshrl.u32 %v2763, 5
  %v2765 = vand.u32 %v2763, 31
  %v2766 = vsub.s32 32, %v2765
  %v2767 = vshrl.u32 683565275, %v2766
  %v2768 = vshll.u32 683565275, %v2765
  %v2769 = vshrl.u32 2475754826, %v2766
  %v2770 = vor.u32 %v2768, %v2769
  %v2771 = vshll.u32 2475754826, %v2765
  %v2772 = vshrl.u32 2131351028, %v2766
  %v2773 = vor.u32 %v2771, %v2772
  %v2774 = vshll.u32 2131351028, %v2765
  %v2775 = vshrl.u32 2102212464, %v2766
  %v2776 = vor.u32 %v2774, %v2775
  %v2777 = vshll.u32 2102212464, %v2765
  %v2778 = vshrl.u32 920167782, %v2766
  %v2779 = vor.u32 %v2777, %v2778
  %v2780 = vshll.u32 920167782, %v2765
  %v2781 = vshrl.u32 1326507024, %v2766
  %v2782 = vor.u32 %v2780, %v2781
  %vm2783 = vcmp.lt.s32.totalorder %v2764, 1
  %vm2784 = vcmp.lt.s32.totalorder %v2764, 2
  %vm2785 = vcmp.lt.s32.totalorder %v2764, 3
  %vm2786 = vcmp.lt.s32.totalorder %v2764, 4
  %v2787 = vsel %vm2783, %v2767, %v2770
  %v2788 = vsel %vm2786, %v2776, 2102212464
  %v2789 = vsel %vm2785, %v2773, %v2788
  %v2790 = vsel %vm2784, %v2787, %v2789
  %v2791 = vsel %vm2783, %v2770, %v2773
  %v2792 = vsel %vm2786, %v2779, 920167782
  %v2793 = vsel %vm2785, %v2776, %v2792
  %v2794 = vsel %vm2784, %v2791, %v2793
  %v2795 = vsel %vm2783, %v2773, %v2776
  %v2796 = vsel %vm2786, %v2782, 1326507024
  %v2797 = vsel %vm2785, %v2779, %v2796
  %v2798 = vsel %vm2784, %v2795, %v2797
  %v2799 = vshll.u32 %v2759, 8
  %v2800 = vmul.u32.u64.compose %v2799, %v2798
  %v2801 = vextract.low.u32 %v2800
  %v2802 = vextract.high.u32 %v2800
  %v2803 = vmul.u32.u64.compose %v2799, %v2794
  %v2804 = vextract.low.u32 %v2803
  %v2805 = vextract.high.u32 %v2803
  %v2806 = vmul.u32 %v2799, %v2790
  %v2807 = vadd.s32 %v2802, %v2804
  %vm2808 = vc.u32 %v2802, %v2804
  %v2809 = vadd.s32 %v2805, 1
  %v2810 = vsel %vm2808, %v2809, %v2805
  %v2811 = vadd.s32 %v2806, %v2810
  %v2812 = vadd.s32 %v2811, 536870912
  %v2813 = vshrl.u32 %v2812, 30
  %v2814 = vshll.u32 %v2813, 30
  %v2815 = vsub.s32 %v2811, %v2814
  %vm2816 = vcmp.lt.s32.totalorder %v2815, 0
  %v2817 = vsub.s32 0, %v2815
  %v2818 = vsel %vm2816, %v2817, %v2815
  %v2819 = vclz %v2818
  %v2820 = vsub.s32 %v2819, 2
  %vm2821 = vcmp.gt.s32.totalorder 0, %v2820
  %v2822 = vsel %vm2821, 0, %v2820
  %v2823 = vsub.s32 32, %v2822
  %v2824 = vshll.u32 %v2815, %v2822
  %v2825 = vshrl.u32 %v2807, %v2823
  %v2826 = vor.u32 %v2824, %v2825
  %v2827 = vsub.s32 4294967266, %v2822
  %v2828 = vadd.s32 %v2827, 127
  %v2829 = vshll.u32 %v2828, 23
  %v2830 = vor.u32 4788187, %v2829
  %v2831 = vand.u32 2147483647, %v2830
  %v2833 = vcvt.s32.f32 %v2826
  %v2834 = vmul.f32 %v2833, %v2831
  %v2835 = vxor.u32 %v2834, 2147483648
  %v2836 = vsel %vm2753, %v2835, %v2834
  %v2837 = vsub.s32 4, %v2813
  %v2838 = vsel %vm2753, %v2837, %v2813
  %v2839 = vsel %vm2752, %v2747, %v2836
  %v2840 = vsel %vm2752, 0, %v2838
  %v2841 = vcosq.f32.pop %v2839
  %v2842 = vsinq.f32.pop %v2839
  %vm2843 = vweird.f32 %v2747
  %v2844 = vand.u32 %v2840, 3
  %vm2845 = vcmp.lt.s32.totalorder %v2844, 2
  %vm2846 = vcmp.eq.s32.totalorder %v2844, 0
  %v2847 = vxor.u32 %v2842, 2147483648
  %v2848 = vsel %vm2846, %v2841, %v2847
  %vm2849 = vcmp.eq.s32.totalorder %v2844, 2
  %v2850 = vxor.u32 %v2841, 2147483648
  %v2851 = vsel %vm2849, %v2850, %v2842
  %v2852 = vsel %vm2845, %v2848, %v2851
  %v2853 = vsel %vm2843, nan, %v2852
  %v2854 = vand.u32 2147483647, %v2748
  %vm2855 = vcmp.le.f32.partialorder %v2854, 0.7853982
  %vm2856 = vcmp.lt.s32.totalorder %v2748, 0
  %v2857 = vand.u32 %v2748, 2139095040
  %v2858 = vshrl.u32 %v2857, 23
  %v2859 = vsub.s32 %v2858, 127
  %v2860 = vand.u32 2147483647, %v2748
  %v2861 = vand.u32 %v2860, 8388607
  %v2862 = vor.u32 %v2861, 8388608
  %v2863 = vsub.s32 0, %v2862
  %v2864 = vadd.s32 %v2859, 1
  %vm2865 = vcmp.gt.s32.totalorder %v2864, 0
  %v2866 = vsel %vm2865, %v2864, 0
  %v2867 = vshrl.u32 %v2866, 5
  %v2868 = vand.u32 %v2866, 31
  %v2869 = vsub.s32 32, %v2868
  %v2870 = vshrl.u32 683565275, %v2869
  %v2871 = vshll.u32 683565275, %v2868
  %v2872 = vshrl.u32 2475754826, %v2869
  %v2873 = vor.u32 %v2871, %v2872
  %v2874 = vshll.u32 2475754826, %v2868
  %v2875 = vshrl.u32 2131351028, %v2869
  %v2876 = vor.u32 %v2874, %v2875
  %v2877 = vshll.u32 2131351028, %v2868
  %v2878 = vshrl.u32 2102212464, %v2869
  %v2879 = vor.u32 %v2877, %v2878
  %v2880 = vshll.u32 2102212464, %v2868
  %v2881 = vshrl.u32 920167782, %v2869
  %v2882 = vor.u32 %v2880, %v2881
  %v2883 = vshll.u32 920167782, %v2868
  %v2884 = vshrl.u32 1326507024, %v2869
  %v2885 = vor.u32 %v2883, %v2884
  %vm2886 = vcmp.lt.s32.totalorder %v2867, 1
  %vm2887 = vcmp.lt.s32.totalorder %v2867, 2
  %vm2888 = vcmp.lt.s32.totalorder %v2867, 3
  %vm2889 = vcmp.lt.s32.totalorder %v2867, 4
  %v2890 = vsel %vm2886, %v2870, %v2873
  %v2891 = vsel %vm2889, %v2879, 2102212464
  %v2892 = vsel %vm2888, %v2876, %v2891
  %v2893 = vsel %vm2887, %v2890, %v2892
  %v2894 = vsel %vm2886, %v2873, %v2876
  %v2895 = vsel %vm2889, %v2882, 920167782
  %v2896 = vsel %vm2888, %v2879, %v2895
  %v2897 = vsel %vm2887, %v2894, %v2896
  %v2898 = vsel %vm2886, %v2876, %v2879
  %v2899 = vsel %vm2889, %v2885, 1326507024
  %v2900 = vsel %vm2888, %v2882, %v2899
  %v2901 = vsel %vm2887, %v2898, %v2900
  %v2902 = vshll.u32 %v2862, 8
  %v2903 = vmul.u32.u64.compose %v2902, %v2901
  %v2904 = vextract.low.u32 %v2903
  %v2905 = vextract.high.u32 %v2903
  %v2906 = vmul.u32.u64.compose %v2902, %v2897
  %v2907 = vextract.low.u32 %v2906
  %v2908 = vextract.high.u32 %v2906
  %v2909 = vmul.u32 %v2902, %v2893
  %v2910 = vadd.s32 %v2905, %v2907
  %vm2911 = vc.u32 %v2905, %v2907
  %v2912 = vadd.s32 %v2908, 1
  %v2913 = vsel %vm2911, %v2912, %v2908
  %v2914 = vadd.s32 %v2909, %v2913
  %v2915 = vadd.s32 %v2914, 536870912
  %v2916 = vshrl.u32 %v2915, 30
  %v2917 = vshll.u32 %v2916, 30
  %v2918 = vsub.s32 %v2914, %v2917
  %vm2919 = vcmp.lt.s32.totalorder %v2918, 0
  %v2920 = vsub.s32 0, %v2918
  %v2921 = vsel %vm2919, %v2920, %v2918
  %v2922 = vclz %v2921
  %v2923 = vsub.s32 %v2922, 2
  %vm2924 = vcmp.gt.s32.totalorder 0, %v2923
  %v2925 = vsel %vm2924, 0, %v2923
  %v2926 = vsub.s32 32, %v2925
  %v2927 = vshll.u32 %v2918, %v2925
  %v2928 = vshrl.u32 %v2910, %v2926
  %v2929 = vor.u32 %v2927, %v2928
  %v2930 = vsub.s32 4294967266, %v2925
  %v2931 = vadd.s32 %v2930, 127
  %v2932 = vshll.u32 %v2931, 23
  %v2933 = vor.u32 4788187, %v2932
  %v2934 = vand.u32 2147483647, %v2933
  %v2936 = vcvt.s32.f32 %v2929
  %v2937 = vmul.f32 %v2936, %v2934
  %v2938 = vxor.u32 %v2937, 2147483648
  %v2939 = vsel %vm2856, %v2938, %v2937
  %v2940 = vsub.s32 4, %v2916
  %v2941 = vsel %vm2856, %v2940, %v2916
  %v2942 = vsel %vm2855, %v2748, %v2939
  %v2943 = vsel %vm2855, 0, %v2941
  %v2944 = vcosq.f32.pop %v2942
  %v2945 = vsinq.f32.pop %v2942
  %vm2946 = vweird.f32 %v2748
  %v2947 = vand.u32 %v2943, 3
  %vm2948 = vcmp.lt.s32.totalorder %v2947, 2
  %vm2949 = vcmp.eq.s32.totalorder %v2947, 0
  %v2950 = vxor.u32 %v2945, 2147483648
  %v2951 = vsel %vm2949, %v2944, %v2950
  %vm2952 = vcmp.eq.s32.totalorder %v2947, 2
  %v2953 = vxor.u32 %v2944, 2147483648
  %v2954 = vsel %vm2952, %v2953, %v2945
  %v2955 = vsel %vm2948, %v2951, %v2954
  %v2956 = vsel %vm2946, nan, %v2955
  %v2957 = vand.u32 2147483647, %v2749
  %vm2958 = vcmp.le.f32.partialorder %v2957, 0.7853982
  %vm2959 = vcmp.lt.s32.totalorder %v2749, 0
  %v2960 = vand.u32 %v2749, 2139095040
  %v2961 = vshrl.u32 %v2960, 23
  %v2962 = vsub.s32 %v2961, 127
  %v2963 = vand.u32 2147483647, %v2749
  %v2964 = vand.u32 %v2963, 8388607
  %v2965 = vor.u32 %v2964, 8388608
  %v2966 = vsub.s32 0, %v2965
  %v2967 = vadd.s32 %v2962, 1
  %vm2968 = vcmp.gt.s32.totalorder %v2967, 0
  %v2969 = vsel %vm2968, %v2967, 0
  %v2970 = vshrl.u32 %v2969, 5
  %v2971 = vand.u32 %v2969, 31
  %v2972 = vsub.s32 32, %v2971
  %v2973 = vshrl.u32 683565275, %v2972
  %v2974 = vshll.u32 683565275, %v2971
  %v2975 = vshrl.u32 2475754826, %v2972
  %v2976 = vor.u32 %v2974, %v2975
  %v2977 = vshll.u32 2475754826, %v2971
  %v2978 = vshrl.u32 2131351028, %v2972
  %v2979 = vor.u32 %v2977, %v2978
  %v2980 = vshll.u32 2131351028, %v2971
  %v2981 = vshrl.u32 2102212464, %v2972
  %v2982 = vor.u32 %v2980, %v2981
  %v2983 = vshll.u32 2102212464, %v2971
  %v2984 = vshrl.u32 920167782, %v2972
  %v2985 = vor.u32 %v2983, %v2984
  %v2986 = vshll.u32 920167782, %v2971
  %v2987 = vshrl.u32 1326507024, %v2972
  %v2988 = vor.u32 %v2986, %v2987
  %vm2989 = vcmp.lt.s32.totalorder %v2970, 1
  %vm2990 = vcmp.lt.s32.totalorder %v2970, 2
  %vm2991 = vcmp.lt.s32.totalorder %v2970, 3
  %vm2992 = vcmp.lt.s32.totalorder %v2970, 4
  %v2993 = vsel %vm2989, %v2973, %v2976
  %v2994 = vsel %vm2992, %v2982, 2102212464
  %v2995 = vsel %vm2991, %v2979, %v2994
  %v2996 = vsel %vm2990, %v2993, %v2995
  %v2997 = vsel %vm2989, %v2976, %v2979
  %v2998 = vsel %vm2992, %v2985, 920167782
  %v2999 = vsel %vm2991, %v2982, %v2998
  %v3000 = vsel %vm2990, %v2997, %v2999
  %v3001 = vsel %vm2989, %v2979, %v2982
  %v3002 = vsel %vm2992, %v2988, 1326507024
  %v3003 = vsel %vm2991, %v2985, %v3002
  %v3004 = vsel %vm2990, %v3001, %v3003
  %v3005 = vshll.u32 %v2965, 8
  %v3006 = vmul.u32.u64.compose %v3005, %v3004
  %v3007 = vextract.low.u32 %v3006
  %v3008 = vextract.high.u32 %v3006
  %v3009 = vmul.u32.u64.compose %v3005, %v3000
  %v3010 = vextract.low.u32 %v3009
  %v3011 = vextract.high.u32 %v3009
  %v3012 = vmul.u32 %v3005, %v2996
  %v3013 = vadd.s32 %v3008, %v3010
  %vm3014 = vc.u32 %v3008, %v3010
  %v3015 = vadd.s32 %v3011, 1
  %v3016 = vsel %vm3014, %v3015, %v3011
  %v3017 = vadd.s32 %v3012, %v3016
  %v3018 = vadd.s32 %v3017, 536870912
  %v3019 = vshrl.u32 %v3018, 30
  %v3020 = vshll.u32 %v3019, 30
  %v3021 = vsub.s32 %v3017, %v3020
  %vm3022 = vcmp.lt.s32.totalorder %v3021, 0
  %v3023 = vsub.s32 0, %v3021
  %v3024 = vsel %vm3022, %v3023, %v3021
  %v3025 = vclz %v3024
  %v3026 = vsub.s32 %v3025, 2
  %vm3027 = vcmp.gt.s32.totalorder 0, %v3026
  %v3028 = vsel %vm3027, 0, %v3026
  %v3029 = vsub.s32 32, %v3028
  %v3030 = vshll.u32 %v3021, %v3028
  %v3031 = vshrl.u32 %v3013, %v3029
  %v3032 = vor.u32 %v3030, %v3031
  %v3033 = vsub.s32 4294967266, %v3028
  %v3034 = vadd.s32 %v3033, 127
  %v3035 = vshll.u32 %v3034, 23
  %v3036 = vor.u32 4788187, %v3035
  %v3037 = vand.u32 2147483647, %v3036
  %v3039 = vcvt.s32.f32 %v3032
  %v3040 = vmul.f32 %v3039, %v3037
  %v3041 = vxor.u32 %v3040, 2147483648
  %v3042 = vsel %vm2959, %v3041, %v3040
  %v3043 = vsub.s32 4, %v3019
  %v3044 = vsel %vm2959, %v3043, %v3019
  %v3045 = vsel %vm2958, %v2749, %v3042
  %v3046 = vsel %vm2958, 0, %v3044
  %v3047 = vcosq.f32.pop %v3045
  %v3048 = vsinq.f32.pop %v3045
  %vm3049 = vweird.f32 %v2749
  %v3050 = vand.u32 %v3046, 3
  %vm3051 = vcmp.lt.s32.totalorder %v3050, 2
  %vm3052 = vcmp.eq.s32.totalorder %v3050, 0
  %v3053 = vxor.u32 %v3048, 2147483648
  %v3054 = vsel %vm3052, %v3047, %v3053
  %vm3055 = vcmp.eq.s32.totalorder %v3050, 2
  %v3056 = vxor.u32 %v3047, 2147483648
  %v3057 = vsel %vm3055, %v3056, %v3048
  %v3058 = vsel %vm3051, %v3054, %v3057
  %v3059 = vsel %vm3049, nan, %v3058
  %v3060 = vand.u32 2147483647, %v2750
  %vm3061 = vcmp.le.f32.partialorder %v3060, 0.7853982
  %vm3062 = vcmp.lt.s32.totalorder %v2750, 0
  %v3063 = vand.u32 %v2750, 2139095040
  %v3064 = vshrl.u32 %v3063, 23
  %v3065 = vsub.s32 %v3064, 127
  %v3066 = vand.u32 2147483647, %v2750
  %v3067 = vand.u32 %v3066, 8388607
  %v3068 = vor.u32 %v3067, 8388608
  %v3069 = vsub.s32 0, %v3068
  %v3070 = vadd.s32 %v3065, 1
  %vm3071 = vcmp.gt.s32.totalorder %v3070, 0
  %v3072 = vsel %vm3071, %v3070, 0
  %v3073 = vshrl.u32 %v3072, 5
  %v3074 = vand.u32 %v3072, 31
  %v3075 = vsub.s32 32, %v3074
  %v3076 = vshrl.u32 683565275, %v3075
  %v3077 = vshll.u32 683565275, %v3074
  %v3078 = vshrl.u32 2475754826, %v3075
  %v3079 = vor.u32 %v3077, %v3078
  %v3080 = vshll.u32 2475754826, %v3074
  %v3081 = vshrl.u32 2131351028, %v3075
  %v3082 = vor.u32 %v3080, %v3081
  %v3083 = vshll.u32 2131351028, %v3074
  %v3084 = vshrl.u32 2102212464, %v3075
  %v3085 = vor.u32 %v3083, %v3084
  %v3086 = vshll.u32 2102212464, %v3074
  %v3087 = vshrl.u32 920167782, %v3075
  %v3088 = vor.u32 %v3086, %v3087
  %v3089 = vshll.u32 920167782, %v3074
  %v3090 = vshrl.u32 1326507024, %v3075
  %v3091 = vor.u32 %v3089, %v3090
  %vm3092 = vcmp.lt.s32.totalorder %v3073, 1
  %vm3093 = vcmp.lt.s32.totalorder %v3073, 2
  %vm3094 = vcmp.lt.s32.totalorder %v3073, 3
  %vm3095 = vcmp.lt.s32.totalorder %v3073, 4
  %v3096 = vsel %vm3092, %v3076, %v3079
  %v3097 = vsel %vm3095, %v3085, 2102212464
  %v3098 = vsel %vm3094, %v3082, %v3097
  %v3099 = vsel %vm3093, %v3096, %v3098
  %v3100 = vsel %vm3092, %v3079, %v3082
  %v3101 = vsel %vm3095, %v3088, 920167782
  %v3102 = vsel %vm3094, %v3085, %v3101
  %v3103 = vsel %vm3093, %v3100, %v3102
  %v3104 = vsel %vm3092, %v3082, %v3085
  %v3105 = vsel %vm3095, %v3091, 1326507024
  %v3106 = vsel %vm3094, %v3088, %v3105
  %v3107 = vsel %vm3093, %v3104, %v3106
  %v3108 = vshll.u32 %v3068, 8
  %v3109 = vmul.u32.u64.compose %v3108, %v3107
  %v3110 = vextract.low.u32 %v3109
  %v3111 = vextract.high.u32 %v3109
  %v3112 = vmul.u32.u64.compose %v3108, %v3103
  %v3113 = vextract.low.u32 %v3112
  %v3114 = vextract.high.u32 %v3112
  %v3115 = vmul.u32 %v3108, %v3099
  %v3116 = vadd.s32 %v3111, %v3113
  %vm3117 = vc.u32 %v3111, %v3113
  %v3118 = vadd.s32 %v3114, 1
  %v3119 = vsel %vm3117, %v3118, %v3114
  %v3120 = vadd.s32 %v3115, %v3119
  %v3121 = vadd.s32 %v3120, 536870912
  %v3122 = vshrl.u32 %v3121, 30
  %v3123 = vshll.u32 %v3122, 30
  %v3124 = vsub.s32 %v3120, %v3123
  %vm3125 = vcmp.lt.s32.totalorder %v3124, 0
  %v3126 = vsub.s32 0, %v3124
  %v3127 = vsel %vm3125, %v3126, %v3124
  %v3128 = vclz %v3127
  %v3129 = vsub.s32 %v3128, 2
  %vm3130 = vcmp.gt.s32.totalorder 0, %v3129
  %v3131 = vsel %vm3130, 0, %v3129
  %v3132 = vsub.s32 32, %v3131
  %v3133 = vshll.u32 %v3124, %v3131
  %v3134 = vshrl.u32 %v3116, %v3132
  %v3135 = vor.u32 %v3133, %v3134
  %v3136 = vsub.s32 4294967266, %v3131
  %v3137 = vadd.s32 %v3136, 127
  %v3138 = vshll.u32 %v3137, 23
  %v3139 = vor.u32 4788187, %v3138
  %v3140 = vand.u32 2147483647, %v3139
  %v3142 = vcvt.s32.f32 %v3135
  %v3143 = vmul.f32 %v3142, %v3140
  %v3144 = vxor.u32 %v3143, 2147483648
  %v3145 = vsel %vm3062, %v3144, %v3143
  %v3146 = vsub.s32 4, %v3122
  %v3147 = vsel %vm3062, %v3146, %v3122
  %v3148 = vsel %vm3061, %v2750, %v3145
  %v3149 = vsel %vm3061, 0, %v3147
  %v3150 = vcosq.f32.pop %v3148
  %v3151 = vsinq.f32.pop %v3148
  %vm3152 = vweird.f32 %v2750
  %v3153 = vand.u32 %v3149, 3
  %vm3154 = vcmp.lt.s32.totalorder %v3153, 2
  %vm3155 = vcmp.eq.s32.totalorder %v3153, 0
  %v3156 = vxor.u32 %v3151, 2147483648
  %v3157 = vsel %vm3155, %v3150, %v3156
  %vm3158 = vcmp.eq.s32.totalorder %v3153, 2
  %v3159 = vxor.u32 %v3150, 2147483648
  %v3160 = vsel %vm3158, %v3159, %v3151
  %v3161 = vsel %vm3154, %v3157, %v3160
  %v3162 = vsel %vm3152, nan, %v3161
  %v3163 = vmul.f32 %v2699, %v2853
  %v3164 = vmul.f32 %v2700, %v2956
  %v3165 = vmul.f32 %v2701, %v3059
  %v3166 = vmul.f32 %v2702, %v3162
  %v3167 = vmax.f32 %v3163, %v3165
  %v3168 = vrot.slane %v3167, 4
  %v3169 = vmax.f32 %v3167, %v3168
  %v3170 = vrot.slane %v3169, 2
  %v3171 = vmax.f32 %v3169, %v3170
  %v3172 = vrot.slane %v3171, 1
  %v3173 = vmax.f32 %v3171, %v3172
  %v3174 = vmax.f32 %v3164, %v3166
  %v3175 = vrot.slane %v3174, 4
  %v3176 = vmax.f32 %v3174, %v3175
  %v3177 = vrot.slane %v3176, 2
  %v3178 = vmax.f32 %v3176, %v3177
  %v3179 = vrot.slane %v3178, 1
  %v3180 = vmax.f32 %v3178, %v3179
  %v3181 = vmax.f32 %v3173, 0.0
  %v3182 = vmax.f32 %v3180, 0.0
  %v3185 = vcombine.low %v3181, %v3182
  %v3187 = vunpack.c.l.s4 1966171168
  %v3188 = vunpack.c.0.s8 %v3187
  %v3189 = vlaneseq
  %v3190 = vshrl.u32 %v3189, 7
  %v3191 = vsub.s32 %v3188, %v3190
  %v3192 = vrot.slane %v3185, %v3191
  %v3194 = vunpack.c.l.s4 1966171168
  %v3195 = vunpack.c.0.s8 %v3194
  %v3196 = vlaneseq
  %v3197 = vshrl.u32 %v3196, 7
  %v3198 = vsub.s32 %v3195, %v3197
  %v3199 = vrot.slane %v3192, %v3198
  %s3201 = scalar_lea.vmem %s1, 6
  %3202 = vst.msk [vmem:[%s3201] ss:$8 sm:$0x3] %vm884, %v3199
  %3203 = vst.msk [vmem:[%s3201] ss:$8 sm:$0x0] %vm884, %v3199
  %v3204 = vmul.f32 %v2740, %v2853
  %v3205 = vmul.f32 %v2741, %v2956
  %v3206 = vmul.f32 %v2742, %v3059
  %v3207 = vmul.f32 %v2743, %v3162
  %s3208 = sadd.s32 0, 28
  %s3209 = smul.addr %s3208, 8
  %s3210 = scalar_lea.vmem %s0, %s3209
  %v3211 = vld [vmem:[%s3210] sm:$0xff]
  %v3212 = vld [vmem:[%s3210 + $0x8] sm:$0xff]
  %v3213 = vld [vmem:[%s3210 + $0x10] sm:$0xff]
  %v3214 = vld [vmem:[%s3210 + $0x18] sm:$0xff]
  %v3215 = vand.u32 2147483647, %v3211
  %vm3216 = vcmp.le.f32.partialorder %v3215, 0.7853982
  %vm3217 = vcmp.lt.s32.totalorder %v3211, 0
  %v3218 = vand.u32 %v3211, 2139095040
  %v3219 = vshrl.u32 %v3218, 23
  %v3220 = vsub.s32 %v3219, 127
  %v3221 = vand.u32 2147483647, %v3211
  %v3222 = vand.u32 %v3221, 8388607
  %v3223 = vor.u32 %v3222, 8388608
  %v3224 = vsub.s32 0, %v3223
  %v3225 = vadd.s32 %v3220, 1
  %vm3226 = vcmp.gt.s32.totalorder %v3225, 0
  %v3227 = vsel %vm3226, %v3225, 0
  %v3228 = vshrl.u32 %v3227, 5
  %v3229 = vand.u32 %v3227, 31
  %v3230 = vsub.s32 32, %v3229
  %v3231 = vshrl.u32 683565275, %v3230
  %v3232 = vshll.u32 683565275, %v3229
  %v3233 = vshrl.u32 2475754826, %v3230
  %v3234 = vor.u32 %v3232, %v3233
  %v3235 = vshll.u32 2475754826, %v3229
  %v3236 = vshrl.u32 2131351028, %v3230
  %v3237 = vor.u32 %v3235, %v3236
  %v3238 = vshll.u32 2131351028, %v3229
  %v3239 = vshrl.u32 2102212464, %v3230
  %v3240 = vor.u32 %v3238, %v3239
  %v3241 = vshll.u32 2102212464, %v3229
  %v3242 = vshrl.u32 920167782, %v3230
  %v3243 = vor.u32 %v3241, %v3242
  %v3244 = vshll.u32 920167782, %v3229
  %v3245 = vshrl.u32 1326507024, %v3230
  %v3246 = vor.u32 %v3244, %v3245
  %vm3247 = vcmp.lt.s32.totalorder %v3228, 1
  %vm3248 = vcmp.lt.s32.totalorder %v3228, 2
  %vm3249 = vcmp.lt.s32.totalorder %v3228, 3
  %vm3250 = vcmp.lt.s32.totalorder %v3228, 4
  %v3251 = vsel %vm3247, %v3231, %v3234
  %v3252 = vsel %vm3250, %v3240, 2102212464
  %v3253 = vsel %vm3249, %v3237, %v3252
  %v3254 = vsel %vm3248, %v3251, %v3253
  %v3255 = vsel %vm3247, %v3234, %v3237
  %v3256 = vsel %vm3250, %v3243, 920167782
  %v3257 = vsel %vm3249, %v3240, %v3256
  %v3258 = vsel %vm3248, %v3255, %v3257
  %v3259 = vsel %vm3247, %v3237, %v3240
  %v3260 = vsel %vm3250, %v3246, 1326507024
  %v3261 = vsel %vm3249, %v3243, %v3260
  %v3262 = vsel %vm3248, %v3259, %v3261
  %v3263 = vshll.u32 %v3223, 8
  %v3264 = vmul.u32.u64.compose %v3263, %v3262
  %v3265 = vextract.low.u32 %v3264
  %v3266 = vextract.high.u32 %v3264
  %v3267 = vmul.u32.u64.compose %v3263, %v3258
  %v3268 = vextract.low.u32 %v3267
  %v3269 = vextract.high.u32 %v3267
  %v3270 = vmul.u32 %v3263, %v3254
  %v3271 = vadd.s32 %v3266, %v3268
  %vm3272 = vc.u32 %v3266, %v3268
  %v3273 = vadd.s32 %v3269, 1
  %v3274 = vsel %vm3272, %v3273, %v3269
  %v3275 = vadd.s32 %v3270, %v3274
  %v3276 = vadd.s32 %v3275, 536870912
  %v3277 = vshrl.u32 %v3276, 30
  %v3278 = vshll.u32 %v3277, 30
  %v3279 = vsub.s32 %v3275, %v3278
  %vm3280 = vcmp.lt.s32.totalorder %v3279, 0
  %v3281 = vsub.s32 0, %v3279
  %v3282 = vsel %vm3280, %v3281, %v3279
  %v3283 = vclz %v3282
  %v3284 = vsub.s32 %v3283, 2
  %vm3285 = vcmp.gt.s32.totalorder 0, %v3284
  %v3286 = vsel %vm3285, 0, %v3284
  %v3287 = vsub.s32 32, %v3286
  %v3288 = vshll.u32 %v3279, %v3286
  %v3289 = vshrl.u32 %v3271, %v3287
  %v3290 = vor.u32 %v3288, %v3289
  %v3291 = vsub.s32 4294967266, %v3286
  %v3292 = vadd.s32 %v3291, 127
  %v3293 = vshll.u32 %v3292, 23
  %v3294 = vor.u32 4788187, %v3293
  %v3295 = vand.u32 2147483647, %v3294
  %v3297 = vcvt.s32.f32 %v3290
  %v3298 = vmul.f32 %v3297, %v3295
  %v3299 = vxor.u32 %v3298, 2147483648
  %v3300 = vsel %vm3217, %v3299, %v3298
  %v3301 = vsub.s32 4, %v3277
  %v3302 = vsel %vm3217, %v3301, %v3277
  %v3303 = vsel %vm3216, %v3211, %v3300
  %v3304 = vsel %vm3216, 0, %v3302
  %v3305 = vcosq.f32.pop %v3303
  %v3306 = vsinq.f32.pop %v3303
  %vm3307 = vweird.f32 %v3211
  %v3308 = vand.u32 %v3304, 3
  %vm3309 = vcmp.lt.s32.totalorder %v3308, 2
  %vm3310 = vcmp.eq.s32.totalorder %v3308, 0
  %v3311 = vxor.u32 %v3306, 2147483648
  %v3312 = vsel %vm3310, %v3305, %v3311
  %vm3313 = vcmp.eq.s32.totalorder %v3308, 2
  %v3314 = vxor.u32 %v3305, 2147483648
  %v3315 = vsel %vm3313, %v3314, %v3306
  %v3316 = vsel %vm3309, %v3312, %v3315
  %v3317 = vsel %vm3307, nan, %v3316
  %v3318 = vand.u32 2147483647, %v3212
  %vm3319 = vcmp.le.f32.partialorder %v3318, 0.7853982
  %vm3320 = vcmp.lt.s32.totalorder %v3212, 0
  %v3321 = vand.u32 %v3212, 2139095040
  %v3322 = vshrl.u32 %v3321, 23
  %v3323 = vsub.s32 %v3322, 127
  %v3324 = vand.u32 2147483647, %v3212
  %v3325 = vand.u32 %v3324, 8388607
  %v3326 = vor.u32 %v3325, 8388608
  %v3327 = vsub.s32 0, %v3326
  %v3328 = vadd.s32 %v3323, 1
  %vm3329 = vcmp.gt.s32.totalorder %v3328, 0
  %v3330 = vsel %vm3329, %v3328, 0
  %v3331 = vshrl.u32 %v3330, 5
  %v3332 = vand.u32 %v3330, 31
  %v3333 = vsub.s32 32, %v3332
  %v3334 = vshrl.u32 683565275, %v3333
  %v3335 = vshll.u32 683565275, %v3332
  %v3336 = vshrl.u32 2475754826, %v3333
  %v3337 = vor.u32 %v3335, %v3336
  %v3338 = vshll.u32 2475754826, %v3332
  %v3339 = vshrl.u32 2131351028, %v3333
  %v3340 = vor.u32 %v3338, %v3339
  %v3341 = vshll.u32 2131351028, %v3332
  %v3342 = vshrl.u32 2102212464, %v3333
  %v3343 = vor.u32 %v3341, %v3342
  %v3344 = vshll.u32 2102212464, %v3332
  %v3345 = vshrl.u32 920167782, %v3333
  %v3346 = vor.u32 %v3344, %v3345
  %v3347 = vshll.u32 920167782, %v3332
  %v3348 = vshrl.u32 1326507024, %v3333
  %v3349 = vor.u32 %v3347, %v3348
  %vm3350 = vcmp.lt.s32.totalorder %v3331, 1
  %vm3351 = vcmp.lt.s32.totalorder %v3331, 2
  %vm3352 = vcmp.lt.s32.totalorder %v3331, 3
  %vm3353 = vcmp.lt.s32.totalorder %v3331, 4
  %v3354 = vsel %vm3350, %v3334, %v3337
  %v3355 = vsel %vm3353, %v3343, 2102212464
  %v3356 = vsel %vm3352, %v3340, %v3355
  %v3357 = vsel %vm3351, %v3354, %v3356
  %v3358 = vsel %vm3350, %v3337, %v3340
  %v3359 = vsel %vm3353, %v3346, 920167782
  %v3360 = vsel %vm3352, %v3343, %v3359
  %v3361 = vsel %vm3351, %v3358, %v3360
  %v3362 = vsel %vm3350, %v3340, %v3343
  %v3363 = vsel %vm3353, %v3349, 1326507024
  %v3364 = vsel %vm3352, %v3346, %v3363
  %v3365 = vsel %vm3351, %v3362, %v3364
  %v3366 = vshll.u32 %v3326, 8
  %v3367 = vmul.u32.u64.compose %v3366, %v3365
  %v3368 = vextract.low.u32 %v3367
  %v3369 = vextract.high.u32 %v3367
  %v3370 = vmul.u32.u64.compose %v3366, %v3361
  %v3371 = vextract.low.u32 %v3370
  %v3372 = vextract.high.u32 %v3370
  %v3373 = vmul.u32 %v3366, %v3357
  %v3374 = vadd.s32 %v3369, %v3371
  %vm3375 = vc.u32 %v3369, %v3371
  %v3376 = vadd.s32 %v3372, 1
  %v3377 = vsel %vm3375, %v3376, %v3372
  %v3378 = vadd.s32 %v3373, %v3377
  %v3379 = vadd.s32 %v3378, 536870912
  %v3380 = vshrl.u32 %v3379, 30
  %v3381 = vshll.u32 %v3380, 30
  %v3382 = vsub.s32 %v3378, %v3381
  %vm3383 = vcmp.lt.s32.totalorder %v3382, 0
  %v3384 = vsub.s32 0, %v3382
  %v3385 = vsel %vm3383, %v3384, %v3382
  %v3386 = vclz %v3385
  %v3387 = vsub.s32 %v3386, 2
  %vm3388 = vcmp.gt.s32.totalorder 0, %v3387
  %v3389 = vsel %vm3388, 0, %v3387
  %v3390 = vsub.s32 32, %v3389
  %v3391 = vshll.u32 %v3382, %v3389
  %v3392 = vshrl.u32 %v3374, %v3390
  %v3393 = vor.u32 %v3391, %v3392
  %v3394 = vsub.s32 4294967266, %v3389
  %v3395 = vadd.s32 %v3394, 127
  %v3396 = vshll.u32 %v3395, 23
  %v3397 = vor.u32 4788187, %v3396
  %v3398 = vand.u32 2147483647, %v3397
  %v3400 = vcvt.s32.f32 %v3393
  %v3401 = vmul.f32 %v3400, %v3398
  %v3402 = vxor.u32 %v3401, 2147483648
  %v3403 = vsel %vm3320, %v3402, %v3401
  %v3404 = vsub.s32 4, %v3380
  %v3405 = vsel %vm3320, %v3404, %v3380
  %v3406 = vsel %vm3319, %v3212, %v3403
  %v3407 = vsel %vm3319, 0, %v3405
  %v3408 = vcosq.f32.pop %v3406
  %v3409 = vsinq.f32.pop %v3406
  %vm3410 = vweird.f32 %v3212
  %v3411 = vand.u32 %v3407, 3
  %vm3412 = vcmp.lt.s32.totalorder %v3411, 2
  %vm3413 = vcmp.eq.s32.totalorder %v3411, 0
  %v3414 = vxor.u32 %v3409, 2147483648
  %v3415 = vsel %vm3413, %v3408, %v3414
  %vm3416 = vcmp.eq.s32.totalorder %v3411, 2
  %v3417 = vxor.u32 %v3408, 2147483648
  %v3418 = vsel %vm3416, %v3417, %v3409
  %v3419 = vsel %vm3412, %v3415, %v3418
  %v3420 = vsel %vm3410, nan, %v3419
  %v3421 = vand.u32 2147483647, %v3213
  %vm3422 = vcmp.le.f32.partialorder %v3421, 0.7853982
  %vm3423 = vcmp.lt.s32.totalorder %v3213, 0
  %v3424 = vand.u32 %v3213, 2139095040
  %v3425 = vshrl.u32 %v3424, 23
  %v3426 = vsub.s32 %v3425, 127
  %v3427 = vand.u32 2147483647, %v3213
  %v3428 = vand.u32 %v3427, 8388607
  %v3429 = vor.u32 %v3428, 8388608
  %v3430 = vsub.s32 0, %v3429
  %v3431 = vadd.s32 %v3426, 1
  %vm3432 = vcmp.gt.s32.totalorder %v3431, 0
  %v3433 = vsel %vm3432, %v3431, 0
  %v3434 = vshrl.u32 %v3433, 5
  %v3435 = vand.u32 %v3433, 31
  %v3436 = vsub.s32 32, %v3435
  %v3437 = vshrl.u32 683565275, %v3436
  %v3438 = vshll.u32 683565275, %v3435
  %v3439 = vshrl.u32 2475754826, %v3436
  %v3440 = vor.u32 %v3438, %v3439
  %v3441 = vshll.u32 2475754826, %v3435
  %v3442 = vshrl.u32 2131351028, %v3436
  %v3443 = vor.u32 %v3441, %v3442
  %v3444 = vshll.u32 2131351028, %v3435
  %v3445 = vshrl.u32 2102212464, %v3436
  %v3446 = vor.u32 %v3444, %v3445
  %v3447 = vshll.u32 2102212464, %v3435
  %v3448 = vshrl.u32 920167782, %v3436
  %v3449 = vor.u32 %v3447, %v3448
  %v3450 = vshll.u32 920167782, %v3435
  %v3451 = vshrl.u32 1326507024, %v3436
  %v3452 = vor.u32 %v3450, %v3451
  %vm3453 = vcmp.lt.s32.totalorder %v3434, 1
  %vm3454 = vcmp.lt.s32.totalorder %v3434, 2
  %vm3455 = vcmp.lt.s32.totalorder %v3434, 3
  %vm3456 = vcmp.lt.s32.totalorder %v3434, 4
  %v3457 = vsel %vm3453, %v3437, %v3440
  %v3458 = vsel %vm3456, %v3446, 2102212464
  %v3459 = vsel %vm3455, %v3443, %v3458
  %v3460 = vsel %vm3454, %v3457, %v3459
  %v3461 = vsel %vm3453, %v3440, %v3443
  %v3462 = vsel %vm3456, %v3449, 920167782
  %v3463 = vsel %vm3455, %v3446, %v3462
  %v3464 = vsel %vm3454, %v3461, %v3463
  %v3465 = vsel %vm3453, %v3443, %v3446
  %v3466 = vsel %vm3456, %v3452, 1326507024
  %v3467 = vsel %vm3455, %v3449, %v3466
  %v3468 = vsel %vm3454, %v3465, %v3467
  %v3469 = vshll.u32 %v3429, 8
  %v3470 = vmul.u32.u64.compose %v3469, %v3468
  %v3471 = vextract.low.u32 %v3470
  %v3472 = vextract.high.u32 %v3470
  %v3473 = vmul.u32.u64.compose %v3469, %v3464
  %v3474 = vextract.low.u32 %v3473
  %v3475 = vextract.high.u32 %v3473
  %v3476 = vmul.u32 %v3469, %v3460
  %v3477 = vadd.s32 %v3472, %v3474
  %vm3478 = vc.u32 %v3472, %v3474
  %v3479 = vadd.s32 %v3475, 1
  %v3480 = vsel %vm3478, %v3479, %v3475
  %v3481 = vadd.s32 %v3476, %v3480
  %v3482 = vadd.s32 %v3481, 536870912
  %v3483 = vshrl.u32 %v3482, 30
  %v3484 = vshll.u32 %v3483, 30
  %v3485 = vsub.s32 %v3481, %v3484
  %vm3486 = vcmp.lt.s32.totalorder %v3485, 0
  %v3487 = vsub.s32 0, %v3485
  %v3488 = vsel %vm3486, %v3487, %v3485
  %v3489 = vclz %v3488
  %v3490 = vsub.s32 %v3489, 2
  %vm3491 = vcmp.gt.s32.totalorder 0, %v3490
  %v3492 = vsel %vm3491, 0, %v3490
  %v3493 = vsub.s32 32, %v3492
  %v3494 = vshll.u32 %v3485, %v3492
  %v3495 = vshrl.u32 %v3477, %v3493
  %v3496 = vor.u32 %v3494, %v3495
  %v3497 = vsub.s32 4294967266, %v3492
  %v3498 = vadd.s32 %v3497, 127
  %v3499 = vshll.u32 %v3498, 23
  %v3500 = vor.u32 4788187, %v3499
  %v3501 = vand.u32 2147483647, %v3500
  %v3503 = vcvt.s32.f32 %v3496
  %v3504 = vmul.f32 %v3503, %v3501
  %v3505 = vxor.u32 %v3504, 2147483648
  %v3506 = vsel %vm3423, %v3505, %v3504
  %v3507 = vsub.s32 4, %v3483
  %v3508 = vsel %vm3423, %v3507, %v3483
  %v3509 = vsel %vm3422, %v3213, %v3506
  %v3510 = vsel %vm3422, 0, %v3508
  %v3511 = vcosq.f32.pop %v3509
  %v3512 = vsinq.f32.pop %v3509
  %vm3513 = vweird.f32 %v3213
  %v3514 = vand.u32 %v3510, 3
  %vm3515 = vcmp.lt.s32.totalorder %v3514, 2
  %vm3516 = vcmp.eq.s32.totalorder %v3514, 0
  %v3517 = vxor.u32 %v3512, 2147483648
  %v3518 = vsel %vm3516, %v3511, %v3517
  %vm3519 = vcmp.eq.s32.totalorder %v3514, 2
  %v3520 = vxor.u32 %v3511, 2147483648
  %v3521 = vsel %vm3519, %v3520, %v3512
  %v3522 = vsel %vm3515, %v3518, %v3521
  %v3523 = vsel %vm3513, nan, %v3522
  %v3524 = vand.u32 2147483647, %v3214
  %vm3525 = vcmp.le.f32.partialorder %v3524, 0.7853982
  %vm3526 = vcmp.lt.s32.totalorder %v3214, 0
  %v3527 = vand.u32 %v3214, 2139095040
  %v3528 = vshrl.u32 %v3527, 23
  %v3529 = vsub.s32 %v3528, 127
  %v3530 = vand.u32 2147483647, %v3214
  %v3531 = vand.u32 %v3530, 8388607
  %v3532 = vor.u32 %v3531, 8388608
  %v3533 = vsub.s32 0, %v3532
  %v3534 = vadd.s32 %v3529, 1
  %vm3535 = vcmp.gt.s32.totalorder %v3534, 0
  %v3536 = vsel %vm3535, %v3534, 0
  %v3537 = vshrl.u32 %v3536, 5
  %v3538 = vand.u32 %v3536, 31
  %v3539 = vsub.s32 32, %v3538
  %v3540 = vshrl.u32 683565275, %v3539
  %v3541 = vshll.u32 683565275, %v3538
  %v3542 = vshrl.u32 2475754826, %v3539
  %v3543 = vor.u32 %v3541, %v3542
  %v3544 = vshll.u32 2475754826, %v3538
  %v3545 = vshrl.u32 2131351028, %v3539
  %v3546 = vor.u32 %v3544, %v3545
  %v3547 = vshll.u32 2131351028, %v3538
  %v3548 = vshrl.u32 2102212464, %v3539
  %v3549 = vor.u32 %v3547, %v3548
  %v3550 = vshll.u32 2102212464, %v3538
  %v3551 = vshrl.u32 920167782, %v3539
  %v3552 = vor.u32 %v3550, %v3551
  %v3553 = vshll.u32 920167782, %v3538
  %v3554 = vshrl.u32 1326507024, %v3539
  %v3555 = vor.u32 %v3553, %v3554
  %vm3556 = vcmp.lt.s32.totalorder %v3537, 1
  %vm3557 = vcmp.lt.s32.totalorder %v3537, 2
  %vm3558 = vcmp.lt.s32.totalorder %v3537, 3
  %vm3559 = vcmp.lt.s32.totalorder %v3537, 4
  %v3560 = vsel %vm3556, %v3540, %v3543
  %v3561 = vsel %vm3559, %v3549, 2102212464
  %v3562 = vsel %vm3558, %v3546, %v3561
  %v3563 = vsel %vm3557, %v3560, %v3562
  %v3564 = vsel %vm3556, %v3543, %v3546
  %v3565 = vsel %vm3559, %v3552, 920167782
  %v3566 = vsel %vm3558, %v3549, %v3565
  %v3567 = vsel %vm3557, %v3564, %v3566
  %v3568 = vsel %vm3556, %v3546, %v3549
  %v3569 = vsel %vm3559, %v3555, 1326507024
  %v3570 = vsel %vm3558, %v3552, %v3569
  %v3571 = vsel %vm3557, %v3568, %v3570
  %v3572 = vshll.u32 %v3532, 8
  %v3573 = vmul.u32.u64.compose %v3572, %v3571
  %v3574 = vextract.low.u32 %v3573
  %v3575 = vextract.high.u32 %v3573
  %v3576 = vmul.u32.u64.compose %v3572, %v3567
  %v3577 = vextract.low.u32 %v3576
  %v3578 = vextract.high.u32 %v3576
  %v3579 = vmul.u32 %v3572, %v3563
  %v3580 = vadd.s32 %v3575, %v3577
  %vm3581 = vc.u32 %v3575, %v3577
  %v3582 = vadd.s32 %v3578, 1
  %v3583 = vsel %vm3581, %v3582, %v3578
  %v3584 = vadd.s32 %v3579, %v3583
  %v3585 = vadd.s32 %v3584, 536870912
  %v3586 = vshrl.u32 %v3585, 30
  %v3587 = vshll.u32 %v3586, 30
  %v3588 = vsub.s32 %v3584, %v3587
  %vm3589 = vcmp.lt.s32.totalorder %v3588, 0
  %v3590 = vsub.s32 0, %v3588
  %v3591 = vsel %vm3589, %v3590, %v3588
  %v3592 = vclz %v3591
  %v3593 = vsub.s32 %v3592, 2
  %vm3594 = vcmp.gt.s32.totalorder 0, %v3593
  %v3595 = vsel %vm3594, 0, %v3593
  %v3596 = vsub.s32 32, %v3595
  %v3597 = vshll.u32 %v3588, %v3595
  %v3598 = vshrl.u32 %v3580, %v3596
  %v3599 = vor.u32 %v3597, %v3598
  %v3600 = vsub.s32 4294967266, %v3595
  %v3601 = vadd.s32 %v3600, 127
  %v3602 = vshll.u32 %v3601, 23
  %v3603 = vor.u32 4788187, %v3602
  %v3604 = vand.u32 2147483647, %v3603
  %v3606 = vcvt.s32.f32 %v3599
  %v3607 = vmul.f32 %v3606, %v3604
  %v3608 = vxor.u32 %v3607, 2147483648
  %v3609 = vsel %vm3526, %v3608, %v3607
  %v3610 = vsub.s32 4, %v3586
  %v3611 = vsel %vm3526, %v3610, %v3586
  %v3612 = vsel %vm3525, %v3214, %v3609
  %v3613 = vsel %vm3525, 0, %v3611
  %v3614 = vcosq.f32.pop %v3612
  %v3615 = vsinq.f32.pop %v3612
  %vm3616 = vweird.f32 %v3214
  %v3617 = vand.u32 %v3613, 3
  %vm3618 = vcmp.lt.s32.totalorder %v3617, 2
  %vm3619 = vcmp.eq.s32.totalorder %v3617, 0
  %v3620 = vxor.u32 %v3615, 2147483648
  %v3621 = vsel %vm3619, %v3614, %v3620
  %vm3622 = vcmp.eq.s32.totalorder %v3617, 2
  %v3623 = vxor.u32 %v3614, 2147483648
  %v3624 = vsel %vm3622, %v3623, %v3615
  %v3625 = vsel %vm3618, %v3621, %v3624
  %v3626 = vsel %vm3616, nan, %v3625
  %v3627 = vmul.f32 %v3163, %v3317
  %v3628 = vmul.f32 %v3164, %v3420
  %v3629 = vmul.f32 %v3165, %v3523
  %v3630 = vmul.f32 %v3166, %v3626
  %v3631 = vmax.f32 %v3627, %v3629
  %v3632 = vrot.slane %v3631, 4
  %v3633 = vmax.f32 %v3631, %v3632
  %v3634 = vrot.slane %v3633, 2
  %v3635 = vmax.f32 %v3633, %v3634
  %v3636 = vrot.slane %v3635, 1
  %v3637 = vmax.f32 %v3635, %v3636
  %v3638 = vmax.f32 %v3628, %v3630
  %v3639 = vrot.slane %v3638, 4
  %v3640 = vmax.f32 %v3638, %v3639
  %v3641 = vrot.slane %v3640, 2
  %v3642 = vmax.f32 %v3640, %v3641
  %v3643 = vrot.slane %v3642, 1
  %v3644 = vmax.f32 %v3642, %v3643
  %v3645 = vmax.f32 %v3637, 0.0
  %v3646 = vmax.f32 %v3644, 0.0
  %v3649 = vcombine.low %v3645, %v3646
  %v3651 = vunpack.c.l.s4 1966171168
  %v3652 = vunpack.c.0.s8 %v3651
  %v3653 = vlaneseq
  %v3654 = vshrl.u32 %v3653, 7
  %v3655 = vsub.s32 %v3652, %v3654
  %v3656 = vrot.slane %v3649, %v3655
  %v3658 = vunpack.c.l.s4 1966171168
  %v3659 = vunpack.c.0.s8 %v3658
  %v3660 = vlaneseq
  %v3661 = vshrl.u32 %v3660, 7
  %v3662 = vsub.s32 %v3659, %v3661
  %v3663 = vrot.slane %v3656, %v3662
  %s3665 = scalar_lea.vmem %s1, 7
  %3666 = vst.msk [vmem:[%s3665] ss:$8 sm:$0x3] %vm884, %v3663
  %3667 = vst.msk [vmem:[%s3665] ss:$8 sm:$0x0] %vm884, %v3663
  %v3668 = vmul.f32 %v3204, %v3317
  %v3669 = vmul.f32 %v3205, %v3420
  %v3670 = vmul.f32 %v3206, %v3523
  %v3671 = vmul.f32 %v3207, %v3626
  %s3672 = sadd.s32 0, 32
  %s3673 = smul.addr %s3672, 8
  %s3674 = scalar_lea.vmem %s0, %s3673
  %v3675 = vld [vmem:[%s3674] sm:$0xff]
  %v3676 = vld [vmem:[%s3674 + $0x8] sm:$0xff]
  %v3677 = vld [vmem:[%s3674 + $0x10] sm:$0xff]
  %v3678 = vld [vmem:[%s3674 + $0x18] sm:$0xff]
  %v3679 = vand.u32 2147483647, %v3675
  %vm3680 = vcmp.le.f32.partialorder %v3679, 0.7853982
  %vm3681 = vcmp.lt.s32.totalorder %v3675, 0
  %v3682 = vand.u32 %v3675, 2139095040
  %v3683 = vshrl.u32 %v3682, 23
  %v3684 = vsub.s32 %v3683, 127
  %v3685 = vand.u32 2147483647, %v3675
  %v3686 = vand.u32 %v3685, 8388607
  %v3687 = vor.u32 %v3686, 8388608
  %v3688 = vsub.s32 0, %v3687
  %v3689 = vadd.s32 %v3684, 1
  %vm3690 = vcmp.gt.s32.totalorder %v3689, 0
  %v3691 = vsel %vm3690, %v3689, 0
  %v3692 = vshrl.u32 %v3691, 5
  %v3693 = vand.u32 %v3691, 31
  %v3694 = vsub.s32 32, %v3693
  %v3695 = vshrl.u32 683565275, %v3694
  %v3696 = vshll.u32 683565275, %v3693
  %v3697 = vshrl.u32 2475754826, %v3694
  %v3698 = vor.u32 %v3696, %v3697
  %v3699 = vshll.u32 2475754826, %v3693
  %v3700 = vshrl.u32 2131351028, %v3694
  %v3701 = vor.u32 %v3699, %v3700
  %v3702 = vshll.u32 2131351028, %v3693
  %v3703 = vshrl.u32 2102212464, %v3694
  %v3704 = vor.u32 %v3702, %v3703
  %v3705 = vshll.u32 2102212464, %v3693
  %v3706 = vshrl.u32 920167782, %v3694
  %v3707 = vor.u32 %v3705, %v3706
  %v3708 = vshll.u32 920167782, %v3693
  %v3709 = vshrl.u32 1326507024, %v3694
  %v3710 = vor.u32 %v3708, %v3709
  %vm3711 = vcmp.lt.s32.totalorder %v3692, 1
  %vm3712 = vcmp.lt.s32.totalorder %v3692, 2
  %vm3713 = vcmp.lt.s32.totalorder %v3692, 3
  %vm3714 = vcmp.lt.s32.totalorder %v3692, 4
  %v3715 = vsel %vm3711, %v3695, %v3698
  %v3716 = vsel %vm3714, %v3704, 2102212464
  %v3717 = vsel %vm3713, %v3701, %v3716
  %v3718 = vsel %vm3712, %v3715, %v3717
  %v3719 = vsel %vm3711, %v3698, %v3701
  %v3720 = vsel %vm3714, %v3707, 920167782
  %v3721 = vsel %vm3713, %v3704, %v3720
  %v3722 = vsel %vm3712, %v3719, %v3721
  %v3723 = vsel %vm3711, %v3701, %v3704
  %v3724 = vsel %vm3714, %v3710, 1326507024
  %v3725 = vsel %vm3713, %v3707, %v3724
  %v3726 = vsel %vm3712, %v3723, %v3725
  %v3727 = vshll.u32 %v3687, 8
  %v3728 = vmul.u32.u64.compose %v3727, %v3726
  %v3729 = vextract.low.u32 %v3728
  %v3730 = vextract.high.u32 %v3728
  %v3731 = vmul.u32.u64.compose %v3727, %v3722
  %v3732 = vextract.low.u32 %v3731
  %v3733 = vextract.high.u32 %v3731
  %v3734 = vmul.u32 %v3727, %v3718
  %v3735 = vadd.s32 %v3730, %v3732
  %vm3736 = vc.u32 %v3730, %v3732
  %v3737 = vadd.s32 %v3733, 1
  %v3738 = vsel %vm3736, %v3737, %v3733
  %v3739 = vadd.s32 %v3734, %v3738
  %v3740 = vadd.s32 %v3739, 536870912
  %v3741 = vshrl.u32 %v3740, 30
  %v3742 = vshll.u32 %v3741, 30
  %v3743 = vsub.s32 %v3739, %v3742
  %vm3744 = vcmp.lt.s32.totalorder %v3743, 0
  %v3745 = vsub.s32 0, %v3743
  %v3746 = vsel %vm3744, %v3745, %v3743
  %v3747 = vclz %v3746
  %v3748 = vsub.s32 %v3747, 2
  %vm3749 = vcmp.gt.s32.totalorder 0, %v3748
  %v3750 = vsel %vm3749, 0, %v3748
  %v3751 = vsub.s32 32, %v3750
  %v3752 = vshll.u32 %v3743, %v3750
  %v3753 = vshrl.u32 %v3735, %v3751
  %v3754 = vor.u32 %v3752, %v3753
  %v3755 = vsub.s32 4294967266, %v3750
  %v3756 = vadd.s32 %v3755, 127
  %v3757 = vshll.u32 %v3756, 23
  %v3758 = vor.u32 4788187, %v3757
  %v3759 = vand.u32 2147483647, %v3758
  %v3761 = vcvt.s32.f32 %v3754
  %v3762 = vmul.f32 %v3761, %v3759
  %v3763 = vxor.u32 %v3762, 2147483648
  %v3764 = vsel %vm3681, %v3763, %v3762
  %v3765 = vsub.s32 4, %v3741
  %v3766 = vsel %vm3681, %v3765, %v3741
  %v3767 = vsel %vm3680, %v3675, %v3764
  %v3768 = vsel %vm3680, 0, %v3766
  %v3769 = vcosq.f32.pop %v3767
  %v3770 = vsinq.f32.pop %v3767
  %vm3771 = vweird.f32 %v3675
  %v3772 = vand.u32 %v3768, 3
  %vm3773 = vcmp.lt.s32.totalorder %v3772, 2
  %vm3774 = vcmp.eq.s32.totalorder %v3772, 0
  %v3775 = vxor.u32 %v3770, 2147483648
  %v3776 = vsel %vm3774, %v3769, %v3775
  %vm3777 = vcmp.eq.s32.totalorder %v3772, 2
  %v3778 = vxor.u32 %v3769, 2147483648
  %v3779 = vsel %vm3777, %v3778, %v3770
  %v3780 = vsel %vm3773, %v3776, %v3779
  %v3781 = vsel %vm3771, nan, %v3780
  %v3782 = vand.u32 2147483647, %v3676
  %vm3783 = vcmp.le.f32.partialorder %v3782, 0.7853982
  %vm3784 = vcmp.lt.s32.totalorder %v3676, 0
  %v3785 = vand.u32 %v3676, 2139095040
  %v3786 = vshrl.u32 %v3785, 23
  %v3787 = vsub.s32 %v3786, 127
  %v3788 = vand.u32 2147483647, %v3676
  %v3789 = vand.u32 %v3788, 8388607
  %v3790 = vor.u32 %v3789, 8388608
  %v3791 = vsub.s32 0, %v3790
  %v3792 = vadd.s32 %v3787, 1
  %vm3793 = vcmp.gt.s32.totalorder %v3792, 0
  %v3794 = vsel %vm3793, %v3792, 0
  %v3795 = vshrl.u32 %v3794, 5
  %v3796 = vand.u32 %v3794, 31
  %v3797 = vsub.s32 32, %v3796
  %v3798 = vshrl.u32 683565275, %v3797
  %v3799 = vshll.u32 683565275, %v3796
  %v3800 = vshrl.u32 2475754826, %v3797
  %v3801 = vor.u32 %v3799, %v3800
  %v3802 = vshll.u32 2475754826, %v3796
  %v3803 = vshrl.u32 2131351028, %v3797
  %v3804 = vor.u32 %v3802, %v3803
  %v3805 = vshll.u32 2131351028, %v3796
  %v3806 = vshrl.u32 2102212464, %v3797
  %v3807 = vor.u32 %v3805, %v3806
  %v3808 = vshll.u32 2102212464, %v3796
  %v3809 = vshrl.u32 920167782, %v3797
  %v3810 = vor.u32 %v3808, %v3809
  %v3811 = vshll.u32 920167782, %v3796
  %v3812 = vshrl.u32 1326507024, %v3797
  %v3813 = vor.u32 %v3811, %v3812
  %vm3814 = vcmp.lt.s32.totalorder %v3795, 1
  %vm3815 = vcmp.lt.s32.totalorder %v3795, 2
  %vm3816 = vcmp.lt.s32.totalorder %v3795, 3
  %vm3817 = vcmp.lt.s32.totalorder %v3795, 4
  %v3818 = vsel %vm3814, %v3798, %v3801
  %v3819 = vsel %vm3817, %v3807, 2102212464
  %v3820 = vsel %vm3816, %v3804, %v3819
  %v3821 = vsel %vm3815, %v3818, %v3820
  %v3822 = vsel %vm3814, %v3801, %v3804
  %v3823 = vsel %vm3817, %v3810, 920167782
  %v3824 = vsel %vm3816, %v3807, %v3823
  %v3825 = vsel %vm3815, %v3822, %v3824
  %v3826 = vsel %vm3814, %v3804, %v3807
  %v3827 = vsel %vm3817, %v3813, 1326507024
  %v3828 = vsel %vm3816, %v3810, %v3827
  %v3829 = vsel %vm3815, %v3826, %v3828
  %v3830 = vshll.u32 %v3790, 8
  %v3831 = vmul.u32.u64.compose %v3830, %v3829
  %v3832 = vextract.low.u32 %v3831
  %v3833 = vextract.high.u32 %v3831
  %v3834 = vmul.u32.u64.compose %v3830, %v3825
  %v3835 = vextract.low.u32 %v3834
  %v3836 = vextract.high.u32 %v3834
  %v3837 = vmul.u32 %v3830, %v3821
  %v3838 = vadd.s32 %v3833, %v3835
  %vm3839 = vc.u32 %v3833, %v3835
  %v3840 = vadd.s32 %v3836, 1
  %v3841 = vsel %vm3839, %v3840, %v3836
  %v3842 = vadd.s32 %v3837, %v3841
  %v3843 = vadd.s32 %v3842, 536870912
  %v3844 = vshrl.u32 %v3843, 30
  %v3845 = vshll.u32 %v3844, 30
  %v3846 = vsub.s32 %v3842, %v3845
  %vm3847 = vcmp.lt.s32.totalorder %v3846, 0
  %v3848 = vsub.s32 0, %v3846
  %v3849 = vsel %vm3847, %v3848, %v3846
  %v3850 = vclz %v3849
  %v3851 = vsub.s32 %v3850, 2
  %vm3852 = vcmp.gt.s32.totalorder 0, %v3851
  %v3853 = vsel %vm3852, 0, %v3851
  %v3854 = vsub.s32 32, %v3853
  %v3855 = vshll.u32 %v3846, %v3853
  %v3856 = vshrl.u32 %v3838, %v3854
  %v3857 = vor.u32 %v3855, %v3856
  %v3858 = vsub.s32 4294967266, %v3853
  %v3859 = vadd.s32 %v3858, 127
  %v3860 = vshll.u32 %v3859, 23
  %v3861 = vor.u32 4788187, %v3860
  %v3862 = vand.u32 2147483647, %v3861
  %v3864 = vcvt.s32.f32 %v3857
  %v3865 = vmul.f32 %v3864, %v3862
  %v3866 = vxor.u32 %v3865, 2147483648
  %v3867 = vsel %vm3784, %v3866, %v3865
  %v3868 = vsub.s32 4, %v3844
  %v3869 = vsel %vm3784, %v3868, %v3844
  %v3870 = vsel %vm3783, %v3676, %v3867
  %v3871 = vsel %vm3783, 0, %v3869
  %v3872 = vcosq.f32.pop %v3870
  %v3873 = vsinq.f32.pop %v3870
  %vm3874 = vweird.f32 %v3676
  %v3875 = vand.u32 %v3871, 3
  %vm3876 = vcmp.lt.s32.totalorder %v3875, 2
  %vm3877 = vcmp.eq.s32.totalorder %v3875, 0
  %v3878 = vxor.u32 %v3873, 2147483648
  %v3879 = vsel %vm3877, %v3872, %v3878
  %vm3880 = vcmp.eq.s32.totalorder %v3875, 2
  %v3881 = vxor.u32 %v3872, 2147483648
  %v3882 = vsel %vm3880, %v3881, %v3873
  %v3883 = vsel %vm3876, %v3879, %v3882
  %v3884 = vsel %vm3874, nan, %v3883
  %v3885 = vand.u32 2147483647, %v3677
  %vm3886 = vcmp.le.f32.partialorder %v3885, 0.7853982
  %vm3887 = vcmp.lt.s32.totalorder %v3677, 0
  %v3888 = vand.u32 %v3677, 2139095040
  %v3889 = vshrl.u32 %v3888, 23
  %v3890 = vsub.s32 %v3889, 127
  %v3891 = vand.u32 2147483647, %v3677
  %v3892 = vand.u32 %v3891, 8388607
  %v3893 = vor.u32 %v3892, 8388608
  %v3894 = vsub.s32 0, %v3893
  %v3895 = vadd.s32 %v3890, 1
  %vm3896 = vcmp.gt.s32.totalorder %v3895, 0
  %v3897 = vsel %vm3896, %v3895, 0
  %v3898 = vshrl.u32 %v3897, 5
  %v3899 = vand.u32 %v3897, 31
  %v3900 = vsub.s32 32, %v3899
  %v3901 = vshrl.u32 683565275, %v3900
  %v3902 = vshll.u32 683565275, %v3899
  %v3903 = vshrl.u32 2475754826, %v3900
  %v3904 = vor.u32 %v3902, %v3903
  %v3905 = vshll.u32 2475754826, %v3899
  %v3906 = vshrl.u32 2131351028, %v3900
  %v3907 = vor.u32 %v3905, %v3906
  %v3908 = vshll.u32 2131351028, %v3899
  %v3909 = vshrl.u32 2102212464, %v3900
  %v3910 = vor.u32 %v3908, %v3909
  %v3911 = vshll.u32 2102212464, %v3899
  %v3912 = vshrl.u32 920167782, %v3900
  %v3913 = vor.u32 %v3911, %v3912
  %v3914 = vshll.u32 920167782, %v3899
  %v3915 = vshrl.u32 1326507024, %v3900
  %v3916 = vor.u32 %v3914, %v3915
  %vm3917 = vcmp.lt.s32.totalorder %v3898, 1
  %vm3918 = vcmp.lt.s32.totalorder %v3898, 2
  %vm3919 = vcmp.lt.s32.totalorder %v3898, 3
  %vm3920 = vcmp.lt.s32.totalorder %v3898, 4
  %v3921 = vsel %vm3917, %v3901, %v3904
  %v3922 = vsel %vm3920, %v3910, 2102212464
  %v3923 = vsel %vm3919, %v3907, %v3922
  %v3924 = vsel %vm3918, %v3921, %v3923
  %v3925 = vsel %vm3917, %v3904, %v3907
  %v3926 = vsel %vm3920, %v3913, 920167782
  %v3927 = vsel %vm3919, %v3910, %v3926
  %v3928 = vsel %vm3918, %v3925, %v3927
  %v3929 = vsel %vm3917, %v3907, %v3910
  %v3930 = vsel %vm3920, %v3916, 1326507024
  %v3931 = vsel %vm3919, %v3913, %v3930
  %v3932 = vsel %vm3918, %v3929, %v3931
  %v3933 = vshll.u32 %v3893, 8
  %v3934 = vmul.u32.u64.compose %v3933, %v3932
  %v3935 = vextract.low.u32 %v3934
  %v3936 = vextract.high.u32 %v3934
  %v3937 = vmul.u32.u64.compose %v3933, %v3928
  %v3938 = vextract.low.u32 %v3937
  %v3939 = vextract.high.u32 %v3937
  %v3940 = vmul.u32 %v3933, %v3924
  %v3941 = vadd.s32 %v3936, %v3938
  %vm3942 = vc.u32 %v3936, %v3938
  %v3943 = vadd.s32 %v3939, 1
  %v3944 = vsel %vm3942, %v3943, %v3939
  %v3945 = vadd.s32 %v3940, %v3944
  %v3946 = vadd.s32 %v3945, 536870912
  %v3947 = vshrl.u32 %v3946, 30
  %v3948 = vshll.u32 %v3947, 30
  %v3949 = vsub.s32 %v3945, %v3948
  %vm3950 = vcmp.lt.s32.totalorder %v3949, 0
  %v3951 = vsub.s32 0, %v3949
  %v3952 = vsel %vm3950, %v3951, %v3949
  %v3953 = vclz %v3952
  %v3954 = vsub.s32 %v3953, 2
  %vm3955 = vcmp.gt.s32.totalorder 0, %v3954
  %v3956 = vsel %vm3955, 0, %v3954
  %v3957 = vsub.s32 32, %v3956
  %v3958 = vshll.u32 %v3949, %v3956
  %v3959 = vshrl.u32 %v3941, %v3957
  %v3960 = vor.u32 %v3958, %v3959
  %v3961 = vsub.s32 4294967266, %v3956
  %v3962 = vadd.s32 %v3961, 127
  %v3963 = vshll.u32 %v3962, 23
  %v3964 = vor.u32 4788187, %v3963
  %v3965 = vand.u32 2147483647, %v3964
  %v3967 = vcvt.s32.f32 %v3960
  %v3968 = vmul.f32 %v3967, %v3965
  %v3969 = vxor.u32 %v3968, 2147483648
  %v3970 = vsel %vm3887, %v3969, %v3968
  %v3971 = vsub.s32 4, %v3947
  %v3972 = vsel %vm3887, %v3971, %v3947
  %v3973 = vsel %vm3886, %v3677, %v3970
  %v3974 = vsel %vm3886, 0, %v3972
  %v3975 = vcosq.f32.pop %v3973
  %v3976 = vsinq.f32.pop %v3973
  %vm3977 = vweird.f32 %v3677
  %v3978 = vand.u32 %v3974, 3
  %vm3979 = vcmp.lt.s32.totalorder %v3978, 2
  %vm3980 = vcmp.eq.s32.totalorder %v3978, 0
  %v3981 = vxor.u32 %v3976, 2147483648
  %v3982 = vsel %vm3980, %v3975, %v3981
  %vm3983 = vcmp.eq.s32.totalorder %v3978, 2
  %v3984 = vxor.u32 %v3975, 2147483648
  %v3985 = vsel %vm3983, %v3984, %v3976
  %v3986 = vsel %vm3979, %v3982, %v3985
  %v3987 = vsel %vm3977, nan, %v3986
  %v3988 = vand.u32 2147483647, %v3678
  %vm3989 = vcmp.le.f32.partialorder %v3988, 0.7853982
  %vm3990 = vcmp.lt.s32.totalorder %v3678, 0
  %v3991 = vand.u32 %v3678, 2139095040
  %v3992 = vshrl.u32 %v3991, 23
  %v3993 = vsub.s32 %v3992, 127
  %v3994 = vand.u32 2147483647, %v3678
  %v3995 = vand.u32 %v3994, 8388607
  %v3996 = vor.u32 %v3995, 8388608
  %v3997 = vsub.s32 0, %v3996
  %v3998 = vadd.s32 %v3993, 1
  %vm3999 = vcmp.gt.s32.totalorder %v3998, 0
  %v4000 = vsel %vm3999, %v3998, 0
  %v4001 = vshrl.u32 %v4000, 5
  %v4002 = vand.u32 %v4000, 31
  %v4003 = vsub.s32 32, %v4002
  %v4004 = vshrl.u32 683565275, %v4003
  %v4005 = vshll.u32 683565275, %v4002
  %v4006 = vshrl.u32 2475754826, %v4003
  %v4007 = vor.u32 %v4005, %v4006
  %v4008 = vshll.u32 2475754826, %v4002
  %v4009 = vshrl.u32 2131351028, %v4003
  %v4010 = vor.u32 %v4008, %v4009
  %v4011 = vshll.u32 2131351028, %v4002
  %v4012 = vshrl.u32 2102212464, %v4003
  %v4013 = vor.u32 %v4011, %v4012
  %v4014 = vshll.u32 2102212464, %v4002
  %v4015 = vshrl.u32 920167782, %v4003
  %v4016 = vor.u32 %v4014, %v4015
  %v4017 = vshll.u32 920167782, %v4002
  %v4018 = vshrl.u32 1326507024, %v4003
  %v4019 = vor.u32 %v4017, %v4018
  %vm4020 = vcmp.lt.s32.totalorder %v4001, 1
  %vm4021 = vcmp.lt.s32.totalorder %v4001, 2
  %vm4022 = vcmp.lt.s32.totalorder %v4001, 3
  %vm4023 = vcmp.lt.s32.totalorder %v4001, 4
  %v4024 = vsel %vm4020, %v4004, %v4007
  %v4025 = vsel %vm4023, %v4013, 2102212464
  %v4026 = vsel %vm4022, %v4010, %v4025
  %v4027 = vsel %vm4021, %v4024, %v4026
  %v4028 = vsel %vm4020, %v4007, %v4010
  %v4029 = vsel %vm4023, %v4016, 920167782
  %v4030 = vsel %vm4022, %v4013, %v4029
  %v4031 = vsel %vm4021, %v4028, %v4030
  %v4032 = vsel %vm4020, %v4010, %v4013
  %v4033 = vsel %vm4023, %v4019, 1326507024
  %v4034 = vsel %vm4022, %v4016, %v4033
  %v4035 = vsel %vm4021, %v4032, %v4034
  %v4036 = vshll.u32 %v3996, 8
  %v4037 = vmul.u32.u64.compose %v4036, %v4035
  %v4038 = vextract.low.u32 %v4037
  %v4039 = vextract.high.u32 %v4037
  %v4040 = vmul.u32.u64.compose %v4036, %v4031
  %v4041 = vextract.low.u32 %v4040
  %v4042 = vextract.high.u32 %v4040
  %v4043 = vmul.u32 %v4036, %v4027
  %v4044 = vadd.s32 %v4039, %v4041
  %vm4045 = vc.u32 %v4039, %v4041
  %v4046 = vadd.s32 %v4042, 1
  %v4047 = vsel %vm4045, %v4046, %v4042
  %v4048 = vadd.s32 %v4043, %v4047
  %v4049 = vadd.s32 %v4048, 536870912
  %v4050 = vshrl.u32 %v4049, 30
  %v4051 = vshll.u32 %v4050, 30
  %v4052 = vsub.s32 %v4048, %v4051
  %vm4053 = vcmp.lt.s32.totalorder %v4052, 0
  %v4054 = vsub.s32 0, %v4052
  %v4055 = vsel %vm4053, %v4054, %v4052
  %v4056 = vclz %v4055
  %v4057 = vsub.s32 %v4056, 2
  %vm4058 = vcmp.gt.s32.totalorder 0, %v4057
  %v4059 = vsel %vm4058, 0, %v4057
  %v4060 = vsub.s32 32, %v4059
  %v4061 = vshll.u32 %v4052, %v4059
  %v4062 = vshrl.u32 %v4044, %v4060
  %v4063 = vor.u32 %v4061, %v4062
  %v4064 = vsub.s32 4294967266, %v4059
  %v4065 = vadd.s32 %v4064, 127
  %v4066 = vshll.u32 %v4065, 23
  %v4067 = vor.u32 4788187, %v4066
  %v4068 = vand.u32 2147483647, %v4067
  %v4070 = vcvt.s32.f32 %v4063
  %v4071 = vmul.f32 %v4070, %v4068
  %v4072 = vxor.u32 %v4071, 2147483648
  %v4073 = vsel %vm3990, %v4072, %v4071
  %v4074 = vsub.s32 4, %v4050
  %v4075 = vsel %vm3990, %v4074, %v4050
  %v4076 = vsel %vm3989, %v3678, %v4073
  %v4077 = vsel %vm3989, 0, %v4075
  %v4078 = vcosq.f32.pop %v4076
  %v4079 = vsinq.f32.pop %v4076
  %vm4080 = vweird.f32 %v3678
  %v4081 = vand.u32 %v4077, 3
  %vm4082 = vcmp.lt.s32.totalorder %v4081, 2
  %vm4083 = vcmp.eq.s32.totalorder %v4081, 0
  %v4084 = vxor.u32 %v4079, 2147483648
  %v4085 = vsel %vm4083, %v4078, %v4084
  %vm4086 = vcmp.eq.s32.totalorder %v4081, 2
  %v4087 = vxor.u32 %v4078, 2147483648
  %v4088 = vsel %vm4086, %v4087, %v4079
  %v4089 = vsel %vm4082, %v4085, %v4088
  %v4090 = vsel %vm4080, nan, %v4089
  %v4091 = vmul.f32 %v3627, %v3781
  %v4092 = vmul.f32 %v3628, %v3884
  %v4093 = vmul.f32 %v3629, %v3987
  %v4094 = vmul.f32 %v3630, %v4090
  %v4095 = vmax.f32 %v4091, %v4093
  %v4096 = vrot.slane %v4095, 4
  %v4097 = vmax.f32 %v4095, %v4096
  %v4098 = vrot.slane %v4097, 2
  %v4099 = vmax.f32 %v4097, %v4098
  %v4100 = vrot.slane %v4099, 1
  %v4101 = vmax.f32 %v4099, %v4100
  %v4102 = vmax.f32 %v4092, %v4094
  %v4103 = vrot.slane %v4102, 4
  %v4104 = vmax.f32 %v4102, %v4103
  %v4105 = vrot.slane %v4104, 2
  %v4106 = vmax.f32 %v4104, %v4105
  %v4107 = vrot.slane %v4106, 1
  %v4108 = vmax.f32 %v4106, %v4107
  %v4109 = vmax.f32 %v4101, 0.0
  %v4110 = vmax.f32 %v4108, 0.0
  %v4113 = vcombine.low %v4109, %v4110
  %v4115 = vunpack.c.l.s4 1966171168
  %v4116 = vunpack.c.0.s8 %v4115
  %v4117 = vlaneseq
  %v4118 = vshrl.u32 %v4117, 7
  %v4119 = vsub.s32 %v4116, %v4118
  %v4120 = vrot.slane %v4113, %v4119
  %v4122 = vunpack.c.l.s4 1966171168
  %v4123 = vunpack.c.0.s8 %v4122
  %v4124 = vlaneseq
  %v4125 = vshrl.u32 %v4124, 7
  %v4126 = vsub.s32 %v4123, %v4125
  %v4127 = vrot.slane %v4120, %v4126
  %s4129 = scalar_lea.vmem %s1, 16
  %4130 = vst.msk [vmem:[%s4129] ss:$8 sm:$0x3] %vm884, %v4127
  %4131 = vst.msk [vmem:[%s4129] ss:$8 sm:$0x0] %vm884, %v4127
  %v4132 = vmul.f32 %v3668, %v3781
  %v4133 = vmul.f32 %v3669, %v3884
  %v4134 = vmul.f32 %v3670, %v3987
  %v4135 = vmul.f32 %v3671, %v4090
  %v4136 = vmax.f32 %v4132, %v4134
  %v4137 = vrot.slane %v4136, 4
  %v4138 = vmax.f32 %v4136, %v4137
  %v4139 = vrot.slane %v4138, 2
  %v4140 = vmax.f32 %v4138, %v4139
  %v4141 = vrot.slane %v4140, 1
  %v4142 = vmax.f32 %v4140, %v4141
  %v4143 = vmax.f32 %v4133, %v4135
  %v4144 = vrot.slane %v4143, 4
  %v4145 = vmax.f32 %v4143, %v4144
  %v4146 = vrot.slane %v4145, 2
  %v4147 = vmax.f32 %v4145, %v4146
  %v4148 = vrot.slane %v4147, 1
  %v4149 = vmax.f32 %v4147, %v4148
  %v4150 = vmax.f32 %v4142, 0.0
  %v4151 = vmax.f32 %v4149, 0.0
  %v4154 = vcombine.low %v4150, %v4151
  %v4156 = vunpack.c.l.s4 1966171168
  %v4157 = vunpack.c.0.s8 %v4156
  %v4158 = vlaneseq
  %v4159 = vshrl.u32 %v4158, 7
  %v4160 = vsub.s32 %v4157, %v4159
  %v4161 = vrot.slane %v4154, %v4160
  %v4163 = vunpack.c.l.s4 1966171168
  %v4164 = vunpack.c.0.s8 %v4163
  %v4165 = vlaneseq
  %v4166 = vshrl.u32 %v4165, 7
  %v4167 = vsub.s32 %v4164, %v4166
  %v4168 = vrot.slane %v4161, %v4167
  %4170 = vst.msk [vmem:[%s1] ss:$8 sm:$0x3] %vm884, %v4168
  %4171 = vst.msk [vmem:[%s1] ss:$8 sm:$0x0] %vm884, %v4168
  // Predicated region
  $region6: #{qnn_model_1_forward.2} parent=0 // pred_check
    _
  $region7: #{qnn_model_1_forward.2} parent=0 // pred_check_branch
    %4173 = sbr.rel (0) target = $region9
  $region8: #{qnn_model_1_forward.2} parent=0 // pred_region
    _
  $region9: #{qnn_model_1_forward.2} parent=0 // pred_fallthru
    _
  // Predicated region
  $region10: #{qnn_model_1_forward.2} parent=0 // pred_check
    _
  $region11: #{qnn_model_1_forward.2} parent=0 // pred_check_branch
    %4175 = sbr.rel (0) target = $region13
  $region12: #{qnn_model_1_forward.2} parent=0 // pred_region
    _
  $region13: #{qnn_model_1_forward.2} parent=0 // pred_fallthru
    _

// kernel: qnn_model_1_forward.3
$region0: #{qnn_model_1_forward.3}
  #allocation0 [shape = 'u32[]', space=smem, size = 0x4, offset = 0x4, fixed_abs, tag = 'smem constant byte address 0x4 - core index']
  #allocation1 [shape = 'u32[144,128]{1,0:T(1,128)}', space=vmem, size = 0x12000, scoped, tag = 'internal scratch']
  %s0 = inlined_call_operand.vmem [shape: f32[8,256], index: 0, kind: input, shape index: {}]
  %s1 = inlined_call_operand.vmem [shape: f32[256,32], index: 1, kind: input, shape index: {}]
  %s2 = inlined_call_operand.vmem [shape: f32[1,32], index: 2, kind: input, shape index: {}]
  %s3 = inlined_call_operand.vmem [shape: f32[32,16], index: 3, kind: input, shape index: {}]
  %s4 = inlined_call_operand.vmem [shape: f32[1,16], index: 4, kind: input, shape index: {}]
  %s5 = inlined_call_operand.vmem [shape: f32[16,10], index: 5, kind: input, shape index: {}]
  %s6 = inlined_call_operand.vmem [shape: f32[1,10], index: 6, kind: input, shape index: {}]
  %s7 = inlined_call_operand.vmem [shape: f32[8,10], index: 7, kind: output, shape index: {}]
  %s8 = sld [smem:[#allocation0]]
  $region38: #{qnn_model_1_forward.3} parent=0
    _
  %s10 = ssub.s32 1, %s8
  %s11 = scalar_select 0, %s10, %s8
  // Predicated region
  $region2: #{qnn_model_1_forward.3} parent=0 // pred_check
    _
  $region3: #{qnn_model_1_forward.3} parent=0 // pred_check_branch
    %13 = sbr.rel (0) target = $region5
  $region4: #{qnn_model_1_forward.3} parent=0 // pred_region
    _
  $region5: #{qnn_model_1_forward.3} parent=0 // pred_fallthru
    _
  // Predicated region
  $region6: #{qnn_model_1_forward.3} parent=0 // pred_check
    _
  $region7: #{qnn_model_1_forward.3} parent=0 // pred_check_branch
    %15 = sbr.rel (0) target = $region9
  $region8: #{qnn_model_1_forward.3} parent=0 // pred_region
    _
  $region9: #{qnn_model_1_forward.3} parent=0 // pred_fallthru
    _
  // Predicated region
  $region10: #{qnn_model_1_forward.3} parent=0 // pred_check
    _
  $region11: #{qnn_model_1_forward.3} parent=0 // pred_check_branch
    %17 = sbr.rel (0) target = $region13
  $region12: #{qnn_model_1_forward.3} parent=0 // pred_region
    _
  $region13: #{qnn_model_1_forward.3} parent=0 // pred_fallthru
    _
  // Predicated region
  $region14: #{qnn_model_1_forward.3} parent=0 // pred_check
    _
  $region15: #{qnn_model_1_forward.3} parent=0 // pred_check_branch
    %19 = sbr.rel (0) target = $region17
  $region16: #{qnn_model_1_forward.3} parent=0 // pred_region
    _
  $region17: #{qnn_model_1_forward.3} parent=0 // pred_fallthru
    _
  // Predicated region
  $region18: #{qnn_model_1_forward.3} parent=0 // pred_check
    _
  $region19: #{qnn_model_1_forward.3} parent=0 // pred_check_branch
    %21 = sbr.rel (0) target = $region21
  $region20: #{qnn_model_1_forward.3} parent=0 // pred_region
    _
  $region21: #{qnn_model_1_forward.3} parent=0 // pred_fallthru
    _
  // Predicated region
  $region22: #{qnn_model_1_forward.3} parent=0 // pred_check
    _
  $region23: #{qnn_model_1_forward.3} parent=0 // pred_check_branch
    %23 = sbr.rel (0) target = $region25
  $region24: #{qnn_model_1_forward.3} parent=0 // pred_region
    _
  $region25: #{qnn_model_1_forward.3} parent=0 // pred_fallthru
    _
  // Predicated region
  $region26: #{qnn_model_1_forward.3} parent=0 // pred_check
    _
  $region27: #{qnn_model_1_forward.3} parent=0 // pred_check_branch
    %25 = sbr.rel (0) target = $region29
  $region28: #{qnn_model_1_forward.3} parent=0 // pred_region
    _
  $region29: #{qnn_model_1_forward.3} parent=0 // pred_fallthru
    _
  %v26 = vld [vmem:[%s0] sm:$0xff]
  %v27 = vld [vmem:[%s0 + $0x8] sm:$0xff]
  %v28 = vld [vmem:[%s1] sm:$0xff]
  %v29 = vld [vmem:[%s1 + $0x8] sm:$0xff]
  %v30 = vld [vmem:[%s1 + $0x10] sm:$0xff]
  %v31 = vld [vmem:[%s1 + $0x18] sm:$0xff]
  %v32 = vld [vmem:[%s1 + $0x20] sm:$0xff]
  %v33 = vld [vmem:[%s1 + $0x28] sm:$0xff]
  %v34 = vld [vmem:[%s1 + $0x30] sm:$0xff]
  %v35 = vld [vmem:[%s1 + $0x38] sm:$0xff]
  %v36 = vld [vmem:[%s1 + $0x40] sm:$0xff]
  %v37 = vld [vmem:[%s1 + $0x48] sm:$0xff]
  %v38 = vld [vmem:[%s1 + $0x50] sm:$0xff]
  %v39 = vld [vmem:[%s1 + $0x58] sm:$0xff]
  %v40 = vld [vmem:[%s1 + $0x60] sm:$0xff]
  %v41 = vld [vmem:[%s1 + $0x68] sm:$0xff]
  %v42 = vld [vmem:[%s1 + $0x70] sm:$0xff]
  %v43 = vld [vmem:[%s1 + $0x78] sm:$0xff]
  %v44 = vld [vmem:[%s1 + $0x80] sm:$0xff]
  %v45 = vld [vmem:[%s1 + $0x88] sm:$0xff]
  %v46 = vld [vmem:[%s1 + $0x90] sm:$0xff]
  %v47 = vld [vmem:[%s1 + $0x98] sm:$0xff]
  %v48 = vld [vmem:[%s1 + $0xa0] sm:$0xff]
  %v49 = vld [vmem:[%s1 + $0xa8] sm:$0xff]
  %v50 = vld [vmem:[%s1 + $0xb0] sm:$0xff]
  %v51 = vld [vmem:[%s1 + $0xb8] sm:$0xff]
  %v52 = vld [vmem:[%s1 + $0xc0] sm:$0xff]
  %v53 = vld [vmem:[%s1 + $0xc8] sm:$0xff]
  %v54 = vld [vmem:[%s1 + $0xd0] sm:$0xff]
  %v55 = vld [vmem:[%s1 + $0xd8] sm:$0xff]
  %v56 = vld [vmem:[%s1 + $0xe0] sm:$0xff]
  %v57 = vld [vmem:[%s1 + $0xe8] sm:$0xff]
  %v58 = vld [vmem:[%s1 + $0xf0] sm:$0xff]
  %v59 = vld [vmem:[%s1 + $0xf8] sm:$0xff]
  %v60 = vld [vmem:[%s2] sm:$0x1]
  %v62 = vlaneseq
  %v63 = vshrl.u32 %v62, 7
  %v64 = vsub.s32 0, %v63
  %v65 = vrot.slane %v60, %v64
  %67 = vmatprep.subr.mxu0 0.0
  %68 = vmatpush1.msra.mxu0 %v28
  %69 = vmatprep.subr.mxu0 0.0
  %70 = vmatpush1.msra.mxu0 %v29
  %71 = vmatprep.subr.mxu0 0.0
  %72 = vmatpush1.msra.mxu0 %v30
  %73 = vmatprep.subr.mxu0 0.0
  %74 = vmatpush1.msra.mxu0 %v31
  %75 = vmatprep.subr.mxu0 0.0
  %76 = vmatpush1.msra.mxu0 %v32
  %77 = vmatprep.subr.mxu0 0.0
  %78 = vmatpush1.msra.mxu0 %v33
  %79 = vmatprep.subr.mxu0 0.0
  %80 = vmatpush1.msra.mxu0 %v34
  %81 = vmatprep.subr.mxu0 0.0
  %82 = vmatpush1.msra.mxu0 %v35
  %83 = vmatprep.subr.mxu0 0.0
  %84 = vmatpush1.msra.mxu0 %v36
  %85 = vmatprep.subr.mxu0 0.0
  %86 = vmatpush1.msra.mxu0 %v37
  %87 = vmatprep.subr.mxu0 0.0
  %88 = vmatpush1.msra.mxu0 %v38
  %89 = vmatprep.subr.mxu0 0.0
  %90 = vmatpush1.msra.mxu0 %v39
  %91 = vmatprep.subr.mxu0 0.0
  %92 = vmatpush1.msra.mxu0 %v40
  %93 = vmatprep.subr.mxu0 0.0
  %94 = vmatpush1.msra.mxu0 %v41
  %95 = vmatprep.subr.mxu0 0.0
  %96 = vmatpush1.msra.mxu0 %v42
  %97 = vmatprep.subr.mxu0 0.0
  %98 = vmatpush1.msra.mxu0 %v43
  %99 = vmatprep.subr.mxu0 0.0
  %100 = vmatpush1.msra.mxu0 %v44
  %101 = vmatprep.subr.mxu0 0.0
  %102 = vmatpush1.msra.mxu0 %v45
  %103 = vmatprep.subr.mxu0 0.0
  %104 = vmatpush1.msra.mxu0 %v46
  %105 = vmatprep.subr.mxu0 0.0
  %106 = vmatpush1.msra.mxu0 %v47
  %107 = vmatprep.subr.mxu0 0.0
  %108 = vmatpush1.msra.mxu0 %v48
  %109 = vmatprep.subr.mxu0 0.0
  %110 = vmatpush1.msra.mxu0 %v49
  %111 = vmatprep.subr.mxu0 0.0
  %112 = vmatpush1.msra.mxu0 %v50
  %113 = vmatprep.subr.mxu0 0.0
  %114 = vmatpush1.msra.mxu0 %v51
  %115 = vmatprep.subr.mxu0 0.0
  %116 = vmatpush1.msra.mxu0 %v52
  %117 = vmatprep.subr.mxu0 0.0
  %118 = vmatpush1.msra.mxu0 %v53
  %119 = vmatprep.subr.mxu0 0.0
  %120 = vmatpush1.msra.mxu0 %v54
  %121 = vmatprep.subr.mxu0 0.0
  %122 = vmatpush1.msra.mxu0 %v55
  %123 = vmatprep.subr.mxu0 0.0
  %124 = vmatpush1.msra.mxu0 %v56
  %125 = vmatprep.subr.mxu0 0.0
  %126 = vmatpush1.msra.mxu0 %v57
  %127 = vmatprep.subr.mxu0 0.0
  %128 = vmatpush1.msra.mxu0 %v58
  %129 = vmatprep.subr.mxu0 0.0
  %130 = vmatpush1.msra.mxu0 %v59
  %131 = vmatprep.mubr.f32.mxu0 %v27
  %132 = vmatmul.mubr.f32.gmra.mrb[0].mxu0 %v26
  %v133 = vpop.f32.mrb[0].mxu0
  %v134 = vadd.f32 %v65, %v133
  %v135 = vpop.f32.mrb[0].mxu0
  %136 = vdwg.mxu0
  %v137 = vmax.f32 %v134, 0.0
  %v138 = vld [vmem:[%s3] sm:$0xff]
  %v139 = vld [vmem:[%s3 + $0x8] sm:$0xff]
  %v140 = vld [vmem:[%s3 + $0x10] sm:$0xff]
  %v141 = vld [vmem:[%s3 + $0x18] sm:$0xff]
  %v142 = vld [vmem:[%s4] sm:$0x1]
  %v144 = vlaneseq
  %v145 = vshrl.u32 %v144, 7
  %v146 = vsub.s32 0, %v145
  %v147 = vrot.slane %v142, %v146
  %vm149 = vcmask 261120
  %v151 = vsel %vm149, %v137, 0
  %153 = vmatprep.subr.mxu0 0.0
  %154 = vmatpush1.msra.mxu0 %v138
  %155 = vmatprep.subr.mxu0 0.0
  %156 = vmatpush1.msra.mxu0 %v139
  %157 = vmatprep.subr.mxu0 0.0
  %158 = vmatpush1.msra.mxu0 %v140
  %159 = vmatprep.subr.mxu0 0.0
  %160 = vmatpush1.msra.mxu0 %v141
  %161 = vmatprep.subr.mxu0 0.0
  %162 = vmatpush1.msra.mxu0 0.0
  %163 = vmatprep.subr.mxu0 0.0
  %164 = vmatpush1.msra.mxu0 0.0
  %165 = vmatprep.subr.mxu0 0.0
  %166 = vmatpush1.msra.mxu0 0.0
  %167 = vmatprep.subr.mxu0 0.0
  %168 = vmatpush1.msra.mxu0 0.0
  %169 = vmatprep.subr.mxu0 0.0
  %170 = vmatpush1.msra.mxu0 0.0
  %171 = vmatprep.subr.mxu0 0.0
  %172 = vmatpush1.msra.mxu0 0.0
  %173 = vmatprep.subr.mxu0 0.0
  %174 = vmatpush1.msra.mxu0 0.0
  %175 = vmatprep.subr.mxu0 0.0
  %176 = vmatpush1.msra.mxu0 0.0
  %177 = vmatprep.subr.mxu0 0.0
  %178 = vmatpush1.msra.mxu0 0.0
  %179 = vmatprep.subr.mxu0 0.0
  %180 = vmatpush1.msra.mxu0 0.0
  %181 = vmatprep.subr.mxu0 0.0
  %182 = vmatpush1.msra.mxu0 0.0
  %183 = vmatprep.subr.mxu0 0.0
  %184 = vmatpush1.msra.mxu0 0.0
  %185 = vmatprep.subr.mxu0 0.0
  %186 = vmatpush1.msra.mxu0 0.0
  %187 = vmatprep.subr.mxu0 0.0
  %188 = vmatpush1.msra.mxu0 0.0
  %189 = vmatprep.subr.mxu0 0.0
  %190 = vmatpush1.msra.mxu0 0.0
  %191 = vmatprep.subr.mxu0 0.0
  %192 = vmatpush1.msra.mxu0 0.0
  %193 = vmatprep.subr.mxu0 0.0
  %194 = vmatpush1.msra.mxu0 0.0
  %195 = vmatprep.subr.mxu0 0.0
  %196 = vmatpush1.msra.mxu0 0.0
  %197 = vmatprep.subr.mxu0 0.0
  %198 = vmatpush1.msra.mxu0 0.0
  %199 = vmatprep.subr.mxu0 0.0
  %200 = vmatpush1.msra.mxu0 0.0
  %201 = vmatprep.subr.mxu0 0.0
  %202 = vmatpush1.msra.mxu0 0.0
  %203 = vmatprep.subr.mxu0 0.0
  %204 = vmatpush1.msra.mxu0 0.0
  %205 = vmatprep.subr.mxu0 0.0
  %206 = vmatpush1.msra.mxu0 0.0
  %207 = vmatprep.subr.mxu0 0.0
  %208 = vmatpush1.msra.mxu0 0.0
  %209 = vmatprep.subr.mxu0 0.0
  %210 = vmatpush1.msra.mxu0 0.0
  %211 = vmatprep.subr.mxu0 0.0
  %212 = vmatpush1.msra.mxu0 0.0
  %213 = vmatprep.subr.mxu0 0.0
  %214 = vmatpush1.msra.mxu0 0.0
  %215 = vmatprep.subr.mxu0 0.0
  %216 = vmatpush1.msra.mxu0 0.0
  %217 = vmatprep.mubr.f32.mxu0 0.0
  %218 = vmatmul.mubr.f32.gmra.mrb[0].mxu0 %v151
  %v219 = vpop.f32.mrb[0].mxu0
  %v220 = vadd.f32 %v147, %v219
  %v221 = vpop.f32.mrb[0].mxu0
  %222 = vdwg.mxu0
  %v223 = vmax.f32 %v220, 0.0
  %v224 = vld [vmem:[%s5] sm:$0xff]
  %v225 = vld [vmem:[%s5 + $0x8] sm:$0xff]
  %v226 = vld [vmem:[%s6] sm:$0x1]
  %v228 = vlaneseq
  %v229 = vshrl.u32 %v228, 7
  %v230 = vsub.s32 0, %v229
  %v231 = vrot.slane %v226, %v230
  %vm233 = vcmask 130048
  %v235 = vsel %vm233, %v223, 0
  %237 = vmatprep.subr.mxu0 0.0
  %238 = vmatpush1.msra.mxu0 %v224
  %239 = vmatprep.subr.mxu0 0.0
  %240 = vmatpush1.msra.mxu0 %v225
  %241 = vmatprep.subr.mxu0 0.0
  %242 = vmatpush1.msra.mxu0 0.0
  %243 = vmatprep.subr.mxu0 0.0
  %244 = vmatpush1.msra.mxu0 0.0
  %245 = vmatprep.subr.mxu0 0.0
  %246 = vmatpush1.msra.mxu0 0.0
  %247 = vmatprep.subr.mxu0 0.0
  %248 = vmatpush1.msra.mxu0 0.0
  %249 = vmatprep.subr.mxu0 0.0
  %250 = vmatpush1.msra.mxu0 0.0
  %251 = vmatprep.subr.mxu0 0.0
  %252 = vmatpush1.msra.mxu0 0.0
  %253 = vmatprep.subr.mxu0 0.0
  %254 = vmatpush1.msra.mxu0 0.0
  %255 = vmatprep.subr.mxu0 0.0
  %256 = vmatpush1.msra.mxu0 0.0
  %257 = vmatprep.subr.mxu0 0.0
  %258 = vmatpush1.msra.mxu0 0.0
  %259 = vmatprep.subr.mxu0 0.0
  %260 = vmatpush1.msra.mxu0 0.0
  %261 = vmatprep.subr.mxu0 0.0
  %262 = vmatpush1.msra.mxu0 0.0
  %263 = vmatprep.subr.mxu0 0.0
  %264 = vmatpush1.msra.mxu0 0.0
  %265 = vmatprep.subr.mxu0 0.0
  %266 = vmatpush1.msra.mxu0 0.0
  %267 = vmatprep.subr.mxu0 0.0
  %268 = vmatpush1.msra.mxu0 0.0
  %269 = vmatprep.subr.mxu0 0.0
  %270 = vmatpush1.msra.mxu0 0.0
  %271 = vmatprep.subr.mxu0 0.0
  %272 = vmatpush1.msra.mxu0 0.0
  %273 = vmatprep.subr.mxu0 0.0
  %274 = vmatpush1.msra.mxu0 0.0
  %275 = vmatprep.subr.mxu0 0.0
  %276 = vmatpush1.msra.mxu0 0.0
  %277 = vmatprep.subr.mxu0 0.0
  %278 = vmatpush1.msra.mxu0 0.0
  %279 = vmatprep.subr.mxu0 0.0
  %280 = vmatpush1.msra.mxu0 0.0
  %281 = vmatprep.subr.mxu0 0.0
  %282 = vmatpush1.msra.mxu0 0.0
  %283 = vmatprep.subr.mxu0 0.0
  %284 = vmatpush1.msra.mxu0 0.0
  %285 = vmatprep.subr.mxu0 0.0
  %286 = vmatpush1.msra.mxu0 0.0
  %287 = vmatprep.subr.mxu0 0.0
  %288 = vmatpush1.msra.mxu0 0.0
  %289 = vmatprep.subr.mxu0 0.0
  %290 = vmatpush1.msra.mxu0 0.0
  %291 = vmatprep.subr.mxu0 0.0
  %292 = vmatpush1.msra.mxu0 0.0
  %293 = vmatprep.subr.mxu0 0.0
  %294 = vmatpush1.msra.mxu0 0.0
  %295 = vmatprep.subr.mxu0 0.0
  %296 = vmatpush1.msra.mxu0 0.0
  %297 = vmatprep.subr.mxu0 0.0
  %298 = vmatpush1.msra.mxu0 0.0
  %299 = vmatprep.subr.mxu0 0.0
  %300 = vmatpush1.msra.mxu0 0.0
  %301 = vmatprep.mubr.f32.mxu0 0.0
  %302 = vmatmul.mubr.f32.gmra.mrb[0].mxu0 %v235
  %v303 = vpop.f32.mrb[0].mxu0
  %v304 = vadd.f32 %v231, %v303
  %v305 = vpop.f32.mrb[0].mxu0
  %306 = vdwg.mxu0
  %vm307 = vcmask 80896
  %v308 = vsel %vm307, %v304, -inf
  %309 = vmax.xlane.f32.xlu0 %v308
  %v310 = vpop.xlane.xlu0 %309
  %v311 = vsub.f32 %v304, %v310
  %v312 = vmul.f32 %v311, 1.442695
  %v313 = vpow.pop %v312
  %v314 = vsel %vm307, %v313, 0.0
  %315 = vadd.xlane.f32.xlu0 %v314
  %v316 = vpop.xlane.xlu0 %315
  %v317 = vlog2.pop %v316
  %v318 = vmul.f32 %v317, 0.6931472
  %v319 = vadd.f32 %v310, %v318
  %v320 = vsub.f32 %v304, %v319
  %321 = vst.msk [vmem:[%s7] sm:$0xff] %vm307, %v320
  // Predicated region
  $region30: #{qnn_model_1_forward.3} parent=0 // pred_check
    _
  $region31: #{qnn_model_1_forward.3} parent=0 // pred_check_branch
    %323 = sbr.rel (0) target = $region33
  $region32: #{qnn_model_1_forward.3} parent=0 // pred_region
    _
  $region33: #{qnn_model_1_forward.3} parent=0 // pred_fallthru
    _
  // Predicated region
  $region34: #{qnn_model_1_forward.3} parent=0 // pred_check
    _
  $region35: #{qnn_model_1_forward.3} parent=0 // pred_check_branch
    %325 = sbr.rel (0) target = $region37
  $region36: #{qnn_model_1_forward.3} parent=0 // pred_region
    _
  $region37: #{qnn_model_1_forward.3} parent=0 // pred_fallthru
    _

</llo_original>
